<compile_context>
chip_gen: v7x
topology: tpu7x:2x2x1
jax: 0.10.0
libtpu: 0.0.40
codegen_flags: <defaults>
</compile_context>

<pallas_src>
import functools
import math

import jax
import jax.numpy as jnp
from jax.experimental import pallas as pl
from jax.experimental.pallas import tpu as pltpu


def _round_up(x, m):
    return ((x + m - 1) // m) * m


def _vmem_capacity_bytes():
    """Physical VMEM of the local TPU; conservative 64 MiB fallback."""
    try:
        info = pltpu.get_tpu_info()
        for name in ("vmem_capacity_bytes", "vmem_size_bytes", "vmem_bytes"):
            v = getattr(info, name, None)
            if isinstance(v, int) and v > 0:
                return v
    except Exception:
        pass
    return 64 << 20


# -----------------------------------------------------------------------------
# Pallas kernel (runs once per batch tile)
# -----------------------------------------------------------------------------
def ncf_kernel(num_layers, *refs):
    """Per-tile refs:
        gmf_u      (TB, F)   VMEM  (stored dtype, e.g. bf16)
        gmf_i      (TB, F)   VMEM
        mlp_u      (TB, E)   VMEM
        mlp_i      (TB, E)   VMEM
        rating     (1, TB)   VMEM  f32, lane-dense
        W0_top     (E, H0)   VMEM  (first MLP weight, user half, pre-transposed)
        W0_bot     (E, H0)   VMEM  (first MLP weight, item half)
        b0         (1, H0)   VMEM  f32
        [W_l (in,out), b_l (1,out)] * (num_layers-1)   VMEM, resident
        w_gmf      (1, F)    VMEM  f32 (predict weight slice for GMF part)
        w_mlp      (1, F)    VMEM  f32 (predict weight slice for MLP part)
        scal       (2,)      SMEM  f32 [w_rating, b_predict]
        out        (1, TB)   VMEM  f32, lane-dense
    """
    it = iter(refs)
    gmf_u_ref = next(it)
    gmf_i_ref = next(it)
    mlp_u_ref = next(it)
    mlp_i_ref = next(it)
    rating_ref = next(it)
    w0u_ref = next(it)
    w0i_ref = next(it)
    b0_ref = next(it)
    tower = [(next(it), next(it)) for _ in range(num_layers - 1)]
    w_gmf_ref = next(it)
    w_mlp_ref = next(it)
    scal_ref = next(it)
    out_ref = next(it)

    f32 = jnp.float32

    # GMF branch: elementwise in f32 (v5e VPU has no bf16 path), with its slice
    # of the predict weight folded in once.
    gmf = (gmf_u_ref[...].astype(f32) * gmf_i_ref[...].astype(f32)) * w_gmf_ref[...]

    # MLP tower. Layer 0's concat([mlp_u, mlp_i]) @ W0 is a split dot, so the
    # (TB, 2E) interaction tensor never materializes anywhere. Dots feed the
    # stored (bf16) operands straight to the MXU and accumulate in f32.
    h = (jnp.dot(mlp_u_ref[...], w0u_ref[...], preferred_element_type=f32)
         + jnp.dot(mlp_i_ref[...], w0i_ref[...], preferred_element_type=f32)
         + b0_ref[...])
    h = jnp.maximum(h, 0.0)
    for w_ref, b_ref in tower:
        h = jnp.dot(h.astype(w_ref.dtype), w_ref[...], preferred_element_type=f32) + b_ref[...]
        h = jnp.maximum(h, 0.0)

    # Predict layer: concat([gmf, mlp, rating]) @ Wp^T + bp as a split reduce.
    # Group the sublane-laid reduction terms (+ bias) first, then add the
    # lane-dense rating term last, right before the lane-dense store, so only
    # the one unavoidable sublane->lane relayout happens per tile.
    w_rating = scal_ref[0]
    b_pred = scal_ref[1]
    t = (jnp.sum(gmf, axis=-1)
         + jnp.sum(h * w_mlp_ref[...], axis=-1)
         + b_pred)
    out_ref[0, :] = (t + rating_ref[0, :] * w_rating).astype(out_ref.dtype)


# -----------------------------------------------------------------------------
# One-time parameter preparation (outside any serving loop)
# -----------------------------------------------------------------------------
def prepare_params(params, store_dtype=jnp.bfloat16):
    """Cast HBM-resident tensors (embedding tables + MLP weights) to bf16 once.
    Halves gather / per-tile DMA HBM bytes; all in-kernel math stays f32."""
    p = dict(params)
    for k in ("embed_user_GMF", "embed_item_GMF", "embed_user_MLP", "embed_item_MLP"):
        p[k] = params[k].astype(store_dtype)
    p["mlp_weights"] = [w.astype(store_dtype) for w in params["mlp_weights"]]
    p["mlp_biases"] = [b.astype(jnp.float32) for b in params["mlp_biases"]]
    # predict weight/bias stay f32 (tiny; keeps the dominant rating term exact).
    return p


# -----------------------------------------------------------------------------
# Wrapper
# -----------------------------------------------------------------------------
def ncf_forward(user, item, rating, params, *, block_b=None):
    num_layers = len(params["mlp_weights"])
    F_ = params["embed_user_GMF"].shape[-1]
    E_ = params["embed_user_MLP"].shape[-1]
    in_bytes = params["embed_user_GMF"].dtype.itemsize

    B = user.shape[0]

    # --- VMEM-driven batch-tile selection ------------------------------------
    vmem_cap = _vmem_capacity_bytes()
    # Approximate per-batch-row VMEM bytes: double-buffered activation tiles
    # (gmf_u/gmf_i/mlp_u/mlp_i), f32 intermediates (upcasts, gmf, h), rating/out.
    per_row = (2 * (2 * F_ + 2 * E_) * in_bytes        # pipelined input tiles
               + 4 * (2 * F_ + 3 * E_)                 # f32 intermediates
               + 2 * 4 * 2)                            # rating + out slabs
    # Resident weights/biases (assume double-buffered: conservative).
    weight_bytes = sum(int(w.size) * w.dtype.itemsize for w in params["mlp_weights"])
    weight_bytes += sum(int(b.size) * 4 for b in params["mlp_biases"])
    weight_bytes += 2 * F_ * 4
    weight_bytes *= 2

    if block_b is None:
        budget = int(vmem_cap * 0.70)
        block_b_cap = 8192 if vmem_cap >= (96 << 20) else 4096   # v5e/v6e vs v7x
        fit = max(128, ((budget - weight_bytes) // per_row) // 128 * 128)
        block_b = min(block_b_cap, fit)
        # Keep >= 2 tiles whenever the batch allows it (v7x: both TCs busy).
        block_b = min(block_b, max(128, _round_up((B + 1) // 2, 128)))
    block_b = max(128, _round_up(int(block_b), 128))

    num_tiles = -(-B // block_b)
    padded_B = num_tiles * block_b
    pad = padded_B - B
    if pad:
        user = jnp.pad(user, (0, pad))
        item = jnp.pad(item, (0, pad))
        rating = jnp.pad(rating, (0, pad))

    # Explicit scoped-VMEM limit so large tiles compile (default is 16/32 MiB).
    want = int(1.3 * (weight_bytes + per_row * block_b)) + (4 << 20)
    hard_cap = max(32 << 20, min(vmem_cap - (16 << 20), 100 << 20))
    vmem_limit = int(min(max(32 << 20, want), hard_cap))

    # Embedding gathers (plain-JAX glue, bf16 rows — see TODO(synk) at top).
    gmf_u = params["embed_user_GMF"][user]
    gmf_i = params["embed_item_GMF"][item]
    mlp_u = params["embed_user_MLP"][user]
    mlp_i = params["embed_item_MLP"][item]
    rating_row = rating.reshape(1, padded_B).astype(jnp.float32)

    # Split the first MLP weight along its input axis (user half / item half).
    w0 = params["mlp_weights"][0]                      # (2E, H0), pre-transposed
    w0u, w0i = w0[:E_], w0[E_:]
    b0 = params["mlp_biases"][0].reshape(1, -1).astype(jnp.float32)

    wp = params["predict_weight"].astype(jnp.float32)  # (2F+1,)
    bp = jnp.asarray(params["predict_bias"], jnp.float32)
    w_gmf_row = wp[:F_].reshape(1, -1)
    w_mlp_row = wp[F_:2 * F_].reshape(1, -1)
    scal = jnp.stack([wp[2 * F_], bp])

    inputs = [gmf_u, gmf_i, mlp_u, mlp_i, rating_row, w0u, w0i, b0]
    const_shapes = [w0u.shape, w0i.shape, b0.shape]
    for w, b in zip(params["mlp_weights"][1:], params["mlp_biases"][1:]):
        b2 = b.reshape(1, -1).astype(jnp.float32)
        inputs += [w, b2]
        const_shapes += [w.shape, b2.shape]
    inputs += [w_gmf_row, w_mlp_row, scal]
    const_shapes += [w_gmf_row.shape, w_mlp_row.shape]

    # Advisory cost estimate for XLA scheduling around the custom call.
    macs = sum(int(w.shape[0]) * int(w.shape[1]) for w in params["mlp_weights"])
    macs += 3 * F_
    nbytes = sum(int(x.size) * x.dtype.itemsize for x in inputs) + 4 * padded_B
    cost = pl.CostEstimate(flops=2 * padded_B * macs, transcendentals=0,
                           bytes_accessed=int(nbytes))

    def run(weight_buffer_count):
        pm = None if weight_buffer_count is None else pl.Buffered(weight_buffer_count)

        def const_spec(shape):
            if pm is None:
                return pl.BlockSpec(shape, lambda i: (0, 0))
            return pl.BlockSpec(shape, lambda i: (0, 0), pipeline_mode=pm)

        def row_spec(feat):
            return pl.BlockSpec((block_b, feat), lambda i: (i, 0))

        lane_spec = pl.BlockSpec((1, block_b), lambda i: (0, i))

        in_specs = [row_spec(F_), row_spec(F_), row_spec(E_), row_spec(E_), lane_spec]
        in_specs += [const_spec(s) for s in const_shapes]
        in_specs += [pl.BlockSpec(memory_space=pltpu.MemorySpace.SMEM)]

        return pl.pallas_call(
            functools.partial(ncf_kernel, num_layers),
            out_shape=jax.ShapeDtypeStruct((1, padded_B), jnp.float32),
            grid_spec=pltpu.PrefetchScalarGridSpec(
                num_scalar_prefetch=0,
                grid=(num_tiles,),
                in_specs=in_specs,
                out_specs=lane_spec,
            ),
            compiler_params=pltpu.CompilerParams(
                dimension_semantics=("parallel",),
                vmem_limit_bytes=vmem_limit),
            cost_estimate=cost,
        )(*inputs)

    try:
        # Constant-index weights never change block -> single buffer saves VMEM.
        out = run(1)
    except Exception:
        # Fallback if this Pallas build rejects single-buffered pipeline_mode.
        out = run(None)
    return out.reshape(-1)[:B]


# -----------------------------------------------------------------------------
# Deterministic parameter init (mirrors NeuralCollaborativeFiltering.__init__)
# -----------------------------------------------------------------------------
def init_params(key, user_num, item_num, factor_num, num_layers):
    embedding_size = factor_num * 2 ** (num_layers - 1)
    keys = jax.random.split(key, 6 + num_layers)

    params = {
        "embed_user_GMF": 0.01 * jax.random.normal(keys[0], (user_num, factor_num), jnp.float32),
        "embed_item_GMF": 0.01 * jax.random.normal(keys[1], (item_num, factor_num), jnp.float32),
        "embed_user_MLP": 0.01 * jax.random.normal(keys[2], (user_num, embedding_size), jnp.float32),
        "embed_item_MLP": 0.01 * jax.random.normal(keys[3], (item_num, embedding_size), jnp.float32),
    }

    mlp_weights, mlp_biases = [], []
    for i in range(num_layers):
        in_size = factor_num * 2 ** (num_layers - i)
        out_size = in_size // 2
        bound = math.sqrt(6.0 / (in_size + out_size))  # xavier_uniform
        # stored pre-transposed: (in, out) so kernel does x @ W
        w = jax.random.uniform(keys[4 + i], (in_size, out_size), jnp.float32,
                               minval=-bound, maxval=bound)
        mlp_weights.append(w)
        mlp_biases.append(jnp.zeros((out_size,), jnp.float32))
    params["mlp_weights"] = mlp_weights
    params["mlp_biases"] = mlp_biases

    predict_size = factor_num * 2 + 1
    kbound = math.sqrt(3.0 / predict_size)  # kaiming_uniform, gain(sigmoid)=1
    params["predict_weight"] = jax.random.uniform(
        keys[4 + num_layers], (predict_size,), jnp.float32, minval=-kbound, maxval=kbound)
    params["predict_bias"] = jnp.float32(0.0)
    return params


# -----------------------------------------------------------------------------
# Pure-JAX f32 reference for correctness checking
# -----------------------------------------------------------------------------
def ncf_reference(user, item, rating, params):
    gmf = params["embed_user_GMF"][user] * params["embed_item_GMF"][item]
    h = jnp.concatenate(
        [params["embed_user_MLP"][user], params["embed_item_MLP"][item]], axis=-1)
    for w, b in zip(params["mlp_weights"], params["mlp_biases"]):
        h = jnp.maximum(h @ w + b, 0.0)
    concat = jnp.concatenate([gmf, h, rating[:, None]], axis=-1)
    pred = concat @ params["predict_weight"] + params["predict_bias"]
    return pred


# -----------------------------------------------------------------------------
if __name__ == "__main__":
    user_num, item_num = 32, 48
    factor_num, num_layers = 16, 3
    B = 8

    key = jax.random.PRNGKey(0)
    pkey, ukey, ikey, rkey = jax.random.split(key, 4)
    params = init_params(pkey, user_num, item_num, factor_num, num_layers)

    user = jax.random.randint(ukey, (B,), 0, user_num, dtype=jnp.int32)
    item = jax.random.randint(ikey, (B,), 0, item_num, dtype=jnp.int32)
    rating = jax.random.uniform(rkey, (B,), jnp.float32, minval=0.0, maxval=5.0)

    tpu_params = prepare_params(params)            # bf16 tables/weights, cast once
    out = ncf_forward(user, item, rating, tpu_params)
    out = jax.block_until_ready(out)

    ref = ncf_reference(user, item, rating, params)  # f32 reference
    assert out.shape == (B,)
    # bf16 storage -> looser tolerance vs. the f32 reference (outputs are O(1)).
    assert jnp.allclose(out, ref, atol=2e-2, rtol=2e-2), (out, ref)

    print("KERNEL_OK")
</pallas_src>

<mosaic_0001>
module attributes {stable_mosaic.version = 11 : i64} {
  func.func @ncf_kernel(%arg0: i32, %arg1: memref<128x16xbf16, #tpu.memory_space<vmem>>, %arg2: memref<128x16xbf16, #tpu.memory_space<vmem>>, %arg3: memref<128x64xbf16, #tpu.memory_space<vmem>>, %arg4: memref<128x64xbf16, #tpu.memory_space<vmem>>, %arg5: memref<1x128xf32, #tpu.memory_space<vmem>>, %arg6: memref<64x64xbf16, #tpu.memory_space<vmem>>, %arg7: memref<64x64xbf16, #tpu.memory_space<vmem>>, %arg8: memref<1x64xf32, #tpu.memory_space<vmem>>, %arg9: memref<64x32xbf16, #tpu.memory_space<vmem>>, %arg10: memref<1x32xf32, #tpu.memory_space<vmem>>, %arg11: memref<32x16xbf16, #tpu.memory_space<vmem>>, %arg12: memref<1x16xf32, #tpu.memory_space<vmem>>, %arg13: memref<1x16xf32, #tpu.memory_space<vmem>>, %arg14: memref<1x16xf32, #tpu.memory_space<vmem>>, %arg15: memref<2xf32, #tpu.memory_space<smem>>, %arg16: memref<1x128xf32, #tpu.memory_space<vmem>>) attributes {dimension_semantics = [#tpu.dimension_semantics<parallel>], iteration_bounds = array<i64: 1>, scalar_prefetch = 0 : i64, scratch_operands = 0 : i64, tpu.core_type = #tpu.core_type<tc>, window_params = [{transform_indices = @transform_0, window_bounds = array<i64: 128, 16>}, {transform_indices = @transform_1, window_bounds = array<i64: 128, 16>}, {transform_indices = @transform_2, window_bounds = array<i64: 128, 64>}, {transform_indices = @transform_3, window_bounds = array<i64: 128, 64>}, {transform_indices = @transform_4, window_bounds = array<i64: 1, 128>}, {pipeline_mode = #tpu.pipeline_mode<synchronous>, transform_indices = @transform_5, window_bounds = array<i64: 64, 64>}, {pipeline_mode = #tpu.pipeline_mode<synchronous>, transform_indices = @transform_6, window_bounds = array<i64: 64, 64>}, {pipeline_mode = #tpu.pipeline_mode<synchronous>, transform_indices = @transform_7, window_bounds = array<i64: 1, 64>}, {pipeline_mode = #tpu.pipeline_mode<synchronous>, transform_indices = @transform_8, window_bounds = array<i64: 64, 32>}, {pipeline_mode = #tpu.pipeline_mode<synchronous>, transform_indices = @transform_9, window_bounds = array<i64: 1, 32>}, {pipeline_mode = #tpu.pipeline_mode<synchronous>, transform_indices = @transform_10, window_bounds = array<i64: 32, 16>}, {pipeline_mode = #tpu.pipeline_mode<synchronous>, transform_indices = @transform_11, window_bounds = array<i64: 1, 16>}, {pipeline_mode = #tpu.pipeline_mode<synchronous>, transform_indices = @transform_12, window_bounds = array<i64: 1, 16>}, {pipeline_mode = #tpu.pipeline_mode<synchronous>, transform_indices = @transform_13, window_bounds = array<i64: 1, 16>}, {transform_indices = @transform_14, window_bounds = array<i64: 2>}, {transform_indices = @transform_15, window_bounds = array<i64: 1, 128>}]} {
    %c0 = arith.constant 0 : index
    %c0_0 = arith.constant 0 : index
    %0 = vector.load %arg1[%c0, %c0_0] : memref<128x16xbf16, #tpu.memory_space<vmem>>, vector<128x16xbf16>
    %1 = arith.extf %0 : vector<128x16xbf16> to vector<128x16xf32>
    %c0_1 = arith.constant 0 : index
    %c0_2 = arith.constant 0 : index
    %2 = vector.load %arg2[%c0_1, %c0_2] : memref<128x16xbf16, #tpu.memory_space<vmem>>, vector<128x16xbf16>
    %3 = arith.extf %2 : vector<128x16xbf16> to vector<128x16xf32>
    %4 = arith.mulf %1, %3 : vector<128x16xf32>
    %c0_3 = arith.constant 0 : index
    %c0_4 = arith.constant 0 : index
    %5 = vector.load %arg13[%c0_3, %c0_4] : memref<1x16xf32, #tpu.memory_space<vmem>>, vector<1x16xf32>
    %6 = vector.broadcast %5 : vector<1x16xf32> to vector<128x16xf32>
    %7 = arith.mulf %4, %6 : vector<128x16xf32>
    %c0_5 = arith.constant 0 : index
    %c0_6 = arith.constant 0 : index
    %8 = vector.load %arg3[%c0_5, %c0_6] : memref<128x64xbf16, #tpu.memory_space<vmem>>, vector<128x64xbf16>
    %c0_7 = arith.constant 0 : index
    %c0_8 = arith.constant 0 : index
    %9 = vector.load %arg6[%c0_7, %c0_8] : memref<64x64xbf16, #tpu.memory_space<vmem>>, vector<64x64xbf16>
    %cst = arith.constant dense<0.000000e+00> : vector<128x64xf32>
    %10 = tpu.matmul %8, %9, %cst {dimension_numbers = #tpu.dot_dimension_numbers<[1], [0], [0], [1], [0, 0, 1, 1], [], []>} : vector<128x64xbf16>, vector<64x64xbf16>, vector<128x64xf32> -> vector<128x64xf32>
    %c0_9 = arith.constant 0 : index
    %c0_10 = arith.constant 0 : index
    %11 = vector.load %arg4[%c0_9, %c0_10] : memref<128x64xbf16, #tpu.memory_space<vmem>>, vector<128x64xbf16>
    %c0_11 = arith.constant 0 : index
    %c0_12 = arith.constant 0 : index
    %12 = vector.load %arg7[%c0_11, %c0_12] : memref<64x64xbf16, #tpu.memory_space<vmem>>, vector<64x64xbf16>
    %cst_13 = arith.constant dense<0.000000e+00> : vector<128x64xf32>
    %13 = tpu.matmul %11, %12, %cst_13 {dimension_numbers = #tpu.dot_dimension_numbers<[1], [0], [0], [1], [0, 0, 1, 1], [], []>} : vector<128x64xbf16>, vector<64x64xbf16>, vector<128x64xf32> -> vector<128x64xf32>
    %14 = arith.addf %10, %13 : vector<128x64xf32>
    %c0_14 = arith.constant 0 : index
    %c0_15 = arith.constant 0 : index
    %15 = vector.load %arg8[%c0_14, %c0_15] : memref<1x64xf32, #tpu.memory_space<vmem>>, vector<1x64xf32>
    %16 = vector.broadcast %15 : vector<1x64xf32> to vector<128x64xf32>
    %17 = arith.addf %14, %16 : vector<128x64xf32>
    %cst_16 = arith.constant 0.000000e+00 : f32
    %18 = vector.broadcast %cst_16 : f32 to vector<128x64xf32>
    %19 = arith.maximumf %17, %18 : vector<128x64xf32>
    %20 = arith.truncf %19 : vector<128x64xf32> to vector<128x64xbf16>
    %c0_17 = arith.constant 0 : index
    %c0_18 = arith.constant 0 : index
    %21 = vector.load %arg9[%c0_17, %c0_18] : memref<64x32xbf16, #tpu.memory_space<vmem>>, vector<64x32xbf16>
    %cst_19 = arith.constant dense<0.000000e+00> : vector<128x32xf32>
    %22 = tpu.matmul %20, %21, %cst_19 {dimension_numbers = #tpu.dot_dimension_numbers<[1], [0], [0], [1], [0, 0, 1, 1], [], []>} : vector<128x64xbf16>, vector<64x32xbf16>, vector<128x32xf32> -> vector<128x32xf32>
    %c0_20 = arith.constant 0 : index
    %c0_21 = arith.constant 0 : index
    %23 = vector.load %arg10[%c0_20, %c0_21] : memref<1x32xf32, #tpu.memory_space<vmem>>, vector<1x32xf32>
    %24 = vector.broadcast %23 : vector<1x32xf32> to vector<128x32xf32>
    %25 = arith.addf %22, %24 : vector<128x32xf32>
    %cst_22 = arith.constant 0.000000e+00 : f32
    %26 = vector.broadcast %cst_22 : f32 to vector<128x32xf32>
    %27 = arith.maximumf %25, %26 : vector<128x32xf32>
    %28 = arith.truncf %27 : vector<128x32xf32> to vector<128x32xbf16>
    %c0_23 = arith.constant 0 : index
    %c0_24 = arith.constant 0 : index
    %29 = vector.load %arg11[%c0_23, %c0_24] : memref<32x16xbf16, #tpu.memory_space<vmem>>, vector<32x16xbf16>
    %cst_25 = arith.constant dense<0.000000e+00> : vector<128x16xf32>
    %30 = tpu.matmul %28, %29, %cst_25 {dimension_numbers = #tpu.dot_dimension_numbers<[1], [0], [0], [1], [0, 0, 1, 1], [], []>} : vector<128x32xbf16>, vector<32x16xbf16>, vector<128x16xf32> -> vector<128x16xf32>
    %c0_26 = arith.constant 0 : index
    %c0_27 = arith.constant 0 : index
    %31 = vector.load %arg12[%c0_26, %c0_27] : memref<1x16xf32, #tpu.memory_space<vmem>>, vector<1x16xf32>
    %32 = vector.broadcast %31 : vector<1x16xf32> to vector<128x16xf32>
    %33 = arith.addf %30, %32 : vector<128x16xf32>
    %cst_28 = arith.constant 0.000000e+00 : f32
    %34 = vector.broadcast %cst_28 : f32 to vector<128x16xf32>
    %35 = arith.maximumf %33, %34 : vector<128x16xf32>
    %c0_29 = arith.constant 0 : index
    %36 = memref.load %arg15[%c0_29] : memref<2xf32, #tpu.memory_space<smem>>
    %c1 = arith.constant 1 : index
    %37 = memref.load %arg15[%c1] : memref<2xf32, #tpu.memory_space<smem>>
    %cst_30 = arith.constant dense<0.000000e+00> : vector<128xf32>
    %38 = vector.multi_reduction <add>, %7, %cst_30 [1] : vector<128x16xf32> to vector<128xf32>
    %c0_31 = arith.constant 0 : index
    %c0_32 = arith.constant 0 : index
    %39 = vector.load %arg14[%c0_31, %c0_32] : memref<1x16xf32, #tpu.memory_space<vmem>>, vector<1x16xf32>
    %40 = vector.broadcast %39 : vector<1x16xf32> to vector<128x16xf32>
    %41 = arith.mulf %35, %40 : vector<128x16xf32>
    %cst_33 = arith.constant dense<0.000000e+00> : vector<128xf32>
    %42 = vector.multi_reduction <add>, %41, %cst_33 [1] : vector<128x16xf32> to vector<128xf32>
    %43 = arith.addf %38, %42 : vector<128xf32>
    %44 = vector.broadcast %37 : f32 to vector<128xf32>
    %45 = arith.addf %43, %44 : vector<128xf32>
    %c0_34 = arith.constant 0 : index
    %c0_35 = arith.constant 0 : index
    %46 = vector.load %arg5[%c0_34, %c0_35] : memref<1x128xf32, #tpu.memory_space<vmem>>, vector<1x128xf32>
    %47 = vector.shape_cast %46 : vector<1x128xf32> to vector<128xf32>
    %48 = vector.broadcast %36 : f32 to vector<128xf32>
    %49 = arith.mulf %47, %48 : vector<128xf32>
    %50 = arith.addf %45, %49 : vector<128xf32>
    %c0_36 = arith.constant 0 : index
    %c0_37 = arith.constant 0 : index
    %51 = vector.load %arg16[%c0_36, %c0_37] : memref<1x128xf32, #tpu.memory_space<vmem>>, vector<1x128xf32>
    %52 = vector.shape_cast %51 : vector<1x128xf32> to vector<128xf32>
    %53 = vector.shape_cast %50 : vector<128xf32> to vector<1x128xf32>
    tpu.vector_store %arg16[%c0_36, %c0_37], %53 {strides = array<i32>} : memref<1x128xf32, #tpu.memory_space<vmem>>, vector<1x128xf32>,
    return
  }
  func.func @transform_0(%arg0: i32) -> (i32, i32) {
    %c0_i32 = arith.constant 0 : i32
    %c0_i32_0 = arith.constant 0 : i32
    return %arg0, %c0_i32 : i32, i32
  }
  func.func @transform_1(%arg0: i32) -> (i32, i32) {
    %c0_i32 = arith.constant 0 : i32
    %c0_i32_0 = arith.constant 0 : i32
    return %arg0, %c0_i32 : i32, i32
  }
  func.func @transform_2(%arg0: i32) -> (i32, i32) {
    %c0_i32 = arith.constant 0 : i32
    %c0_i32_0 = arith.constant 0 : i32
    return %arg0, %c0_i32 : i32, i32
  }
  func.func @transform_3(%arg0: i32) -> (i32, i32) {
    %c0_i32 = arith.constant 0 : i32
    %c0_i32_0 = arith.constant 0 : i32
    return %arg0, %c0_i32 : i32, i32
  }
  func.func @transform_4(%arg0: i32) -> (i32, i32) {
    %c0_i32 = arith.constant 0 : i32
    %c0_i32_0 = arith.constant 0 : i32
    return %c0_i32, %arg0 : i32, i32
  }
  func.func @transform_5(%arg0: i32) -> (i32, i32) {
    %c0_i32 = arith.constant 0 : i32
    %c0_i32_0 = arith.constant 0 : i32
    %c0_i32_1 = arith.constant 0 : i32
    return %c0_i32, %c0_i32_0 : i32, i32
  }
  func.func @transform_6(%arg0: i32) -> (i32, i32) {
    %c0_i32 = arith.constant 0 : i32
    %c0_i32_0 = arith.constant 0 : i32
    %c0_i32_1 = arith.constant 0 : i32
    return %c0_i32, %c0_i32_0 : i32, i32
  }
  func.func @transform_7(%arg0: i32) -> (i32, i32) {
    %c0_i32 = arith.constant 0 : i32
    %c0_i32_0 = arith.constant 0 : i32
    %c0_i32_1 = arith.constant 0 : i32
    return %c0_i32, %c0_i32_0 : i32, i32
  }
  func.func @transform_8(%arg0: i32) -> (i32, i32) {
    %c0_i32 = arith.constant 0 : i32
    %c0_i32_0 = arith.constant 0 : i32
    %c0_i32_1 = arith.constant 0 : i32
    return %c0_i32, %c0_i32_0 : i32, i32
  }
  func.func @transform_9(%arg0: i32) -> (i32, i32) {
    %c0_i32 = arith.constant 0 : i32
    %c0_i32_0 = arith.constant 0 : i32
    %c0_i32_1 = arith.constant 0 : i32
    return %c0_i32, %c0_i32_0 : i32, i32
  }
  func.func @transform_10(%arg0: i32) -> (i32, i32) {
    %c0_i32 = arith.constant 0 : i32
    %c0_i32_0 = arith.constant 0 : i32
    %c0_i32_1 = arith.constant 0 : i32
    return %c0_i32, %c0_i32_0 : i32, i32
  }
  func.func @transform_11(%arg0: i32) -> (i32, i32) {
    %c0_i32 = arith.constant 0 : i32
    %c0_i32_0 = arith.constant 0 : i32
    %c0_i32_1 = arith.constant 0 : i32
    return %c0_i32, %c0_i32_0 : i32, i32
  }
  func.func @transform_12(%arg0: i32) -> (i32, i32) {
    %c0_i32 = arith.constant 0 : i32
    %c0_i32_0 = arith.constant 0 : i32
    %c0_i32_1 = arith.constant 0 : i32
    return %c0_i32, %c0_i32_0 : i32, i32
  }
  func.func @transform_13(%arg0: i32) -> (i32, i32) {
    %c0_i32 = arith.constant 0 : i32
    %c0_i32_0 = arith.constant 0 : i32
    %c0_i32_1 = arith.constant 0 : i32
    return %c0_i32, %c0_i32_0 : i32, i32
  }
  func.func @transform_14(%arg0: i32) -> i32 {
    %c0_i32 = arith.constant 0 : i32
    %c0_i32_0 = arith.constant 0 : i32
    return %c0_i32 : i32
  }
  func.func @transform_15(%arg0: i32) -> (i32, i32) {
    %c0_i32 = arith.constant 0 : i32
    %c0_i32_0 = arith.constant 0 : i32
    return %c0_i32, %arg0 : i32, i32
  }
}

module attributes {stable_mosaic.version = 11 : i64} {
  func.func @ncf_kernel(%arg0: i32, %arg1: memref<128x16xbf16, #tpu.memory_space<vmem>>, %arg2: memref<128x16xbf16, #tpu.memory_space<vmem>>, %arg3: memref<128x64xbf16, #tpu.memory_space<vmem>>, %arg4: memref<128x64xbf16, #tpu.memory_space<vmem>>, %arg5: memref<1x128xf32, #tpu.memory_space<vmem>>, %arg6: memref<64x64xbf16, #tpu.memory_space<vmem>>, %arg7: memref<64x64xbf16, #tpu.memory_space<vmem>>, %arg8: memref<1x64xf32, #tpu.memory_space<vmem>>, %arg9: memref<64x32xbf16, #tpu.memory_space<vmem>>, %arg10: memref<1x32xf32, #tpu.memory_space<vmem>>, %arg11: memref<32x16xbf16, #tpu.memory_space<vmem>>, %arg12: memref<1x16xf32, #tpu.memory_space<vmem>>, %arg13: memref<1x16xf32, #tpu.memory_space<vmem>>, %arg14: memref<1x16xf32, #tpu.memory_space<vmem>>, %arg15: memref<2xf32, #tpu.memory_space<smem>>, %arg16: memref<1x128xf32, #tpu.memory_space<vmem>>) attributes {dimension_semantics = [#tpu.dimension_semantics<parallel>], iteration_bounds = array<i64: 1>, scalar_prefetch = 0 : i64, scratch_operands = 0 : i64, tpu.core_type = #tpu.core_type<tc>, window_params = [{transform_indices = @transform_0, window_bounds = array<i64: 128, 16>}, {transform_indices = @transform_1, window_bounds = array<i64: 128, 16>}, {transform_indices = @transform_2, window_bounds = array<i64: 128, 64>}, {transform_indices = @transform_3, window_bounds = array<i64: 128, 64>}, {transform_indices = @transform_4, window_bounds = array<i64: 1, 128>}, {pipeline_mode = #tpu.pipeline_mode<synchronous>, transform_indices = @transform_5, window_bounds = array<i64: 64, 64>}, {pipeline_mode = #tpu.pipeline_mode<synchronous>, transform_indices = @transform_6, window_bounds = array<i64: 64, 64>}, {pipeline_mode = #tpu.pipeline_mode<synchronous>, transform_indices = @transform_7, window_bounds = array<i64: 1, 64>}, {pipeline_mode = #tpu.pipeline_mode<synchronous>, transform_indices = @transform_8, window_bounds = array<i64: 64, 32>}, {pipeline_mode = #tpu.pipeline_mode<synchronous>, transform_indices = @transform_9, window_bounds = array<i64: 1, 32>}, {pipeline_mode = #tpu.pipeline_mode<synchronous>, transform_indices = @transform_10, window_bounds = array<i64: 32, 16>}, {pipeline_mode = #tpu.pipeline_mode<synchronous>, transform_indices = @transform_11, window_bounds = array<i64: 1, 16>}, {pipeline_mode = #tpu.pipeline_mode<synchronous>, transform_indices = @transform_12, window_bounds = array<i64: 1, 16>}, {pipeline_mode = #tpu.pipeline_mode<synchronous>, transform_indices = @transform_13, window_bounds = array<i64: 1, 16>}, {transform_indices = @transform_14, window_bounds = array<i64: 2>}, {transform_indices = @transform_15, window_bounds = array<i64: 1, 128>}]} {
    %c0 = arith.constant 0 : index
    %c0_0 = arith.constant 0 : index
    %0 = vector.load %arg1[%c0, %c0_0] : memref<128x16xbf16, #tpu.memory_space<vmem>>, vector<128x16xbf16>
    %1 = arith.extf %0 : vector<128x16xbf16> to vector<128x16xf32>
    %c0_1 = arith.constant 0 : index
    %c0_2 = arith.constant 0 : index
    %2 = vector.load %arg2[%c0_1, %c0_2] : memref<128x16xbf16, #tpu.memory_space<vmem>>, vector<128x16xbf16>
    %3 = arith.extf %2 : vector<128x16xbf16> to vector<128x16xf32>
    %4 = arith.mulf %1, %3 : vector<128x16xf32>
    %c0_3 = arith.constant 0 : index
    %c0_4 = arith.constant 0 : index
    %5 = vector.load %arg13[%c0_3, %c0_4] : memref<1x16xf32, #tpu.memory_space<vmem>>, vector<1x16xf32>
    %6 = vector.broadcast %5 : vector<1x16xf32> to vector<128x16xf32>
    %7 = arith.mulf %4, %6 : vector<128x16xf32>
    %c0_5 = arith.constant 0 : index
    %c0_6 = arith.constant 0 : index
    %8 = vector.load %arg3[%c0_5, %c0_6] : memref<128x64xbf16, #tpu.memory_space<vmem>>, vector<128x64xbf16>
    %c0_7 = arith.constant 0 : index
    %c0_8 = arith.constant 0 : index
    %9 = vector.load %arg6[%c0_7, %c0_8] : memref<64x64xbf16, #tpu.memory_space<vmem>>, vector<64x64xbf16>
    %cst = arith.constant dense<0.000000e+00> : vector<128x64xf32>
    %10 = tpu.matmul %8, %9, %cst {dimension_numbers = #tpu.dot_dimension_numbers<[1], [0], [0], [1], [0, 0, 1, 1], [], []>} : vector<128x64xbf16>, vector<64x64xbf16>, vector<128x64xf32> -> vector<128x64xf32>
    %c0_9 = arith.constant 0 : index
    %c0_10 = arith.constant 0 : index
    %11 = vector.load %arg4[%c0_9, %c0_10] : memref<128x64xbf16, #tpu.memory_space<vmem>>, vector<128x64xbf16>
    %c0_11 = arith.constant 0 : index
    %c0_12 = arith.constant 0 : index
    %12 = vector.load %arg7[%c0_11, %c0_12] : memref<64x64xbf16, #tpu.memory_space<vmem>>, vector<64x64xbf16>
    %cst_13 = arith.constant dense<0.000000e+00> : vector<128x64xf32>
    %13 = tpu.matmul %11, %12, %cst_13 {dimension_numbers = #tpu.dot_dimension_numbers<[1], [0], [0], [1], [0, 0, 1, 1], [], []>} : vector<128x64xbf16>, vector<64x64xbf16>, vector<128x64xf32> -> vector<128x64xf32>
    %14 = arith.addf %10, %13 : vector<128x64xf32>
    %c0_14 = arith.constant 0 : index
    %c0_15 = arith.constant 0 : index
    %15 = vector.load %arg8[%c0_14, %c0_15] : memref<1x64xf32, #tpu.memory_space<vmem>>, vector<1x64xf32>
    %16 = vector.broadcast %15 : vector<1x64xf32> to vector<128x64xf32>
    %17 = arith.addf %14, %16 : vector<128x64xf32>
    %cst_16 = arith.constant 0.000000e+00 : f32
    %18 = vector.broadcast %cst_16 : f32 to vector<128x64xf32>
    %19 = arith.maximumf %17, %18 : vector<128x64xf32>
    %20 = arith.truncf %19 : vector<128x64xf32> to vector<128x64xbf16>
    %c0_17 = arith.constant 0 : index
    %c0_18 = arith.constant 0 : index
    %21 = vector.load %arg9[%c0_17, %c0_18] : memref<64x32xbf16, #tpu.memory_space<vmem>>, vector<64x32xbf16>
    %cst_19 = arith.constant dense<0.000000e+00> : vector<128x32xf32>
    %22 = tpu.matmul %20, %21, %cst_19 {dimension_numbers = #tpu.dot_dimension_numbers<[1], [0], [0], [1], [0, 0, 1, 1], [], []>} : vector<128x64xbf16>, vector<64x32xbf16>, vector<128x32xf32> -> vector<128x32xf32>
    %c0_20 = arith.constant 0 : index
    %c0_21 = arith.constant 0 : index
    %23 = vector.load %arg10[%c0_20, %c0_21] : memref<1x32xf32, #tpu.memory_space<vmem>>, vector<1x32xf32>
    %24 = vector.broadcast %23 : vector<1x32xf32> to vector<128x32xf32>
    %25 = arith.addf %22, %24 : vector<128x32xf32>
    %cst_22 = arith.constant 0.000000e+00 : f32
    %26 = vector.broadcast %cst_22 : f32 to vector<128x32xf32>
    %27 = arith.maximumf %25, %26 : vector<128x32xf32>
    %28 = arith.truncf %27 : vector<128x32xf32> to vector<128x32xbf16>
    %c0_23 = arith.constant 0 : index
    %c0_24 = arith.constant 0 : index
    %29 = vector.load %arg11[%c0_23, %c0_24] : memref<32x16xbf16, #tpu.memory_space<vmem>>, vector<32x16xbf16>
    %cst_25 = arith.constant dense<0.000000e+00> : vector<128x16xf32>
    %30 = tpu.matmul %28, %29, %cst_25 {dimension_numbers = #tpu.dot_dimension_numbers<[1], [0], [0], [1], [0, 0, 1, 1], [], []>} : vector<128x32xbf16>, vector<32x16xbf16>, vector<128x16xf32> -> vector<128x16xf32>
    %c0_26 = arith.constant 0 : index
    %c0_27 = arith.constant 0 : index
    %31 = vector.load %arg12[%c0_26, %c0_27] : memref<1x16xf32, #tpu.memory_space<vmem>>, vector<1x16xf32>
    %32 = vector.broadcast %31 : vector<1x16xf32> to vector<128x16xf32>
    %33 = arith.addf %30, %32 : vector<128x16xf32>
    %cst_28 = arith.constant 0.000000e+00 : f32
    %34 = vector.broadcast %cst_28 : f32 to vector<128x16xf32>
    %35 = arith.maximumf %33, %34 : vector<128x16xf32>
    %c0_29 = arith.constant 0 : index
    %36 = memref.load %arg15[%c0_29] : memref<2xf32, #tpu.memory_space<smem>>
    %c1 = arith.constant 1 : index
    %37 = memref.load %arg15[%c1] : memref<2xf32, #tpu.memory_space<smem>>
    %cst_30 = arith.constant dense<0.000000e+00> : vector<128xf32>
    %38 = vector.multi_reduction <add>, %7, %cst_30 [1] : vector<128x16xf32> to vector<128xf32>
    %c0_31 = arith.constant 0 : index
    %c0_32 = arith.constant 0 : index
    %39 = vector.load %arg14[%c0_31, %c0_32] : memref<1x16xf32, #tpu.memory_space<vmem>>, vector<1x16xf32>
    %40 = vector.broadcast %39 : vector<1x16xf32> to vector<128x16xf32>
    %41 = arith.mulf %35, %40 : vector<128x16xf32>
    %cst_33 = arith.constant dense<0.000000e+00> : vector<128xf32>
    %42 = vector.multi_reduction <add>, %41, %cst_33 [1] : vector<128x16xf32> to vector<128xf32>
    %43 = arith.addf %38, %42 : vector<128xf32>
    %44 = vector.broadcast %37 : f32 to vector<128xf32>
    %45 = arith.addf %43, %44 : vector<128xf32>
    %c0_34 = arith.constant 0 : index
    %c0_35 = arith.constant 0 : index
    %46 = vector.load %arg5[%c0_34, %c0_35] : memref<1x128xf32, #tpu.memory_space<vmem>>, vector<1x128xf32>
    %47 = vector.shape_cast %46 : vector<1x128xf32> to vector<128xf32>
    %48 = vector.broadcast %36 : f32 to vector<128xf32>
    %49 = arith.mulf %47, %48 : vector<128xf32>
    %50 = arith.addf %45, %49 : vector<128xf32>
    %c0_36 = arith.constant 0 : index
    %c0_37 = arith.constant 0 : index
    %51 = vector.load %arg16[%c0_36, %c0_37] : memref<1x128xf32, #tpu.memory_space<vmem>>, vector<1x128xf32>
    %52 = vector.shape_cast %51 : vector<1x128xf32> to vector<128xf32>
    %53 = vector.shape_cast %50 : vector<128xf32> to vector<1x128xf32>
    tpu.vector_store %arg16[%c0_36, %c0_37], %53 {strides = array<i32>} : memref<1x128xf32, #tpu.memory_space<vmem>>, vector<1x128xf32>,
    return
  }
  func.func @transform_0(%arg0: i32) -> (i32, i32) {
    %c0_i32 = arith.constant 0 : i32
    %c0_i32_0 = arith.constant 0 : i32
    return %arg0, %c0_i32 : i32, i32
  }
  func.func @transform_1(%arg0: i32) -> (i32, i32) {
    %c0_i32 = arith.constant 0 : i32
    %c0_i32_0 = arith.constant 0 : i32
    return %arg0, %c0_i32 : i32, i32
  }
  func.func @transform_2(%arg0: i32) -> (i32, i32) {
    %c0_i32 = arith.constant 0 : i32
    %c0_i32_0 = arith.constant 0 : i32
    return %arg0, %c0_i32 : i32, i32
  }
  func.func @transform_3(%arg0: i32) -> (i32, i32) {
    %c0_i32 = arith.constant 0 : i32
    %c0_i32_0 = arith.constant 0 : i32
    return %arg0, %c0_i32 : i32, i32
  }
  func.func @transform_4(%arg0: i32) -> (i32, i32) {
    %c0_i32 = arith.constant 0 : i32
    %c0_i32_0 = arith.constant 0 : i32
    return %c0_i32, %arg0 : i32, i32
  }
  func.func @transform_5(%arg0: i32) -> (i32, i32) {
    %c0_i32 = arith.constant 0 : i32
    %c0_i32_0 = arith.constant 0 : i32
    %c0_i32_1 = arith.constant 0 : i32
    return %c0_i32, %c0_i32_0 : i32, i32
  }
  func.func @transform_6(%arg0: i32) -> (i32, i32) {
    %c0_i32 = arith.constant 0 : i32
    %c0_i32_0 = arith.constant 0 : i32
    %c0_i32_1 = arith.constant 0 : i32
    return %c0_i32, %c0_i32_0 : i32, i32
  }
  func.func @transform_7(%arg0: i32) -> (i32, i32) {
    %c0_i32 = arith.constant 0 : i32
    %c0_i32_0 = arith.constant 0 : i32
    %c0_i32_1 = arith.constant 0 : i32
    return %c0_i32, %c0_i32_0 : i32, i32
  }
  func.func @transform_8(%arg0: i32) -> (i32, i32) {
    %c0_i32 = arith.constant 0 : i32
    %c0_i32_0 = arith.constant 0 : i32
    %c0_i32_1 = arith.constant 0 : i32
    return %c0_i32, %c0_i32_0 : i32, i32
  }
  func.func @transform_9(%arg0: i32) -> (i32, i32) {
    %c0_i32 = arith.constant 0 : i32
    %c0_i32_0 = arith.constant 0 : i32
    %c0_i32_1 = arith.constant 0 : i32
    return %c0_i32, %c0_i32_0 : i32, i32
  }
  func.func @transform_10(%arg0: i32) -> (i32, i32) {
    %c0_i32 = arith.constant 0 : i32
    %c0_i32_0 = arith.constant 0 : i32
    %c0_i32_1 = arith.constant 0 : i32
    return %c0_i32, %c0_i32_0 : i32, i32
  }
  func.func @transform_11(%arg0: i32) -> (i32, i32) {
    %c0_i32 = arith.constant 0 : i32
    %c0_i32_0 = arith.constant 0 : i32
    %c0_i32_1 = arith.constant 0 : i32
    return %c0_i32, %c0_i32_0 : i32, i32
  }
  func.func @transform_12(%arg0: i32) -> (i32, i32) {
    %c0_i32 = arith.constant 0 : i32
    %c0_i32_0 = arith.constant 0 : i32
    %c0_i32_1 = arith.constant 0 : i32
    return %c0_i32, %c0_i32_0 : i32, i32
  }
  func.func @transform_13(%arg0: i32) -> (i32, i32) {
    %c0_i32 = arith.constant 0 : i32
    %c0_i32_0 = arith.constant 0 : i32
    %c0_i32_1 = arith.constant 0 : i32
    return %c0_i32, %c0_i32_0 : i32, i32
  }
  func.func @transform_14(%arg0: i32) -> i32 {
    %c0_i32 = arith.constant 0 : i32
    %c0_i32_0 = arith.constant 0 : i32
    return %c0_i32 : i32
  }
  func.func @transform_15(%arg0: i32) -> (i32, i32) {
    %c0_i32 = arith.constant 0 : i32
    %c0_i32_0 = arith.constant 0 : i32
    return %c0_i32, %arg0 : i32, i32
  }
}

</mosaic_0001>

<llo_original>
// kernel: tpu_custom_call.1
$region0: #{tpu_custom_call.1}
  #allocation0 [shape = 'u32[]', space=smem, size = 0x4, offset = 0x4, fixed_abs, tag = 'smem constant byte address 0x4 - core index']
  #allocation1 [shape = 'u32[144,128]{1,0:T(1,128)}', space=vmem, size = 0x12000, scoped, tag = 'internal scratch']
  %s0 = inlined_call_operand.vmem [shape: bf16[128,16], index: 0, kind: input, shape index: {}]
  %s1 = inlined_call_operand.vmem [shape: bf16[128,16], index: 1, kind: input, shape index: {}]
  %s2 = inlined_call_operand.vmem [shape: bf16[128,64], index: 2, kind: input, shape index: {}]
  %s3 = inlined_call_operand.vmem [shape: bf16[128,64], index: 3, kind: input, shape index: {}]
  %s4 = inlined_call_operand.vmem [shape: f32[1,128], index: 4, kind: input, shape index: {}]
  %s5 = inlined_call_operand.vmem [shape: bf16[64,64], index: 5, kind: input, shape index: {}]
  %s6 = inlined_call_operand.vmem [shape: bf16[64,64], index: 6, kind: input, shape index: {}]
  %s7 = inlined_call_operand.vmem [shape: f32[1,64], index: 7, kind: input, shape index: {}]
  %s8 = inlined_call_operand.vmem [shape: bf16[64,32], index: 8, kind: input, shape index: {}]
  %s9 = inlined_call_operand.vmem [shape: f32[1,32], index: 9, kind: input, shape index: {}]
  %s10 = inlined_call_operand.vmem [shape: bf16[32,16], index: 10, kind: input, shape index: {}]
  %s11 = inlined_call_operand.vmem [shape: f32[1,16], index: 11, kind: input, shape index: {}]
  %s12 = inlined_call_operand.vmem [shape: f32[1,16], index: 12, kind: input, shape index: {}]
  %s13 = inlined_call_operand.vmem [shape: f32[1,16], index: 13, kind: input, shape index: {}]
  %s14 = inlined_call_operand.vmem [shape: f32[2], index: 14, kind: input, shape index: {}]
  %s15 = inlined_call_operand.hbm [shape: f32[1,128], index: 15, kind: output, shape index: {}]
  %s16 = sld [smem:[#allocation0]]
  $region74: #{tpu_custom_call.1} parent=0
    _
  %s18 = ssub.s32 1, %s16
  %s19 = scalar_select 0, %s18, %s16
  $region1: #{tpu_custom_call.1} parent=0
    #allocation2 [shape = 'u8[512]{0}', space=smem, size = 0x200, scoped, tag = 'input window, operand 14, single buffered']
    #allocation3 [shape = 's32[1]{0}', space=sflag, size = 0x4, scoped, tag = 'scoped memory for tpu_custom_call.1']
    #allocation4 [shape = 's32[1]{0}', space=sflag, size = 0x4, scoped, tag = 'scoped memory for tpu_custom_call.1']
    #allocation5 [shape = 'u8[512]{0}', space=vmem, size = 0x400, scoped, tag = 'output window, operand 0, single buffered']
    %20 = vsyncpa [#allocation4], 0
    %21 = vsyncpa [#allocation3], 0
    // Predicated region
    $region2: #{tpu_custom_call.1} parent=1 // pred_check
      _
    $region3: #{tpu_custom_call.1} parent=1 // pred_check_branch
      %23 = sbr.rel (0) target = $region5
    $region4: #{tpu_custom_call.1} parent=1 // pred_region
      _
    $region5: #{tpu_custom_call.1} parent=1 // pred_fallthru
      _
    // Predicated region
    $region6: #{tpu_custom_call.1} parent=1 // pred_check
      _
    $region7: #{tpu_custom_call.1} parent=1 // pred_check_branch
      %25 = sbr.rel (0) target = $region9
    $region8: #{tpu_custom_call.1} parent=1 // pred_region
      _
    $region9: #{tpu_custom_call.1} parent=1 // pred_fallthru
      _
    // Predicated region
    $region10: #{tpu_custom_call.1} parent=1 // pred_check
      _
    $region11: #{tpu_custom_call.1} parent=1 // pred_check_branch
      %27 = sbr.rel (0) target = $region13
    $region12: #{tpu_custom_call.1} parent=1 // pred_region
      _
    $region13: #{tpu_custom_call.1} parent=1 // pred_fallthru
      _
    // Predicated region
    $region14: #{tpu_custom_call.1} parent=1 // pred_check
      _
    $region15: #{tpu_custom_call.1} parent=1 // pred_check_branch
      %29 = sbr.rel (0) target = $region17
    $region16: #{tpu_custom_call.1} parent=1 // pred_region
      _
    $region17: #{tpu_custom_call.1} parent=1 // pred_fallthru
      _
    // Predicated region
    $region18: #{tpu_custom_call.1} parent=1 // pred_check
      _
    $region19: #{tpu_custom_call.1} parent=1 // pred_check_branch
      %31 = sbr.rel (0) target = $region21
    $region20: #{tpu_custom_call.1} parent=1 // pred_region
      _
    $region21: #{tpu_custom_call.1} parent=1 // pred_fallthru
      _
    // Predicated region
    $region22: #{tpu_custom_call.1} parent=1 // pred_check
      _
    $region23: #{tpu_custom_call.1} parent=1 // pred_check_branch
      %33 = sbr.rel (0) target = $region25
    $region24: #{tpu_custom_call.1} parent=1 // pred_region
      _
    $region25: #{tpu_custom_call.1} parent=1 // pred_fallthru
      _
    // Predicated region
    $region26: #{tpu_custom_call.1} parent=1 // pred_check
      _
    $region27: #{tpu_custom_call.1} parent=1 // pred_check_branch
      %35 = sbr.rel (0) target = $region29
    $region28: #{tpu_custom_call.1} parent=1 // pred_region
      _
    $region29: #{tpu_custom_call.1} parent=1 // pred_fallthru
      _
    // Predicated region
    $region30: #{tpu_custom_call.1} parent=1 // pred_check
      _
    $region31: #{tpu_custom_call.1} parent=1 // pred_check_branch
      %37 = sbr.rel (0) target = $region33
    $region32: #{tpu_custom_call.1} parent=1 // pred_region
      _
    $region33: #{tpu_custom_call.1} parent=1 // pred_fallthru
      _
    // Predicated region
    $region34: #{tpu_custom_call.1} parent=1 // pred_check
      _
    $region35: #{tpu_custom_call.1} parent=1 // pred_check_branch
      %39 = sbr.rel (0) target = $region37
    $region36: #{tpu_custom_call.1} parent=1 // pred_region
      _
    $region37: #{tpu_custom_call.1} parent=1 // pred_fallthru
      _
    // Predicated region
    $region38: #{tpu_custom_call.1} parent=1 // pred_check
      _
    $region39: #{tpu_custom_call.1} parent=1 // pred_check_branch
      %41 = sbr.rel (0) target = $region41
    $region40: #{tpu_custom_call.1} parent=1 // pred_region
      _
    $region41: #{tpu_custom_call.1} parent=1 // pred_fallthru
      _
    // Predicated region
    $region42: #{tpu_custom_call.1} parent=1 // pred_check
      _
    $region43: #{tpu_custom_call.1} parent=1 // pred_check_branch
      %43 = sbr.rel (0) target = $region45
    $region44: #{tpu_custom_call.1} parent=1 // pred_region
      _
    $region45: #{tpu_custom_call.1} parent=1 // pred_fallthru
      _
    // Predicated region
    $region46: #{tpu_custom_call.1} parent=1 // pred_check
      _
    $region47: #{tpu_custom_call.1} parent=1 // pred_check_branch
      %45 = sbr.rel (0) target = $region49
    $region48: #{tpu_custom_call.1} parent=1 // pred_region
      _
    $region49: #{tpu_custom_call.1} parent=1 // pred_fallthru
      _
    // Predicated region
    $region50: #{tpu_custom_call.1} parent=1 // pred_check
      _
    $region51: #{tpu_custom_call.1} parent=1 // pred_check_branch
      %47 = sbr.rel (0) target = $region53
    $region52: #{tpu_custom_call.1} parent=1 // pred_region
      _
    $region53: #{tpu_custom_call.1} parent=1 // pred_fallthru
      _
    // Predicated region
    $region54: #{tpu_custom_call.1} parent=1 // pred_check
      _
    $region55: #{tpu_custom_call.1} parent=1 // pred_check_branch
      %49 = sbr.rel (0) target = $region57
    $region56: #{tpu_custom_call.1} parent=1 // pred_region
      _
    $region57: #{tpu_custom_call.1} parent=1 // pred_fallthru
      _
    // Predicated region
    $region58: #{tpu_custom_call.1} parent=1 // pred_check
      _
    $region59: #{tpu_custom_call.1} parent=1 // pred_check_branch
      %51 = sbr.rel (0) target = $region61
    $region60: #{tpu_custom_call.1} parent=1 // pred_region
      %s53 = ssub.s32 16, 16
      %54 = vsyncadd [#allocation4], %s53
      %s56 = sshll.u32 %s14, 4
      %s57 = int_to_ptr.vmem [resolvable:$true] %s56
      %59 = dma.vmem_to_smem %s57, 16, [#allocation2], [#allocation4]
    $region61: #{tpu_custom_call.1} parent=1 // pred_fallthru
      _
    // Predicated region
    $region62: #{tpu_custom_call.1} parent=1 // pred_check
      _
    $region63: #{tpu_custom_call.1} parent=1 // pred_check_branch
      %61 = sbr.rel (0) target = $region65
    $region64: #{tpu_custom_call.1} parent=1 // pred_region
      %62 = dma.done [#allocation4], 16
    $region65: #{tpu_custom_call.1} parent=1 // pred_fallthru
      _
    %63 = sfence
    %v65 = vld [vmem:[%s0] sm:$0xf]
    %v66 = vld [vmem:[%s0 + $0x4] sm:$0xf]
    %v67 = vld [vmem:[%s0 + $0x8] sm:$0xf]
    %v68 = vld [vmem:[%s0 + $0xc] sm:$0xf]
    %v69 = vld [vmem:[%s0 + $0x10] sm:$0xf]
    %v70 = vld [vmem:[%s0 + $0x14] sm:$0xf]
    %v71 = vld [vmem:[%s0 + $0x18] sm:$0xf]
    %v72 = vld [vmem:[%s0 + $0x1c] sm:$0xf]
    %v73 = vld [vmem:[%s0 + $0x20] sm:$0xf]
    %v74 = vld [vmem:[%s0 + $0x24] sm:$0xf]
    %v75 = vld [vmem:[%s0 + $0x28] sm:$0xf]
    %v76 = vld [vmem:[%s0 + $0x2c] sm:$0xf]
    %v77 = vld [vmem:[%s0 + $0x30] sm:$0xf]
    %v78 = vld [vmem:[%s0 + $0x34] sm:$0xf]
    %v79 = vld [vmem:[%s0 + $0x38] sm:$0xf]
    %v80 = vld [vmem:[%s0 + $0x3c] sm:$0xf]
    %v81 = vunpack.c.l.bf16 %v65
    %v82 = vunpack.c.l.bf16 %v66
    %v83 = vunpack.c.l.bf16 %v67
    %v84 = vunpack.c.l.bf16 %v68
    %v85 = vunpack.c.l.bf16 %v69
    %v86 = vunpack.c.l.bf16 %v70
    %v87 = vunpack.c.l.bf16 %v71
    %v88 = vunpack.c.l.bf16 %v72
    %v89 = vunpack.c.l.bf16 %v73
    %v90 = vunpack.c.l.bf16 %v74
    %v91 = vunpack.c.l.bf16 %v75
    %v92 = vunpack.c.l.bf16 %v76
    %v93 = vunpack.c.l.bf16 %v77
    %v94 = vunpack.c.l.bf16 %v78
    %v95 = vunpack.c.l.bf16 %v79
    %v96 = vunpack.c.l.bf16 %v80
    %v97 = vld [vmem:[%s1] sm:$0xf]
    %v98 = vld [vmem:[%s1 + $0x4] sm:$0xf]
    %v99 = vld [vmem:[%s1 + $0x8] sm:$0xf]
    %v100 = vld [vmem:[%s1 + $0xc] sm:$0xf]
    %v101 = vld [vmem:[%s1 + $0x10] sm:$0xf]
    %v102 = vld [vmem:[%s1 + $0x14] sm:$0xf]
    %v103 = vld [vmem:[%s1 + $0x18] sm:$0xf]
    %v104 = vld [vmem:[%s1 + $0x1c] sm:$0xf]
    %v105 = vld [vmem:[%s1 + $0x20] sm:$0xf]
    %v106 = vld [vmem:[%s1 + $0x24] sm:$0xf]
    %v107 = vld [vmem:[%s1 + $0x28] sm:$0xf]
    %v108 = vld [vmem:[%s1 + $0x2c] sm:$0xf]
    %v109 = vld [vmem:[%s1 + $0x30] sm:$0xf]
    %v110 = vld [vmem:[%s1 + $0x34] sm:$0xf]
    %v111 = vld [vmem:[%s1 + $0x38] sm:$0xf]
    %v112 = vld [vmem:[%s1 + $0x3c] sm:$0xf]
    %v113 = vunpack.c.l.bf16 %v97
    %v114 = vunpack.c.l.bf16 %v98
    %v115 = vunpack.c.l.bf16 %v99
    %v116 = vunpack.c.l.bf16 %v100
    %v117 = vunpack.c.l.bf16 %v101
    %v118 = vunpack.c.l.bf16 %v102
    %v119 = vunpack.c.l.bf16 %v103
    %v120 = vunpack.c.l.bf16 %v104
    %v121 = vunpack.c.l.bf16 %v105
    %v122 = vunpack.c.l.bf16 %v106
    %v123 = vunpack.c.l.bf16 %v107
    %v124 = vunpack.c.l.bf16 %v108
    %v125 = vunpack.c.l.bf16 %v109
    %v126 = vunpack.c.l.bf16 %v110
    %v127 = vunpack.c.l.bf16 %v111
    %v128 = vunpack.c.l.bf16 %v112
    %v129 = vmul.f32 %v81, %v113
    %v130 = vmul.f32 %v82, %v114
    %v131 = vmul.f32 %v83, %v115
    %v132 = vmul.f32 %v84, %v116
    %v133 = vmul.f32 %v85, %v117
    %v134 = vmul.f32 %v86, %v118
    %v135 = vmul.f32 %v87, %v119
    %v136 = vmul.f32 %v88, %v120
    %v137 = vmul.f32 %v89, %v121
    %v138 = vmul.f32 %v90, %v122
    %v139 = vmul.f32 %v91, %v123
    %v140 = vmul.f32 %v92, %v124
    %v141 = vmul.f32 %v93, %v125
    %v142 = vmul.f32 %v94, %v126
    %v143 = vmul.f32 %v95, %v127
    %v144 = vmul.f32 %v96, %v128
    %v145 = vld [vmem:[%s12] sm:$0x1]
    %v147 = vlaneseq
    %v148 = vshrl.u32 %v147, 7
    %v149 = vsub.s32 0, %v148
    %v150 = vrot.slane %v145, %v149
    %v152 = vmul.f32 %v129, %v150
    %v153 = vmul.f32 %v130, %v150
    %v154 = vmul.f32 %v131, %v150
    %v155 = vmul.f32 %v132, %v150
    %v156 = vmul.f32 %v133, %v150
    %v157 = vmul.f32 %v134, %v150
    %v158 = vmul.f32 %v135, %v150
    %v159 = vmul.f32 %v136, %v150
    %v160 = vmul.f32 %v137, %v150
    %v161 = vmul.f32 %v138, %v150
    %v162 = vmul.f32 %v139, %v150
    %v163 = vmul.f32 %v140, %v150
    %v164 = vmul.f32 %v141, %v150
    %v165 = vmul.f32 %v142, %v150
    %v166 = vmul.f32 %v143, %v150
    %v167 = vmul.f32 %v144, %v150
    %v168 = vld [vmem:[%s2] sm:$0xf]
    %v169 = vld [vmem:[%s2 + $0x4] sm:$0xf]
    %v170 = vld [vmem:[%s2 + $0x8] sm:$0xf]
    %v171 = vld [vmem:[%s2 + $0xc] sm:$0xf]
    %v172 = vld [vmem:[%s2 + $0x10] sm:$0xf]
    %v173 = vld [vmem:[%s2 + $0x14] sm:$0xf]
    %v174 = vld [vmem:[%s2 + $0x18] sm:$0xf]
    %v175 = vld [vmem:[%s2 + $0x1c] sm:$0xf]
    %v176 = vld [vmem:[%s2 + $0x20] sm:$0xf]
    %v177 = vld [vmem:[%s2 + $0x24] sm:$0xf]
    %v178 = vld [vmem:[%s2 + $0x28] sm:$0xf]
    %v179 = vld [vmem:[%s2 + $0x2c] sm:$0xf]
    %v180 = vld [vmem:[%s2 + $0x30] sm:$0xf]
    %v181 = vld [vmem:[%s2 + $0x34] sm:$0xf]
    %v182 = vld [vmem:[%s2 + $0x38] sm:$0xf]
    %v183 = vld [vmem:[%s2 + $0x3c] sm:$0xf]
    %v184 = vld [vmem:[%s5] sm:$0xf]
    %v185 = vld [vmem:[%s5 + $0x4] sm:$0xf]
    %v186 = vld [vmem:[%s5 + $0x8] sm:$0xf]
    %v187 = vld [vmem:[%s5 + $0xc] sm:$0xf]
    %v188 = vld [vmem:[%s5 + $0x10] sm:$0xf]
    %v189 = vld [vmem:[%s5 + $0x14] sm:$0xf]
    %v190 = vld [vmem:[%s5 + $0x18] sm:$0xf]
    %v191 = vld [vmem:[%s5 + $0x1c] sm:$0xf]
    %v192 = vld [vmem:[%s3] sm:$0xf]
    %v193 = vld [vmem:[%s3 + $0x4] sm:$0xf]
    %v194 = vld [vmem:[%s3 + $0x8] sm:$0xf]
    %v195 = vld [vmem:[%s3 + $0xc] sm:$0xf]
    %v196 = vld [vmem:[%s3 + $0x10] sm:$0xf]
    %v197 = vld [vmem:[%s3 + $0x14] sm:$0xf]
    %v198 = vld [vmem:[%s3 + $0x18] sm:$0xf]
    %v199 = vld [vmem:[%s3 + $0x1c] sm:$0xf]
    %v200 = vld [vmem:[%s3 + $0x20] sm:$0xf]
    %v201 = vld [vmem:[%s3 + $0x24] sm:$0xf]
    %v202 = vld [vmem:[%s3 + $0x28] sm:$0xf]
    %v203 = vld [vmem:[%s3 + $0x2c] sm:$0xf]
    %v204 = vld [vmem:[%s3 + $0x30] sm:$0xf]
    %v205 = vld [vmem:[%s3 + $0x34] sm:$0xf]
    %v206 = vld [vmem:[%s3 + $0x38] sm:$0xf]
    %v207 = vld [vmem:[%s3 + $0x3c] sm:$0xf]
    %v208 = vld [vmem:[%s6] sm:$0xf]
    %v209 = vld [vmem:[%s6 + $0x4] sm:$0xf]
    %v210 = vld [vmem:[%s6 + $0x8] sm:$0xf]
    %v211 = vld [vmem:[%s6 + $0xc] sm:$0xf]
    %v212 = vld [vmem:[%s6 + $0x10] sm:$0xf]
    %v213 = vld [vmem:[%s6 + $0x14] sm:$0xf]
    %v214 = vld [vmem:[%s6 + $0x18] sm:$0xf]
    %v215 = vld [vmem:[%s6 + $0x1c] sm:$0xf]
    %v232 = vunpack.c.l.b16 %v192
    %v233 = vunpack.c.l.b16 %v193
    %v234 = vunpack.c.l.b16 %v194
    %v235 = vunpack.c.l.b16 %v195
    %v236 = vunpack.c.l.b16 %v196
    %v237 = vunpack.c.l.b16 %v197
    %v238 = vunpack.c.l.b16 %v198
    %v239 = vunpack.c.l.b16 %v199
    %v240 = vunpack.c.l.b16 %v200
    %v241 = vunpack.c.l.b16 %v201
    %v242 = vunpack.c.l.b16 %v202
    %v243 = vunpack.c.l.b16 %v203
    %v244 = vunpack.c.l.b16 %v204
    %v245 = vunpack.c.l.b16 %v205
    %v246 = vunpack.c.l.b16 %v206
    %v247 = vunpack.c.l.b16 %v207
    %v248 = vpack.c.b16 %v233, %v232
    %v249 = vpack.c.b16 %v235, %v234
    %v250 = vpack.c.b16 %v237, %v236
    %v251 = vpack.c.b16 %v239, %v238
    %v252 = vpack.c.b16 %v241, %v240
    %v253 = vpack.c.b16 %v243, %v242
    %v254 = vpack.c.b16 %v245, %v244
    %v255 = vpack.c.b16 %v247, %v246
    %v264 = vunpack.c.l.b16 %v208
    %v265 = vunpack.c.l.b16 %v209
    %v266 = vunpack.c.l.b16 %v210
    %v267 = vunpack.c.l.b16 %v211
    %v268 = vunpack.c.l.b16 %v212
    %v269 = vunpack.c.l.b16 %v213
    %v270 = vunpack.c.l.b16 %v214
    %v271 = vunpack.c.l.b16 %v215
    %v272 = vpack.c.b16 %v265, %v264
    %v273 = vpack.c.b16 %v267, %v266
    %v274 = vpack.c.b16 %v269, %v268
    %v275 = vpack.c.b16 %v271, %v270
    %vm280 = vcmask 523264
    %v282 = vsel %vm280, %v248, 0
    %v285 = vsel %vm280, %v249, 0
    %v288 = vsel %vm280, %v250, 0
    %v291 = vsel %vm280, %v251, 0
    %v294 = vsel %vm280, %v252, 0
    %v297 = vsel %vm280, %v253, 0
    %v300 = vsel %vm280, %v254, 0
    %v303 = vsel %vm280, %v255, 0
    %305 = vmatprep.subr.bf16.mxu0 0
    %306 = vmatpush1.bf16.msra.mxu0 %v272
    %307 = vmatprep.subr.bf16.mxu0 0
    %308 = vmatpush1.bf16.msra.mxu0 %v273
    %309 = vmatprep.subr.bf16.mxu0 0
    %310 = vmatpush1.bf16.msra.mxu0 %v274
    %311 = vmatprep.subr.bf16.mxu0 0
    %312 = vmatpush1.bf16.msra.mxu0 %v275
    %313 = vmatprep.subr.bf16.mxu0 0
    %314 = vmatpush1.bf16.msra.mxu0 0
    %315 = vmatprep.subr.bf16.mxu0 0
    %316 = vmatpush1.bf16.msra.mxu0 0
    %317 = vmatprep.subr.bf16.mxu0 0
    %318 = vmatpush1.bf16.msra.mxu0 0
    %319 = vmatprep.subr.bf16.mxu0 0
    %320 = vmatpush1.bf16.msra.mxu0 0
    %321 = vmatprep.subr.bf16.mxu0 0
    %322 = vmatpush1.bf16.msra.mxu0 0
    %323 = vmatprep.subr.bf16.mxu0 0
    %324 = vmatpush1.bf16.msra.mxu0 0
    %325 = vmatprep.subr.bf16.mxu0 0
    %326 = vmatpush1.bf16.msra.mxu0 0
    %327 = vmatprep.subr.bf16.mxu0 0
    %328 = vmatpush1.bf16.msra.mxu0 0
    %329 = vmatprep.subr.bf16.mxu0 0
    %330 = vmatpush1.bf16.msra.mxu0 0
    %331 = vmatprep.subr.bf16.mxu0 0
    %332 = vmatpush1.bf16.msra.mxu0 0
    %333 = vmatprep.subr.bf16.mxu0 0
    %334 = vmatpush1.bf16.msra.mxu0 0
    %335 = vmatprep.subr.bf16.mxu0 0
    %336 = vmatpush1.bf16.msra.mxu0 0
    %337 = vmatprep.mubr.bf16.mxu0 0
    %338 = vmatmul.mubr.bf16.gmra.mrb[0].mxu0 %v282
    %v339 = vpop.f32.mrb[0].mxu0
    %v340 = vadd.f32 0.0, %v339
    %v341 = vpop.f32.mrb[0].mxu0
    %v342 = vpop.f32.mrb[0].mxu0
    %v343 = vadd.f32 0.0, %v342
    %v344 = vpop.f32.mrb[0].mxu0
    %345 = vmatprep.mubr.bf16.mxu0 0
    %346 = vmatmul.mubr.bf16.gmra.mrb[0].mxu0 %v285
    %v347 = vpop.f32.mrb[0].mxu0
    %v348 = vadd.f32 0.0, %v347
    %v349 = vpop.f32.mrb[0].mxu0
    %v350 = vpop.f32.mrb[0].mxu0
    %v351 = vadd.f32 0.0, %v350
    %v352 = vpop.f32.mrb[0].mxu0
    %353 = vmatprep.mubr.bf16.mxu0 0
    %354 = vmatmul.mubr.bf16.gmra.mrb[0].mxu0 %v288
    %v355 = vpop.f32.mrb[0].mxu0
    %v356 = vadd.f32 0.0, %v355
    %v357 = vpop.f32.mrb[0].mxu0
    %v358 = vpop.f32.mrb[0].mxu0
    %v359 = vadd.f32 0.0, %v358
    %v360 = vpop.f32.mrb[0].mxu0
    %361 = vmatprep.mubr.bf16.mxu0 0
    %362 = vmatmul.mubr.bf16.gmra.mrb[0].mxu0 %v291
    %v363 = vpop.f32.mrb[0].mxu0
    %v364 = vadd.f32 0.0, %v363
    %v365 = vpop.f32.mrb[0].mxu0
    %v366 = vpop.f32.mrb[0].mxu0
    %v367 = vadd.f32 0.0, %v366
    %v368 = vpop.f32.mrb[0].mxu0
    %369 = vmatprep.mubr.bf16.mxu0 0
    %370 = vmatmul.mubr.bf16.gmra.mrb[0].mxu0 %v294
    %v371 = vpop.f32.mrb[0].mxu0
    %v372 = vadd.f32 0.0, %v371
    %v373 = vpop.f32.mrb[0].mxu0
    %v374 = vpop.f32.mrb[0].mxu0
    %v375 = vadd.f32 0.0, %v374
    %v376 = vpop.f32.mrb[0].mxu0
    %377 = vmatprep.mubr.bf16.mxu0 0
    %378 = vmatmul.mubr.bf16.gmra.mrb[0].mxu0 %v297
    %v379 = vpop.f32.mrb[0].mxu0
    %v380 = vadd.f32 0.0, %v379
    %v381 = vpop.f32.mrb[0].mxu0
    %v382 = vpop.f32.mrb[0].mxu0
    %v383 = vadd.f32 0.0, %v382
    %v384 = vpop.f32.mrb[0].mxu0
    %385 = vmatprep.mubr.bf16.mxu0 0
    %386 = vmatmul.mubr.bf16.gmra.mrb[0].mxu0 %v300
    %v387 = vpop.f32.mrb[0].mxu0
    %v388 = vadd.f32 0.0, %v387
    %v389 = vpop.f32.mrb[0].mxu0
    %v390 = vpop.f32.mrb[0].mxu0
    %v391 = vadd.f32 0.0, %v390
    %v392 = vpop.f32.mrb[0].mxu0
    %393 = vmatprep.mubr.bf16.mxu0 0
    %394 = vmatmul.mubr.bf16.gmra.mrb[0].mxu0 %v303
    %v395 = vpop.f32.mrb[0].mxu0
    %v396 = vadd.f32 0.0, %v395
    %v397 = vpop.f32.mrb[0].mxu0
    %v398 = vpop.f32.mrb[0].mxu0
    %v399 = vadd.f32 0.0, %v398
    %v400 = vpop.f32.mrb[0].mxu0
    %401 = vdwg.mxu0
    %v418 = vunpack.c.l.b16 %v168
    %v419 = vunpack.c.l.b16 %v169
    %v420 = vunpack.c.l.b16 %v170
    %v421 = vunpack.c.l.b16 %v171
    %v422 = vunpack.c.l.b16 %v172
    %v423 = vunpack.c.l.b16 %v173
    %v424 = vunpack.c.l.b16 %v174
    %v425 = vunpack.c.l.b16 %v175
    %v426 = vunpack.c.l.b16 %v176
    %v427 = vunpack.c.l.b16 %v177
    %v428 = vunpack.c.l.b16 %v178
    %v429 = vunpack.c.l.b16 %v179
    %v430 = vunpack.c.l.b16 %v180
    %v431 = vunpack.c.l.b16 %v181
    %v432 = vunpack.c.l.b16 %v182
    %v433 = vunpack.c.l.b16 %v183
    %v434 = vpack.c.b16 %v419, %v418
    %v435 = vpack.c.b16 %v421, %v420
    %v436 = vpack.c.b16 %v423, %v422
    %v437 = vpack.c.b16 %v425, %v424
    %v438 = vpack.c.b16 %v427, %v426
    %v439 = vpack.c.b16 %v429, %v428
    %v440 = vpack.c.b16 %v431, %v430
    %v441 = vpack.c.b16 %v433, %v432
    %v450 = vunpack.c.l.b16 %v184
    %v451 = vunpack.c.l.b16 %v185
    %v452 = vunpack.c.l.b16 %v186
    %v453 = vunpack.c.l.b16 %v187
    %v454 = vunpack.c.l.b16 %v188
    %v455 = vunpack.c.l.b16 %v189
    %v456 = vunpack.c.l.b16 %v190
    %v457 = vunpack.c.l.b16 %v191
    %v458 = vpack.c.b16 %v451, %v450
    %v459 = vpack.c.b16 %v453, %v452
    %v460 = vpack.c.b16 %v455, %v454
    %v461 = vpack.c.b16 %v457, %v456
    %v467 = vsel %vm280, %v434, 0
    %v470 = vsel %vm280, %v435, 0
    %v473 = vsel %vm280, %v436, 0
    %v476 = vsel %vm280, %v437, 0
    %v479 = vsel %vm280, %v438, 0
    %v482 = vsel %vm280, %v439, 0
    %v485 = vsel %vm280, %v440, 0
    %v488 = vsel %vm280, %v441, 0
    %490 = vmatprep.subr.bf16.mxu0 0
    %491 = vmatpush1.bf16.msra.mxu0 %v458
    %492 = vmatprep.subr.bf16.mxu0 0
    %493 = vmatpush1.bf16.msra.mxu0 %v459
    %494 = vmatprep.subr.bf16.mxu0 0
    %495 = vmatpush1.bf16.msra.mxu0 %v460
    %496 = vmatprep.subr.bf16.mxu0 0
    %497 = vmatpush1.bf16.msra.mxu0 %v461
    %498 = vmatprep.subr.bf16.mxu0 0
    %499 = vmatpush1.bf16.msra.mxu0 0
    %500 = vmatprep.subr.bf16.mxu0 0
    %501 = vmatpush1.bf16.msra.mxu0 0
    %502 = vmatprep.subr.bf16.mxu0 0
    %503 = vmatpush1.bf16.msra.mxu0 0
    %504 = vmatprep.subr.bf16.mxu0 0
    %505 = vmatpush1.bf16.msra.mxu0 0
    %506 = vmatprep.subr.bf16.mxu0 0
    %507 = vmatpush1.bf16.msra.mxu0 0
    %508 = vmatprep.subr.bf16.mxu0 0
    %509 = vmatpush1.bf16.msra.mxu0 0
    %510 = vmatprep.subr.bf16.mxu0 0
    %511 = vmatpush1.bf16.msra.mxu0 0
    %512 = vmatprep.subr.bf16.mxu0 0
    %513 = vmatpush1.bf16.msra.mxu0 0
    %514 = vmatprep.subr.bf16.mxu0 0
    %515 = vmatpush1.bf16.msra.mxu0 0
    %516 = vmatprep.subr.bf16.mxu0 0
    %517 = vmatpush1.bf16.msra.mxu0 0
    %518 = vmatprep.subr.bf16.mxu0 0
    %519 = vmatpush1.bf16.msra.mxu0 0
    %520 = vmatprep.subr.bf16.mxu0 0
    %521 = vmatpush1.bf16.msra.mxu0 0
    %522 = vmatprep.mubr.bf16.mxu0 0
    %523 = vmatmul.mubr.bf16.gmra.mrb[0].mxu0 %v467
    %v524 = vpop.f32.mrb[0].mxu0
    %v525 = vadd.f32 %v340, %v524
    %v526 = vpop.f32.mrb[0].mxu0
    %v527 = vpop.f32.mrb[0].mxu0
    %v528 = vadd.f32 %v343, %v527
    %v529 = vpop.f32.mrb[0].mxu0
    %530 = vmatprep.mubr.bf16.mxu0 0
    %531 = vmatmul.mubr.bf16.gmra.mrb[0].mxu0 %v470
    %v532 = vpop.f32.mrb[0].mxu0
    %v533 = vadd.f32 %v348, %v532
    %v534 = vpop.f32.mrb[0].mxu0
    %v535 = vpop.f32.mrb[0].mxu0
    %v536 = vadd.f32 %v351, %v535
    %v537 = vpop.f32.mrb[0].mxu0
    %538 = vmatprep.mubr.bf16.mxu0 0
    %539 = vmatmul.mubr.bf16.gmra.mrb[0].mxu0 %v473
    %v540 = vpop.f32.mrb[0].mxu0
    %v541 = vadd.f32 %v356, %v540
    %v542 = vpop.f32.mrb[0].mxu0
    %v543 = vpop.f32.mrb[0].mxu0
    %v544 = vadd.f32 %v359, %v543
    %v545 = vpop.f32.mrb[0].mxu0
    %546 = vmatprep.mubr.bf16.mxu0 0
    %547 = vmatmul.mubr.bf16.gmra.mrb[0].mxu0 %v476
    %v548 = vpop.f32.mrb[0].mxu0
    %v549 = vadd.f32 %v364, %v548
    %v550 = vpop.f32.mrb[0].mxu0
    %v551 = vpop.f32.mrb[0].mxu0
    %v552 = vadd.f32 %v367, %v551
    %v553 = vpop.f32.mrb[0].mxu0
    %554 = vmatprep.mubr.bf16.mxu0 0
    %555 = vmatmul.mubr.bf16.gmra.mrb[0].mxu0 %v479
    %v556 = vpop.f32.mrb[0].mxu0
    %v557 = vadd.f32 %v372, %v556
    %v558 = vpop.f32.mrb[0].mxu0
    %v559 = vpop.f32.mrb[0].mxu0
    %v560 = vadd.f32 %v375, %v559
    %v561 = vpop.f32.mrb[0].mxu0
    %562 = vmatprep.mubr.bf16.mxu0 0
    %563 = vmatmul.mubr.bf16.gmra.mrb[0].mxu0 %v482
    %v564 = vpop.f32.mrb[0].mxu0
    %v565 = vadd.f32 %v380, %v564
    %v566 = vpop.f32.mrb[0].mxu0
    %v567 = vpop.f32.mrb[0].mxu0
    %v568 = vadd.f32 %v383, %v567
    %v569 = vpop.f32.mrb[0].mxu0
    %570 = vmatprep.mubr.bf16.mxu0 0
    %571 = vmatmul.mubr.bf16.gmra.mrb[0].mxu0 %v485
    %v572 = vpop.f32.mrb[0].mxu0
    %v573 = vadd.f32 %v388, %v572
    %v574 = vpop.f32.mrb[0].mxu0
    %v575 = vpop.f32.mrb[0].mxu0
    %v576 = vadd.f32 %v391, %v575
    %v577 = vpop.f32.mrb[0].mxu0
    %578 = vmatprep.mubr.bf16.mxu0 0
    %579 = vmatmul.mubr.bf16.gmra.mrb[0].mxu0 %v488
    %v580 = vpop.f32.mrb[0].mxu0
    %v581 = vadd.f32 %v396, %v580
    %v582 = vpop.f32.mrb[0].mxu0
    %v583 = vpop.f32.mrb[0].mxu0
    %v584 = vadd.f32 %v399, %v583
    %v585 = vpop.f32.mrb[0].mxu0
    %586 = vdwg.mxu0
    %v587 = vld [vmem:[%s7] sm:$0x1]
    %v589 = vlaneseq
    %v590 = vshrl.u32 %v589, 7
    %v591 = vsub.s32 0, %v590
    %v592 = vrot.slane %v587, %v591
    %v594 = vadd.f32 %v525, %v592
    %v595 = vadd.f32 %v528, %v592
    %v596 = vadd.f32 %v533, %v592
    %v597 = vadd.f32 %v536, %v592
    %v598 = vadd.f32 %v541, %v592
    %v599 = vadd.f32 %v544, %v592
    %v600 = vadd.f32 %v549, %v592
    %v601 = vadd.f32 %v552, %v592
    %v602 = vadd.f32 %v557, %v592
    %v603 = vadd.f32 %v560, %v592
    %v604 = vadd.f32 %v565, %v592
    %v605 = vadd.f32 %v568, %v592
    %v606 = vadd.f32 %v573, %v592
    %v607 = vadd.f32 %v576, %v592
    %v608 = vadd.f32 %v581, %v592
    %v609 = vadd.f32 %v584, %v592
    %v610 = vmax.f32 %v594, 0.0
    %v611 = vmax.f32 %v595, 0.0
    %v612 = vmax.f32 %v596, 0.0
    %v613 = vmax.f32 %v597, 0.0
    %v614 = vmax.f32 %v598, 0.0
    %v615 = vmax.f32 %v599, 0.0
    %v616 = vmax.f32 %v600, 0.0
    %v617 = vmax.f32 %v601, 0.0
    %v618 = vmax.f32 %v602, 0.0
    %v619 = vmax.f32 %v603, 0.0
    %v620 = vmax.f32 %v604, 0.0
    %v621 = vmax.f32 %v605, 0.0
    %v622 = vmax.f32 %v606, 0.0
    %v623 = vmax.f32 %v607, 0.0
    %v624 = vmax.f32 %v608, 0.0
    %v625 = vmax.f32 %v609, 0.0
    %v626 = vpack.c.bf16 %v611, %v610
    %v627 = vpack.c.bf16 %v613, %v612
    %v628 = vpack.c.bf16 %v615, %v614
    %v629 = vpack.c.bf16 %v617, %v616
    %v630 = vpack.c.bf16 %v619, %v618
    %v631 = vpack.c.bf16 %v621, %v620
    %v632 = vpack.c.bf16 %v623, %v622
    %v633 = vpack.c.bf16 %v625, %v624
    %v634 = vld [vmem:[%s8] sm:$0xf]
    %v635 = vld [vmem:[%s8 + $0x4] sm:$0xf]
    %v636 = vld [vmem:[%s8 + $0x8] sm:$0xf]
    %v637 = vld [vmem:[%s8 + $0xc] sm:$0xf]
    %v638 = vld [vmem:[%s8 + $0x10] sm:$0xf]
    %v639 = vld [vmem:[%s8 + $0x14] sm:$0xf]
    %v640 = vld [vmem:[%s8 + $0x18] sm:$0xf]
    %v641 = vld [vmem:[%s8 + $0x1c] sm:$0xf]
    %v642 = vld [vmem:[%s9] sm:$0x1]
    %v644 = vlaneseq
    %v645 = vshrl.u32 %v644, 7
    %v646 = vsub.s32 0, %v645
    %v647 = vrot.slane %v642, %v646
    %v657 = vunpack.c.l.b16 %v634
    %v658 = vunpack.c.l.b16 %v635
    %v659 = vunpack.c.l.b16 %v636
    %v660 = vunpack.c.l.b16 %v637
    %v661 = vunpack.c.l.b16 %v638
    %v662 = vunpack.c.l.b16 %v639
    %v663 = vunpack.c.l.b16 %v640
    %v664 = vunpack.c.l.b16 %v641
    %v665 = vpack.c.b16 %v658, %v657
    %v666 = vpack.c.b16 %v660, %v659
    %v667 = vpack.c.b16 %v662, %v661
    %v668 = vpack.c.b16 %v664, %v663
    %v674 = vsel %vm280, %v626, 0
    %v677 = vsel %vm280, %v627, 0
    %v680 = vsel %vm280, %v628, 0
    %v683 = vsel %vm280, %v629, 0
    %v686 = vsel %vm280, %v630, 0
    %v689 = vsel %vm280, %v631, 0
    %v692 = vsel %vm280, %v632, 0
    %v695 = vsel %vm280, %v633, 0
    %697 = vmatprep.subr.bf16.mxu0 0
    %698 = vmatpush1.bf16.msra.mxu0 %v665
    %699 = vmatprep.subr.bf16.mxu0 0
    %700 = vmatpush1.bf16.msra.mxu0 %v666
    %701 = vmatprep.subr.bf16.mxu0 0
    %702 = vmatpush1.bf16.msra.mxu0 %v667
    %703 = vmatprep.subr.bf16.mxu0 0
    %704 = vmatpush1.bf16.msra.mxu0 %v668
    %705 = vmatprep.subr.bf16.mxu0 0
    %706 = vmatpush1.bf16.msra.mxu0 0
    %707 = vmatprep.subr.bf16.mxu0 0
    %708 = vmatpush1.bf16.msra.mxu0 0
    %709 = vmatprep.subr.bf16.mxu0 0
    %710 = vmatpush1.bf16.msra.mxu0 0
    %711 = vmatprep.subr.bf16.mxu0 0
    %712 = vmatpush1.bf16.msra.mxu0 0
    %713 = vmatprep.subr.bf16.mxu0 0
    %714 = vmatpush1.bf16.msra.mxu0 0
    %715 = vmatprep.subr.bf16.mxu0 0
    %716 = vmatpush1.bf16.msra.mxu0 0
    %717 = vmatprep.subr.bf16.mxu0 0
    %718 = vmatpush1.bf16.msra.mxu0 0
    %719 = vmatprep.subr.bf16.mxu0 0
    %720 = vmatpush1.bf16.msra.mxu0 0
    %721 = vmatprep.subr.bf16.mxu0 0
    %722 = vmatpush1.bf16.msra.mxu0 0
    %723 = vmatprep.subr.bf16.mxu0 0
    %724 = vmatpush1.bf16.msra.mxu0 0
    %725 = vmatprep.subr.bf16.mxu0 0
    %726 = vmatpush1.bf16.msra.mxu0 0
    %727 = vmatprep.subr.bf16.mxu0 0
    %728 = vmatpush1.bf16.msra.mxu0 0
    %729 = vmatprep.mubr.bf16.mxu0 0
    %730 = vmatmul.mubr.bf16.gmra.mrb[0].mxu0 %v674
    %v731 = vpop.f32.mrb[0].mxu0
    %v732 = vadd.f32 %v647, %v731
    %v733 = vpop.f32.mrb[0].mxu0
    %v734 = vpop.f32.mrb[0].mxu0
    %v735 = vadd.f32 %v647, %v734
    %v736 = vpop.f32.mrb[0].mxu0
    %737 = vmatprep.mubr.bf16.mxu0 0
    %738 = vmatmul.mubr.bf16.gmra.mrb[0].mxu0 %v677
    %v739 = vpop.f32.mrb[0].mxu0
    %v740 = vadd.f32 %v647, %v739
    %v741 = vpop.f32.mrb[0].mxu0
    %v742 = vpop.f32.mrb[0].mxu0
    %v743 = vadd.f32 %v647, %v742
    %v744 = vpop.f32.mrb[0].mxu0
    %745 = vmatprep.mubr.bf16.mxu0 0
    %746 = vmatmul.mubr.bf16.gmra.mrb[0].mxu0 %v680
    %v747 = vpop.f32.mrb[0].mxu0
    %v748 = vadd.f32 %v647, %v747
    %v749 = vpop.f32.mrb[0].mxu0
    %v750 = vpop.f32.mrb[0].mxu0
    %v751 = vadd.f32 %v647, %v750
    %v752 = vpop.f32.mrb[0].mxu0
    %753 = vmatprep.mubr.bf16.mxu0 0
    %754 = vmatmul.mubr.bf16.gmra.mrb[0].mxu0 %v683
    %v755 = vpop.f32.mrb[0].mxu0
    %v756 = vadd.f32 %v647, %v755
    %v757 = vpop.f32.mrb[0].mxu0
    %v758 = vpop.f32.mrb[0].mxu0
    %v759 = vadd.f32 %v647, %v758
    %v760 = vpop.f32.mrb[0].mxu0
    %761 = vmatprep.mubr.bf16.mxu0 0
    %762 = vmatmul.mubr.bf16.gmra.mrb[0].mxu0 %v686
    %v763 = vpop.f32.mrb[0].mxu0
    %v764 = vadd.f32 %v647, %v763
    %v765 = vpop.f32.mrb[0].mxu0
    %v766 = vpop.f32.mrb[0].mxu0
    %v767 = vadd.f32 %v647, %v766
    %v768 = vpop.f32.mrb[0].mxu0
    %769 = vmatprep.mubr.bf16.mxu0 0
    %770 = vmatmul.mubr.bf16.gmra.mrb[0].mxu0 %v689
    %v771 = vpop.f32.mrb[0].mxu0
    %v772 = vadd.f32 %v647, %v771
    %v773 = vpop.f32.mrb[0].mxu0
    %v774 = vpop.f32.mrb[0].mxu0
    %v775 = vadd.f32 %v647, %v774
    %v776 = vpop.f32.mrb[0].mxu0
    %777 = vmatprep.mubr.bf16.mxu0 0
    %778 = vmatmul.mubr.bf16.gmra.mrb[0].mxu0 %v692
    %v779 = vpop.f32.mrb[0].mxu0
    %v780 = vadd.f32 %v647, %v779
    %v781 = vpop.f32.mrb[0].mxu0
    %v782 = vpop.f32.mrb[0].mxu0
    %v783 = vadd.f32 %v647, %v782
    %v784 = vpop.f32.mrb[0].mxu0
    %785 = vmatprep.mubr.bf16.mxu0 0
    %786 = vmatmul.mubr.bf16.gmra.mrb[0].mxu0 %v695
    %v787 = vpop.f32.mrb[0].mxu0
    %v788 = vadd.f32 %v647, %v787
    %v789 = vpop.f32.mrb[0].mxu0
    %v790 = vpop.f32.mrb[0].mxu0
    %v791 = vadd.f32 %v647, %v790
    %v792 = vpop.f32.mrb[0].mxu0
    %793 = vdwg.mxu0
    %v794 = vmax.f32 %v732, 0.0
    %v795 = vmax.f32 %v735, 0.0
    %v796 = vmax.f32 %v740, 0.0
    %v797 = vmax.f32 %v743, 0.0
    %v798 = vmax.f32 %v748, 0.0
    %v799 = vmax.f32 %v751, 0.0
    %v800 = vmax.f32 %v756, 0.0
    %v801 = vmax.f32 %v759, 0.0
    %v802 = vmax.f32 %v764, 0.0
    %v803 = vmax.f32 %v767, 0.0
    %v804 = vmax.f32 %v772, 0.0
    %v805 = vmax.f32 %v775, 0.0
    %v806 = vmax.f32 %v780, 0.0
    %v807 = vmax.f32 %v783, 0.0
    %v808 = vmax.f32 %v788, 0.0
    %v809 = vmax.f32 %v791, 0.0
    %v810 = vpack.c.bf16 %v795, %v794
    %v811 = vpack.c.bf16 %v797, %v796
    %v812 = vpack.c.bf16 %v799, %v798
    %v813 = vpack.c.bf16 %v801, %v800
    %v814 = vpack.c.bf16 %v803, %v802
    %v815 = vpack.c.bf16 %v805, %v804
    %v816 = vpack.c.bf16 %v807, %v806
    %v817 = vpack.c.bf16 %v809, %v808
    %v818 = vld [vmem:[%s10] sm:$0xf]
    %v819 = vld [vmem:[%s10 + $0x4] sm:$0xf]
    %v820 = vld [vmem:[%s10 + $0x8] sm:$0xf]
    %v821 = vld [vmem:[%s10 + $0xc] sm:$0xf]
    %v822 = vld [vmem:[%s11] sm:$0x1]
    %v824 = vlaneseq
    %v825 = vshrl.u32 %v824, 7
    %v826 = vsub.s32 0, %v825
    %v827 = vrot.slane %v822, %v826
    %v833 = vunpack.c.l.b16 %v818
    %v834 = vunpack.c.l.b16 %v819
    %v835 = vunpack.c.l.b16 %v820
    %v836 = vunpack.c.l.b16 %v821
    %v837 = vpack.c.b16 %v834, %v833
    %v838 = vpack.c.b16 %v836, %v835
    %vm841 = vcmask 261120
    %v843 = vsel %vm841, %v810, 0
    %v846 = vsel %vm841, %v811, 0
    %v849 = vsel %vm841, %v812, 0
    %v852 = vsel %vm841, %v813, 0
    %v855 = vsel %vm841, %v814, 0
    %v858 = vsel %vm841, %v815, 0
    %v861 = vsel %vm841, %v816, 0
    %v864 = vsel %vm841, %v817, 0
    %866 = vmatprep.subr.bf16.mxu0 0
    %867 = vmatpush1.bf16.msra.mxu0 %v837
    %868 = vmatprep.subr.bf16.mxu0 0
    %869 = vmatpush1.bf16.msra.mxu0 %v838
    %870 = vmatprep.subr.bf16.mxu0 0
    %871 = vmatpush1.bf16.msra.mxu0 0
    %872 = vmatprep.subr.bf16.mxu0 0
    %873 = vmatpush1.bf16.msra.mxu0 0
    %874 = vmatprep.subr.bf16.mxu0 0
    %875 = vmatpush1.bf16.msra.mxu0 0
    %876 = vmatprep.subr.bf16.mxu0 0
    %877 = vmatpush1.bf16.msra.mxu0 0
    %878 = vmatprep.subr.bf16.mxu0 0
    %879 = vmatpush1.bf16.msra.mxu0 0
    %880 = vmatprep.subr.bf16.mxu0 0
    %881 = vmatpush1.bf16.msra.mxu0 0
    %882 = vmatprep.subr.bf16.mxu0 0
    %883 = vmatpush1.bf16.msra.mxu0 0
    %884 = vmatprep.subr.bf16.mxu0 0
    %885 = vmatpush1.bf16.msra.mxu0 0
    %886 = vmatprep.subr.bf16.mxu0 0
    %887 = vmatpush1.bf16.msra.mxu0 0
    %888 = vmatprep.subr.bf16.mxu0 0
    %889 = vmatpush1.bf16.msra.mxu0 0
    %890 = vmatprep.subr.bf16.mxu0 0
    %891 = vmatpush1.bf16.msra.mxu0 0
    %892 = vmatprep.subr.bf16.mxu0 0
    %893 = vmatpush1.bf16.msra.mxu0 0
    %894 = vmatprep.subr.bf16.mxu0 0
    %895 = vmatpush1.bf16.msra.mxu0 0
    %896 = vmatprep.subr.bf16.mxu0 0
    %897 = vmatpush1.bf16.msra.mxu0 0
    %898 = vmatprep.mubr.bf16.mxu0 0
    %899 = vmatmul.mubr.bf16.gmra.mrb[0].mxu0 %v843
    %v900 = vpop.f32.mrb[0].mxu0
    %v901 = vadd.f32 %v827, %v900
    %v902 = vpop.f32.mrb[0].mxu0
    %v903 = vpop.f32.mrb[0].mxu0
    %v904 = vadd.f32 %v827, %v903
    %v905 = vpop.f32.mrb[0].mxu0
    %906 = vmatprep.mubr.bf16.mxu0 0
    %907 = vmatmul.mubr.bf16.gmra.mrb[0].mxu0 %v846
    %v908 = vpop.f32.mrb[0].mxu0
    %v909 = vadd.f32 %v827, %v908
    %v910 = vpop.f32.mrb[0].mxu0
    %v911 = vpop.f32.mrb[0].mxu0
    %v912 = vadd.f32 %v827, %v911
    %v913 = vpop.f32.mrb[0].mxu0
    %914 = vmatprep.mubr.bf16.mxu0 0
    %915 = vmatmul.mubr.bf16.gmra.mrb[0].mxu0 %v849
    %v916 = vpop.f32.mrb[0].mxu0
    %v917 = vadd.f32 %v827, %v916
    %v918 = vpop.f32.mrb[0].mxu0
    %v919 = vpop.f32.mrb[0].mxu0
    %v920 = vadd.f32 %v827, %v919
    %v921 = vpop.f32.mrb[0].mxu0
    %922 = vmatprep.mubr.bf16.mxu0 0
    %923 = vmatmul.mubr.bf16.gmra.mrb[0].mxu0 %v852
    %v924 = vpop.f32.mrb[0].mxu0
    %v925 = vadd.f32 %v827, %v924
    %v926 = vpop.f32.mrb[0].mxu0
    %v927 = vpop.f32.mrb[0].mxu0
    %v928 = vadd.f32 %v827, %v927
    %v929 = vpop.f32.mrb[0].mxu0
    %930 = vmatprep.mubr.bf16.mxu0 0
    %931 = vmatmul.mubr.bf16.gmra.mrb[0].mxu0 %v855
    %v932 = vpop.f32.mrb[0].mxu0
    %v933 = vadd.f32 %v827, %v932
    %v934 = vpop.f32.mrb[0].mxu0
    %v935 = vpop.f32.mrb[0].mxu0
    %v936 = vadd.f32 %v827, %v935
    %v937 = vpop.f32.mrb[0].mxu0
    %938 = vmatprep.mubr.bf16.mxu0 0
    %939 = vmatmul.mubr.bf16.gmra.mrb[0].mxu0 %v858
    %v940 = vpop.f32.mrb[0].mxu0
    %v941 = vadd.f32 %v827, %v940
    %v942 = vpop.f32.mrb[0].mxu0
    %v943 = vpop.f32.mrb[0].mxu0
    %v944 = vadd.f32 %v827, %v943
    %v945 = vpop.f32.mrb[0].mxu0
    %946 = vmatprep.mubr.bf16.mxu0 0
    %947 = vmatmul.mubr.bf16.gmra.mrb[0].mxu0 %v861
    %v948 = vpop.f32.mrb[0].mxu0
    %v949 = vadd.f32 %v827, %v948
    %v950 = vpop.f32.mrb[0].mxu0
    %v951 = vpop.f32.mrb[0].mxu0
    %v952 = vadd.f32 %v827, %v951
    %v953 = vpop.f32.mrb[0].mxu0
    %954 = vmatprep.mubr.bf16.mxu0 0
    %955 = vmatmul.mubr.bf16.gmra.mrb[0].mxu0 %v864
    %v956 = vpop.f32.mrb[0].mxu0
    %v957 = vadd.f32 %v827, %v956
    %v958 = vpop.f32.mrb[0].mxu0
    %v959 = vpop.f32.mrb[0].mxu0
    %v960 = vadd.f32 %v827, %v959
    %v961 = vpop.f32.mrb[0].mxu0
    %962 = vdwg.mxu0
    %v963 = vmax.f32 %v901, 0.0
    %v964 = vmax.f32 %v904, 0.0
    %v965 = vmax.f32 %v909, 0.0
    %v966 = vmax.f32 %v912, 0.0
    %v967 = vmax.f32 %v917, 0.0
    %v968 = vmax.f32 %v920, 0.0
    %v969 = vmax.f32 %v925, 0.0
    %v970 = vmax.f32 %v928, 0.0
    %v971 = vmax.f32 %v933, 0.0
    %v972 = vmax.f32 %v936, 0.0
    %v973 = vmax.f32 %v941, 0.0
    %v974 = vmax.f32 %v944, 0.0
    %v975 = vmax.f32 %v949, 0.0
    %v976 = vmax.f32 %v952, 0.0
    %v977 = vmax.f32 %v957, 0.0
    %v978 = vmax.f32 %v960, 0.0
    %s979 = sld [smem:[#allocation2]]
    %s980 = sld [smem:[#allocation2 + $0x1]]
    %vm981 = vcmask 130048
    %v982 = vsel %vm981, %v152, 0.0
    %983 = vadd.xlane.f32.xlu0 %v982
    %v984 = vpop.xlane.xlu0 %983
    %v985 = vsel %vm981, %v153, 0.0
    %986 = vadd.xlane.f32.xlu0 %v985
    %v987 = vpop.xlane.xlu0 %986
    %v988 = vsel %vm981, %v154, 0.0
    %989 = vadd.xlane.f32.xlu0 %v988
    %v990 = vpop.xlane.xlu0 %989
    %v991 = vsel %vm981, %v155, 0.0
    %992 = vadd.xlane.f32.xlu0 %v991
    %v993 = vpop.xlane.xlu0 %992
    %v994 = vsel %vm981, %v156, 0.0
    %995 = vadd.xlane.f32.xlu0 %v994
    %v996 = vpop.xlane.xlu0 %995
    %v997 = vsel %vm981, %v157, 0.0
    %998 = vadd.xlane.f32.xlu0 %v997
    %v999 = vpop.xlane.xlu0 %998
    %v1000 = vsel %vm981, %v158, 0.0
    %1001 = vadd.xlane.f32.xlu0 %v1000
    %v1002 = vpop.xlane.xlu0 %1001
    %v1003 = vsel %vm981, %v159, 0.0
    %1004 = vadd.xlane.f32.xlu0 %v1003
    %v1005 = vpop.xlane.xlu0 %1004
    %v1006 = vsel %vm981, %v160, 0.0
    %1007 = vadd.xlane.f32.xlu0 %v1006
    %v1008 = vpop.xlane.xlu0 %1007
    %v1009 = vsel %vm981, %v161, 0.0
    %1010 = vadd.xlane.f32.xlu0 %v1009
    %v1011 = vpop.xlane.xlu0 %1010
    %v1012 = vsel %vm981, %v162, 0.0
    %1013 = vadd.xlane.f32.xlu0 %v1012
    %v1014 = vpop.xlane.xlu0 %1013
    %v1015 = vsel %vm981, %v163, 0.0
    %1016 = vadd.xlane.f32.xlu0 %v1015
    %v1017 = vpop.xlane.xlu0 %1016
    %v1018 = vsel %vm981, %v164, 0.0
    %1019 = vadd.xlane.f32.xlu0 %v1018
    %v1020 = vpop.xlane.xlu0 %1019
    %v1021 = vsel %vm981, %v165, 0.0
    %1022 = vadd.xlane.f32.xlu0 %v1021
    %v1023 = vpop.xlane.xlu0 %1022
    %v1024 = vsel %vm981, %v166, 0.0
    %1025 = vadd.xlane.f32.xlu0 %v1024
    %v1026 = vpop.xlane.xlu0 %1025
    %v1027 = vsel %vm981, %v167, 0.0
    %1028 = vadd.xlane.f32.xlu0 %v1027
    %v1029 = vpop.xlane.xlu0 %1028
    %v1030 = vld [vmem:[%s13] sm:$0x1]
    %v1032 = vlaneseq
    %v1033 = vshrl.u32 %v1032, 7
    %v1034 = vsub.s32 0, %v1033
    %v1035 = vrot.slane %v1030, %v1034
    %v1037 = vmul.f32 %v963, %v1035
    %v1038 = vmul.f32 %v964, %v1035
    %v1039 = vmul.f32 %v965, %v1035
    %v1040 = vmul.f32 %v966, %v1035
    %v1041 = vmul.f32 %v967, %v1035
    %v1042 = vmul.f32 %v968, %v1035
    %v1043 = vmul.f32 %v969, %v1035
    %v1044 = vmul.f32 %v970, %v1035
    %v1045 = vmul.f32 %v971, %v1035
    %v1046 = vmul.f32 %v972, %v1035
    %v1047 = vmul.f32 %v973, %v1035
    %v1048 = vmul.f32 %v974, %v1035
    %v1049 = vmul.f32 %v975, %v1035
    %v1050 = vmul.f32 %v976, %v1035
    %v1051 = vmul.f32 %v977, %v1035
    %v1052 = vmul.f32 %v978, %v1035
    %v1053 = vsel %vm981, %v1037, 0.0
    %1054 = vadd.xlane.f32.xlu0 %v1053
    %v1055 = vpop.xlane.xlu0 %1054
    %v1056 = vsel %vm981, %v1038, 0.0
    %1057 = vadd.xlane.f32.xlu0 %v1056
    %v1058 = vpop.xlane.xlu0 %1057
    %v1059 = vsel %vm981, %v1039, 0.0
    %1060 = vadd.xlane.f32.xlu0 %v1059
    %v1061 = vpop.xlane.xlu0 %1060
    %v1062 = vsel %vm981, %v1040, 0.0
    %1063 = vadd.xlane.f32.xlu0 %v1062
    %v1064 = vpop.xlane.xlu0 %1063
    %v1065 = vsel %vm981, %v1041, 0.0
    %1066 = vadd.xlane.f32.xlu0 %v1065
    %v1067 = vpop.xlane.xlu0 %1066
    %v1068 = vsel %vm981, %v1042, 0.0
    %1069 = vadd.xlane.f32.xlu0 %v1068
    %v1070 = vpop.xlane.xlu0 %1069
    %v1071 = vsel %vm981, %v1043, 0.0
    %1072 = vadd.xlane.f32.xlu0 %v1071
    %v1073 = vpop.xlane.xlu0 %1072
    %v1074 = vsel %vm981, %v1044, 0.0
    %1075 = vadd.xlane.f32.xlu0 %v1074
    %v1076 = vpop.xlane.xlu0 %1075
    %v1077 = vsel %vm981, %v1045, 0.0
    %1078 = vadd.xlane.f32.xlu0 %v1077
    %v1079 = vpop.xlane.xlu0 %1078
    %v1080 = vsel %vm981, %v1046, 0.0
    %1081 = vadd.xlane.f32.xlu0 %v1080
    %v1082 = vpop.xlane.xlu0 %1081
    %v1083 = vsel %vm981, %v1047, 0.0
    %1084 = vadd.xlane.f32.xlu0 %v1083
    %v1085 = vpop.xlane.xlu0 %1084
    %v1086 = vsel %vm981, %v1048, 0.0
    %1087 = vadd.xlane.f32.xlu0 %v1086
    %v1088 = vpop.xlane.xlu0 %1087
    %v1089 = vsel %vm981, %v1049, 0.0
    %1090 = vadd.xlane.f32.xlu0 %v1089
    %v1091 = vpop.xlane.xlu0 %1090
    %v1092 = vsel %vm981, %v1050, 0.0
    %1093 = vadd.xlane.f32.xlu0 %v1092
    %v1094 = vpop.xlane.xlu0 %1093
    %v1095 = vsel %vm981, %v1051, 0.0
    %1096 = vadd.xlane.f32.xlu0 %v1095
    %v1097 = vpop.xlane.xlu0 %1096
    %v1098 = vsel %vm981, %v1052, 0.0
    %1099 = vadd.xlane.f32.xlu0 %v1098
    %v1100 = vpop.xlane.xlu0 %1099
    %v1101 = vadd.f32 %v984, %v1055
    %v1102 = vadd.f32 %v987, %v1058
    %v1103 = vadd.f32 %v990, %v1061
    %v1104 = vadd.f32 %v993, %v1064
    %v1105 = vadd.f32 %v996, %v1067
    %v1106 = vadd.f32 %v999, %v1070
    %v1107 = vadd.f32 %v1002, %v1073
    %v1108 = vadd.f32 %v1005, %v1076
    %v1109 = vadd.f32 %v1008, %v1079
    %v1110 = vadd.f32 %v1011, %v1082
    %v1111 = vadd.f32 %v1014, %v1085
    %v1112 = vadd.f32 %v1017, %v1088
    %v1113 = vadd.f32 %v1020, %v1091
    %v1114 = vadd.f32 %v1023, %v1094
    %v1115 = vadd.f32 %v1026, %v1097
    %v1116 = vadd.f32 %v1029, %v1100
    %v1117 = vstv %s980
    %v1118 = vadd.f32 %v1101, %v1117
    %v1119 = vadd.f32 %v1102, %v1117
    %v1120 = vadd.f32 %v1103, %v1117
    %v1121 = vadd.f32 %v1104, %v1117
    %v1122 = vadd.f32 %v1105, %v1117
    %v1123 = vadd.f32 %v1106, %v1117
    %v1124 = vadd.f32 %v1107, %v1117
    %v1125 = vadd.f32 %v1108, %v1117
    %v1126 = vadd.f32 %v1109, %v1117
    %v1127 = vadd.f32 %v1110, %v1117
    %v1128 = vadd.f32 %v1111, %v1117
    %v1129 = vadd.f32 %v1112, %v1117
    %v1130 = vadd.f32 %v1113, %v1117
    %v1131 = vadd.f32 %v1114, %v1117
    %v1132 = vadd.f32 %v1115, %v1117
    %v1133 = vadd.f32 %v1116, %v1117
    %v1134 = vld [vmem:[%s4] sm:$0x1]
    %v1135 = vstv %s979
    %v1136 = vmul.f32 %v1134, %v1135
    %v1138 = vlaneseq
    %v1139 = vshrl.u32 %v1138, 7
    %v1140 = vsub.s32 0, %v1139
    %v1141 = vrot.slane %v1136, %v1140
    %1143 = vbcast.lane.b32.xlu0 %v1141, 256
    %v1144 = vpop.permute.xlu0 %1143
    %s1146 = sor.u32 256, 8
    %1147 = vbcast.lane.b32.xlu0 %v1141, %s1146
    %v1148 = vpop.permute.xlu0 %1147
    %s1150 = sor.u32 256, 16
    %1151 = vbcast.lane.b32.xlu0 %v1141, %s1150
    %v1152 = vpop.permute.xlu0 %1151
    %s1154 = sor.u32 256, 24
    %1155 = vbcast.lane.b32.xlu0 %v1141, %s1154
    %v1156 = vpop.permute.xlu0 %1155
    %s1158 = sor.u32 256, 32
    %1159 = vbcast.lane.b32.xlu0 %v1141, %s1158
    %v1160 = vpop.permute.xlu0 %1159
    %s1162 = sor.u32 256, 40
    %1163 = vbcast.lane.b32.xlu0 %v1141, %s1162
    %v1164 = vpop.permute.xlu0 %1163
    %s1166 = sor.u32 256, 48
    %1167 = vbcast.lane.b32.xlu0 %v1141, %s1166
    %v1168 = vpop.permute.xlu0 %1167
    %s1170 = sor.u32 256, 56
    %1171 = vbcast.lane.b32.xlu0 %v1141, %s1170
    %v1172 = vpop.permute.xlu0 %1171
    %s1174 = sor.u32 256, 64
    %1175 = vbcast.lane.b32.xlu0 %v1141, %s1174
    %v1176 = vpop.permute.xlu0 %1175
    %s1178 = sor.u32 256, 72
    %1179 = vbcast.lane.b32.xlu0 %v1141, %s1178
    %v1180 = vpop.permute.xlu0 %1179
    %s1182 = sor.u32 256, 80
    %1183 = vbcast.lane.b32.xlu0 %v1141, %s1182
    %v1184 = vpop.permute.xlu0 %1183
    %s1186 = sor.u32 256, 88
    %1187 = vbcast.lane.b32.xlu0 %v1141, %s1186
    %v1188 = vpop.permute.xlu0 %1187
    %s1190 = sor.u32 256, 96
    %1191 = vbcast.lane.b32.xlu0 %v1141, %s1190
    %v1192 = vpop.permute.xlu0 %1191
    %s1194 = sor.u32 256, 104
    %1195 = vbcast.lane.b32.xlu0 %v1141, %s1194
    %v1196 = vpop.permute.xlu0 %1195
    %s1198 = sor.u32 256, 112
    %1199 = vbcast.lane.b32.xlu0 %v1141, %s1198
    %v1200 = vpop.permute.xlu0 %1199
    %s1202 = sor.u32 256, 120
    %1203 = vbcast.lane.b32.xlu0 %v1141, %s1202
    %v1204 = vpop.permute.xlu0 %1203
    %v1221 = vadd.f32 %v1118, %v1144
    %v1222 = vadd.f32 %v1119, %v1148
    %v1223 = vadd.f32 %v1120, %v1152
    %v1224 = vadd.f32 %v1121, %v1156
    %v1225 = vadd.f32 %v1122, %v1160
    %v1226 = vadd.f32 %v1123, %v1164
    %v1227 = vadd.f32 %v1124, %v1168
    %v1228 = vadd.f32 %v1125, %v1172
    %v1229 = vadd.f32 %v1126, %v1176
    %v1230 = vadd.f32 %v1127, %v1180
    %v1231 = vadd.f32 %v1128, %v1184
    %v1232 = vadd.f32 %v1129, %v1188
    %v1233 = vadd.f32 %v1130, %v1192
    %v1234 = vadd.f32 %v1131, %v1196
    %v1235 = vadd.f32 %v1132, %v1200
    %v1236 = vadd.f32 %v1133, %v1204
    %1253 = vset.pattern.permute.xlu0 0
    %1254 = vperm.xlu0 %1253, %v1221
    %v1255 = vpop.permute.xlu0 %1254
    %1256 = vset.pattern.permute.xlu0 0
    %1257 = vperm.xlu0 %1256, %v1222
    %v1258 = vpop.permute.xlu0 %1257
    %1259 = vset.pattern.permute.xlu0 0
    %1260 = vperm.xlu0 %1259, %v1223
    %v1261 = vpop.permute.xlu0 %1260
    %1262 = vset.pattern.permute.xlu0 0
    %1263 = vperm.xlu0 %1262, %v1224
    %v1264 = vpop.permute.xlu0 %1263
    %1265 = vset.pattern.permute.xlu0 0
    %1266 = vperm.xlu0 %1265, %v1225
    %v1267 = vpop.permute.xlu0 %1266
    %1268 = vset.pattern.permute.xlu0 0
    %1269 = vperm.xlu0 %1268, %v1226
    %v1270 = vpop.permute.xlu0 %1269
    %1271 = vset.pattern.permute.xlu0 0
    %1272 = vperm.xlu0 %1271, %v1227
    %v1273 = vpop.permute.xlu0 %1272
    %1274 = vset.pattern.permute.xlu0 0
    %1275 = vperm.xlu0 %1274, %v1228
    %v1276 = vpop.permute.xlu0 %1275
    %1277 = vset.pattern.permute.xlu0 0
    %1278 = vperm.xlu0 %1277, %v1229
    %v1279 = vpop.permute.xlu0 %1278
    %1280 = vset.pattern.permute.xlu0 0
    %1281 = vperm.xlu0 %1280, %v1230
    %v1282 = vpop.permute.xlu0 %1281
    %1283 = vset.pattern.permute.xlu0 0
    %1284 = vperm.xlu0 %1283, %v1231
    %v1285 = vpop.permute.xlu0 %1284
    %1286 = vset.pattern.permute.xlu0 0
    %1287 = vperm.xlu0 %1286, %v1232
    %v1288 = vpop.permute.xlu0 %1287
    %1289 = vset.pattern.permute.xlu0 0
    %1290 = vperm.xlu0 %1289, %v1233
    %v1291 = vpop.permute.xlu0 %1290
    %1292 = vset.pattern.permute.xlu0 0
    %1293 = vperm.xlu0 %1292, %v1234
    %v1294 = vpop.permute.xlu0 %1293
    %1295 = vset.pattern.permute.xlu0 0
    %1296 = vperm.xlu0 %1295, %v1235
    %v1297 = vpop.permute.xlu0 %1296
    %1298 = vset.pattern.permute.xlu0 0
    %1299 = vperm.xlu0 %1298, %v1236
    %v1300 = vpop.permute.xlu0 %1299
    %v1301 = vlaneseq
    %v1302 = vand.u32 %v1301, 127
    %v1303 = vlaneseq
    %v1304 = vshrl.u32 %v1303, 7
    %v1305 = vsub.s32 %v1302, %v1304
    %v1306 = vrot.slane %v1255, %v1305
    %v1307 = vadd.s32 %v1302, 4294967288
    %v1308 = vlaneseq
    %v1309 = vshrl.u32 %v1308, 7
    %v1310 = vsub.s32 %v1307, %v1309
    %v1311 = vrot.slane %v1258, %v1310
    %vm1312 = vcmask 130112
    %v1313 = vsel %vm1312, %v1311, %v1306
    %v1314 = vadd.s32 %v1302, 4294967280
    %v1315 = vlaneseq
    %v1316 = vshrl.u32 %v1315, 7
    %v1317 = vsub.s32 %v1314, %v1316
    %v1318 = vrot.slane %v1261, %v1317
    %vm1319 = vcmask 195712
    %v1320 = vsel %vm1319, %v1318, %v1313
    %v1321 = vadd.s32 %v1302, 4294967272
    %v1322 = vlaneseq
    %v1323 = vshrl.u32 %v1322, 7
    %v1324 = vsub.s32 %v1321, %v1323
    %v1325 = vrot.slane %v1264, %v1324
    %vm1326 = vcmask 261312
    %v1327 = vsel %vm1326, %v1325, %v1320
    %v1328 = vadd.s32 %v1302, 4294967264
    %v1329 = vlaneseq
    %v1330 = vshrl.u32 %v1329, 7
    %v1331 = vsub.s32 %v1328, %v1330
    %v1332 = vrot.slane %v1267, %v1331
    %vm1333 = vcmask 326912
    %v1334 = vsel %vm1333, %v1332, %v1327
    %v1335 = vadd.s32 %v1302, 4294967256
    %v1336 = vlaneseq
    %v1337 = vshrl.u32 %v1336, 7
    %v1338 = vsub.s32 %v1335, %v1337
    %v1339 = vrot.slane %v1270, %v1338
    %vm1340 = vcmask 392512
    %v1341 = vsel %vm1340, %v1339, %v1334
    %v1342 = vadd.s32 %v1302, 4294967248
    %v1343 = vlaneseq
    %v1344 = vshrl.u32 %v1343, 7
    %v1345 = vsub.s32 %v1342, %v1344
    %v1346 = vrot.slane %v1273, %v1345
    %vm1347 = vcmask 458112
    %v1348 = vsel %vm1347, %v1346, %v1341
    %v1349 = vadd.s32 %v1302, 4294967240
    %v1350 = vlaneseq
    %v1351 = vshrl.u32 %v1350, 7
    %v1352 = vsub.s32 %v1349, %v1351
    %v1353 = vrot.slane %v1276, %v1352
    %vm1354 = vcmask 523712
    %v1355 = vsel %vm1354, %v1353, %v1348
    %v1356 = vadd.s32 %v1302, 4294967232
    %v1357 = vlaneseq
    %v1358 = vshrl.u32 %v1357, 7
    %v1359 = vsub.s32 %v1356, %v1358
    %v1360 = vrot.slane %v1279, %v1359
    %vm1361 = vcmask 589312
    %v1362 = vsel %vm1361, %v1360, %v1355
    %v1363 = vadd.s32 %v1302, 4294967224
    %v1364 = vlaneseq
    %v1365 = vshrl.u32 %v1364, 7
    %v1366 = vsub.s32 %v1363, %v1365
    %v1367 = vrot.slane %v1282, %v1366
    %vm1368 = vcmask 654912
    %v1369 = vsel %vm1368, %v1367, %v1362
    %v1370 = vadd.s32 %v1302, 4294967216
    %v1371 = vlaneseq
    %v1372 = vshrl.u32 %v1371, 7
    %v1373 = vsub.s32 %v1370, %v1372
    %v1374 = vrot.slane %v1285, %v1373
    %vm1375 = vcmask 720512
    %v1376 = vsel %vm1375, %v1374, %v1369
    %v1377 = vadd.s32 %v1302, 4294967208
    %v1378 = vlaneseq
    %v1379 = vshrl.u32 %v1378, 7
    %v1380 = vsub.s32 %v1377, %v1379
    %v1381 = vrot.slane %v1288, %v1380
    %vm1382 = vcmask 786112
    %v1383 = vsel %vm1382, %v1381, %v1376
    %v1384 = vadd.s32 %v1302, 4294967200
    %v1385 = vlaneseq
    %v1386 = vshrl.u32 %v1385, 7
    %v1387 = vsub.s32 %v1384, %v1386
    %v1388 = vrot.slane %v1291, %v1387
    %vm1389 = vcmask 851712
    %v1390 = vsel %vm1389, %v1388, %v1383
    %v1391 = vadd.s32 %v1302, 4294967192
    %v1392 = vlaneseq
    %v1393 = vshrl.u32 %v1392, 7
    %v1394 = vsub.s32 %v1391, %v1393
    %v1395 = vrot.slane %v1294, %v1394
    %vm1396 = vcmask 917312
    %v1397 = vsel %vm1396, %v1395, %v1390
    %v1398 = vadd.s32 %v1302, 4294967184
    %v1399 = vlaneseq
    %v1400 = vshrl.u32 %v1399, 7
    %v1401 = vsub.s32 %v1398, %v1400
    %v1402 = vrot.slane %v1297, %v1401
    %vm1403 = vcmask 982912
    %v1404 = vsel %vm1403, %v1402, %v1397
    %v1405 = vadd.s32 %v1302, 4294967176
    %v1406 = vlaneseq
    %v1407 = vshrl.u32 %v1406, 7
    %v1408 = vsub.s32 %v1405, %v1407
    %v1409 = vrot.slane %v1300, %v1408
    %vm1410 = vcmask 1048512
    %v1411 = vsel %vm1410, %v1409, %v1404
    %1413 = vst [vmem:[#allocation5] sm:$0x1] %v1411
    // Predicated region
    $region66: #{tpu_custom_call.1} parent=1 // pred_check
      _
    $region67: #{tpu_custom_call.1} parent=1 // pred_check_branch
      %1415 = sbr.rel (0) target = $region69
    $region68: #{tpu_custom_call.1} parent=1 // pred_region
      %s1417 = ssub.s32 16, 16
      %1418 = vsyncadd [#allocation3], %s1417
      %s1420 = sshll.u32 [#allocation5], 4
      %s1421 = int_to_ptr.vmem [resolvable:$true] %s1420
      %1423 = dma.vmem_to_hbm [thread:$0]  %s1421, 16, %s15, [#allocation3]
    $region69: #{tpu_custom_call.1} parent=1 // pred_fallthru
      _
    // Predicated region
    $region70: #{tpu_custom_call.1} parent=1 // pred_check
      _
    $region71: #{tpu_custom_call.1} parent=1 // pred_check_branch
      %1425 = sbr.rel (0) target = $region73
    $region72: #{tpu_custom_call.1} parent=1 // pred_region
      %1426 = dma.done [#allocation3], 16
    $region73: #{tpu_custom_call.1} parent=1 // pred_fallthru
      _
    %1427 = vsyncpa [#allocation3], 1
    %1428 = vsyncpa [#allocation4], 1

// kernel: tpu_custom_call.1
$region0: #{tpu_custom_call.1}
  #allocation0 [shape = 'u32[]', space=smem, size = 0x4, offset = 0x4, fixed_abs, tag = 'smem constant byte address 0x4 - core index']
  #allocation1 [shape = 'u32[144,128]{1,0:T(1,128)}', space=vmem, size = 0x12000, scoped, tag = 'internal scratch']
  %s0 = inlined_call_operand.vmem [shape: bf16[128,16], index: 0, kind: input, shape index: {}]
  %s1 = inlined_call_operand.vmem [shape: bf16[128,16], index: 1, kind: input, shape index: {}]
  %s2 = inlined_call_operand.vmem [shape: bf16[128,64], index: 2, kind: input, shape index: {}]
  %s3 = inlined_call_operand.vmem [shape: bf16[128,64], index: 3, kind: input, shape index: {}]
  %s4 = inlined_call_operand.vmem [shape: f32[1,128], index: 4, kind: input, shape index: {}]
  %s5 = inlined_call_operand.vmem [shape: bf16[64,64], index: 5, kind: input, shape index: {}]
  %s6 = inlined_call_operand.vmem [shape: bf16[64,64], index: 6, kind: input, shape index: {}]
  %s7 = inlined_call_operand.vmem [shape: f32[1,64], index: 7, kind: input, shape index: {}]
  %s8 = inlined_call_operand.vmem [shape: bf16[64,32], index: 8, kind: input, shape index: {}]
  %s9 = inlined_call_operand.vmem [shape: f32[1,32], index: 9, kind: input, shape index: {}]
  %s10 = inlined_call_operand.vmem [shape: bf16[32,16], index: 10, kind: input, shape index: {}]
  %s11 = inlined_call_operand.vmem [shape: f32[1,16], index: 11, kind: input, shape index: {}]
  %s12 = inlined_call_operand.vmem [shape: f32[1,16], index: 12, kind: input, shape index: {}]
  %s13 = inlined_call_operand.vmem [shape: f32[1,16], index: 13, kind: input, shape index: {}]
  %s14 = inlined_call_operand.vmem [shape: f32[2], index: 14, kind: input, shape index: {}]
  %s15 = inlined_call_operand.hbm [shape: f32[1,128], index: 15, kind: output, shape index: {}]
  %s16 = sld [smem:[#allocation0]]
  $region74: #{tpu_custom_call.1} parent=0
    _
  %s18 = ssub.s32 1, %s16
  %s19 = scalar_select 0, %s18, %s16
  $region1: #{tpu_custom_call.1} parent=0
    #allocation2 [shape = 'u8[512]{0}', space=smem, size = 0x200, scoped, tag = 'input window, operand 14, single buffered']
    #allocation3 [shape = 's32[1]{0}', space=sflag, size = 0x4, scoped, tag = 'scoped memory for tpu_custom_call.1']
    #allocation4 [shape = 's32[1]{0}', space=sflag, size = 0x4, scoped, tag = 'scoped memory for tpu_custom_call.1']
    #allocation5 [shape = 'u8[512]{0}', space=vmem, size = 0x400, scoped, tag = 'output window, operand 0, single buffered']
    %20 = vsyncpa [#allocation4], 0
    %21 = vsyncpa [#allocation3], 0
    // Predicated region
    $region2: #{tpu_custom_call.1} parent=1 // pred_check
      _
    $region3: #{tpu_custom_call.1} parent=1 // pred_check_branch
      %23 = sbr.rel (0) target = $region5
    $region4: #{tpu_custom_call.1} parent=1 // pred_region
      _
    $region5: #{tpu_custom_call.1} parent=1 // pred_fallthru
      _
    // Predicated region
    $region6: #{tpu_custom_call.1} parent=1 // pred_check
      _
    $region7: #{tpu_custom_call.1} parent=1 // pred_check_branch
      %25 = sbr.rel (0) target = $region9
    $region8: #{tpu_custom_call.1} parent=1 // pred_region
      _
    $region9: #{tpu_custom_call.1} parent=1 // pred_fallthru
      _
    // Predicated region
    $region10: #{tpu_custom_call.1} parent=1 // pred_check
      _
    $region11: #{tpu_custom_call.1} parent=1 // pred_check_branch
      %27 = sbr.rel (0) target = $region13
    $region12: #{tpu_custom_call.1} parent=1 // pred_region
      _
    $region13: #{tpu_custom_call.1} parent=1 // pred_fallthru
      _
    // Predicated region
    $region14: #{tpu_custom_call.1} parent=1 // pred_check
      _
    $region15: #{tpu_custom_call.1} parent=1 // pred_check_branch
      %29 = sbr.rel (0) target = $region17
    $region16: #{tpu_custom_call.1} parent=1 // pred_region
      _
    $region17: #{tpu_custom_call.1} parent=1 // pred_fallthru
      _
    // Predicated region
    $region18: #{tpu_custom_call.1} parent=1 // pred_check
      _
    $region19: #{tpu_custom_call.1} parent=1 // pred_check_branch
      %31 = sbr.rel (0) target = $region21
    $region20: #{tpu_custom_call.1} parent=1 // pred_region
      _
    $region21: #{tpu_custom_call.1} parent=1 // pred_fallthru
      _
    // Predicated region
    $region22: #{tpu_custom_call.1} parent=1 // pred_check
      _
    $region23: #{tpu_custom_call.1} parent=1 // pred_check_branch
      %33 = sbr.rel (0) target = $region25
    $region24: #{tpu_custom_call.1} parent=1 // pred_region
      _
    $region25: #{tpu_custom_call.1} parent=1 // pred_fallthru
      _
    // Predicated region
    $region26: #{tpu_custom_call.1} parent=1 // pred_check
      _
    $region27: #{tpu_custom_call.1} parent=1 // pred_check_branch
      %35 = sbr.rel (0) target = $region29
    $region28: #{tpu_custom_call.1} parent=1 // pred_region
      _
    $region29: #{tpu_custom_call.1} parent=1 // pred_fallthru
      _
    // Predicated region
    $region30: #{tpu_custom_call.1} parent=1 // pred_check
      _
    $region31: #{tpu_custom_call.1} parent=1 // pred_check_branch
      %37 = sbr.rel (0) target = $region33
    $region32: #{tpu_custom_call.1} parent=1 // pred_region
      _
    $region33: #{tpu_custom_call.1} parent=1 // pred_fallthru
      _
    // Predicated region
    $region34: #{tpu_custom_call.1} parent=1 // pred_check
      _
    $region35: #{tpu_custom_call.1} parent=1 // pred_check_branch
      %39 = sbr.rel (0) target = $region37
    $region36: #{tpu_custom_call.1} parent=1 // pred_region
      _
    $region37: #{tpu_custom_call.1} parent=1 // pred_fallthru
      _
    // Predicated region
    $region38: #{tpu_custom_call.1} parent=1 // pred_check
      _
    $region39: #{tpu_custom_call.1} parent=1 // pred_check_branch
      %41 = sbr.rel (0) target = $region41
    $region40: #{tpu_custom_call.1} parent=1 // pred_region
      _
    $region41: #{tpu_custom_call.1} parent=1 // pred_fallthru
      _
    // Predicated region
    $region42: #{tpu_custom_call.1} parent=1 // pred_check
      _
    $region43: #{tpu_custom_call.1} parent=1 // pred_check_branch
      %43 = sbr.rel (0) target = $region45
    $region44: #{tpu_custom_call.1} parent=1 // pred_region
      _
    $region45: #{tpu_custom_call.1} parent=1 // pred_fallthru
      _
    // Predicated region
    $region46: #{tpu_custom_call.1} parent=1 // pred_check
      _
    $region47: #{tpu_custom_call.1} parent=1 // pred_check_branch
      %45 = sbr.rel (0) target = $region49
    $region48: #{tpu_custom_call.1} parent=1 // pred_region
      _
    $region49: #{tpu_custom_call.1} parent=1 // pred_fallthru
      _
    // Predicated region
    $region50: #{tpu_custom_call.1} parent=1 // pred_check
      _
    $region51: #{tpu_custom_call.1} parent=1 // pred_check_branch
      %47 = sbr.rel (0) target = $region53
    $region52: #{tpu_custom_call.1} parent=1 // pred_region
      _
    $region53: #{tpu_custom_call.1} parent=1 // pred_fallthru
      _
    // Predicated region
    $region54: #{tpu_custom_call.1} parent=1 // pred_check
      _
    $region55: #{tpu_custom_call.1} parent=1 // pred_check_branch
      %49 = sbr.rel (0) target = $region57
    $region56: #{tpu_custom_call.1} parent=1 // pred_region
      _
    $region57: #{tpu_custom_call.1} parent=1 // pred_fallthru
      _
    // Predicated region
    $region58: #{tpu_custom_call.1} parent=1 // pred_check
      _
    $region59: #{tpu_custom_call.1} parent=1 // pred_check_branch
      %51 = sbr.rel (0) target = $region61
    $region60: #{tpu_custom_call.1} parent=1 // pred_region
      %s53 = ssub.s32 16, 16
      %54 = vsyncadd [#allocation4], %s53
      %s56 = sshll.u32 %s14, 4
      %s57 = int_to_ptr.vmem [resolvable:$true] %s56
      %59 = dma.vmem_to_smem %s57, 16, [#allocation2], [#allocation4]
    $region61: #{tpu_custom_call.1} parent=1 // pred_fallthru
      _
    // Predicated region
    $region62: #{tpu_custom_call.1} parent=1 // pred_check
      _
    $region63: #{tpu_custom_call.1} parent=1 // pred_check_branch
      %61 = sbr.rel (0) target = $region65
    $region64: #{tpu_custom_call.1} parent=1 // pred_region
      %62 = dma.done [#allocation4], 16
    $region65: #{tpu_custom_call.1} parent=1 // pred_fallthru
      _
    %63 = sfence
    %v65 = vld [vmem:[%s0] sm:$0xf]
    %v66 = vld [vmem:[%s0 + $0x4] sm:$0xf]
    %v67 = vld [vmem:[%s0 + $0x8] sm:$0xf]
    %v68 = vld [vmem:[%s0 + $0xc] sm:$0xf]
    %v69 = vld [vmem:[%s0 + $0x10] sm:$0xf]
    %v70 = vld [vmem:[%s0 + $0x14] sm:$0xf]
    %v71 = vld [vmem:[%s0 + $0x18] sm:$0xf]
    %v72 = vld [vmem:[%s0 + $0x1c] sm:$0xf]
    %v73 = vld [vmem:[%s0 + $0x20] sm:$0xf]
    %v74 = vld [vmem:[%s0 + $0x24] sm:$0xf]
    %v75 = vld [vmem:[%s0 + $0x28] sm:$0xf]
    %v76 = vld [vmem:[%s0 + $0x2c] sm:$0xf]
    %v77 = vld [vmem:[%s0 + $0x30] sm:$0xf]
    %v78 = vld [vmem:[%s0 + $0x34] sm:$0xf]
    %v79 = vld [vmem:[%s0 + $0x38] sm:$0xf]
    %v80 = vld [vmem:[%s0 + $0x3c] sm:$0xf]
    %v81 = vunpack.c.l.bf16 %v65
    %v82 = vunpack.c.l.bf16 %v66
    %v83 = vunpack.c.l.bf16 %v67
    %v84 = vunpack.c.l.bf16 %v68
    %v85 = vunpack.c.l.bf16 %v69
    %v86 = vunpack.c.l.bf16 %v70
    %v87 = vunpack.c.l.bf16 %v71
    %v88 = vunpack.c.l.bf16 %v72
    %v89 = vunpack.c.l.bf16 %v73
    %v90 = vunpack.c.l.bf16 %v74
    %v91 = vunpack.c.l.bf16 %v75
    %v92 = vunpack.c.l.bf16 %v76
    %v93 = vunpack.c.l.bf16 %v77
    %v94 = vunpack.c.l.bf16 %v78
    %v95 = vunpack.c.l.bf16 %v79
    %v96 = vunpack.c.l.bf16 %v80
    %v97 = vld [vmem:[%s1] sm:$0xf]
    %v98 = vld [vmem:[%s1 + $0x4] sm:$0xf]
    %v99 = vld [vmem:[%s1 + $0x8] sm:$0xf]
    %v100 = vld [vmem:[%s1 + $0xc] sm:$0xf]
    %v101 = vld [vmem:[%s1 + $0x10] sm:$0xf]
    %v102 = vld [vmem:[%s1 + $0x14] sm:$0xf]
    %v103 = vld [vmem:[%s1 + $0x18] sm:$0xf]
    %v104 = vld [vmem:[%s1 + $0x1c] sm:$0xf]
    %v105 = vld [vmem:[%s1 + $0x20] sm:$0xf]
    %v106 = vld [vmem:[%s1 + $0x24] sm:$0xf]
    %v107 = vld [vmem:[%s1 + $0x28] sm:$0xf]
    %v108 = vld [vmem:[%s1 + $0x2c] sm:$0xf]
    %v109 = vld [vmem:[%s1 + $0x30] sm:$0xf]
    %v110 = vld [vmem:[%s1 + $0x34] sm:$0xf]
    %v111 = vld [vmem:[%s1 + $0x38] sm:$0xf]
    %v112 = vld [vmem:[%s1 + $0x3c] sm:$0xf]
    %v113 = vunpack.c.l.bf16 %v97
    %v114 = vunpack.c.l.bf16 %v98
    %v115 = vunpack.c.l.bf16 %v99
    %v116 = vunpack.c.l.bf16 %v100
    %v117 = vunpack.c.l.bf16 %v101
    %v118 = vunpack.c.l.bf16 %v102
    %v119 = vunpack.c.l.bf16 %v103
    %v120 = vunpack.c.l.bf16 %v104
    %v121 = vunpack.c.l.bf16 %v105
    %v122 = vunpack.c.l.bf16 %v106
    %v123 = vunpack.c.l.bf16 %v107
    %v124 = vunpack.c.l.bf16 %v108
    %v125 = vunpack.c.l.bf16 %v109
    %v126 = vunpack.c.l.bf16 %v110
    %v127 = vunpack.c.l.bf16 %v111
    %v128 = vunpack.c.l.bf16 %v112
    %v129 = vmul.f32 %v81, %v113
    %v130 = vmul.f32 %v82, %v114
    %v131 = vmul.f32 %v83, %v115
    %v132 = vmul.f32 %v84, %v116
    %v133 = vmul.f32 %v85, %v117
    %v134 = vmul.f32 %v86, %v118
    %v135 = vmul.f32 %v87, %v119
    %v136 = vmul.f32 %v88, %v120
    %v137 = vmul.f32 %v89, %v121
    %v138 = vmul.f32 %v90, %v122
    %v139 = vmul.f32 %v91, %v123
    %v140 = vmul.f32 %v92, %v124
    %v141 = vmul.f32 %v93, %v125
    %v142 = vmul.f32 %v94, %v126
    %v143 = vmul.f32 %v95, %v127
    %v144 = vmul.f32 %v96, %v128
    %v145 = vld [vmem:[%s12] sm:$0x1]
    %v147 = vlaneseq
    %v148 = vshrl.u32 %v147, 7
    %v149 = vsub.s32 0, %v148
    %v150 = vrot.slane %v145, %v149
    %v152 = vmul.f32 %v129, %v150
    %v153 = vmul.f32 %v130, %v150
    %v154 = vmul.f32 %v131, %v150
    %v155 = vmul.f32 %v132, %v150
    %v156 = vmul.f32 %v133, %v150
    %v157 = vmul.f32 %v134, %v150
    %v158 = vmul.f32 %v135, %v150
    %v159 = vmul.f32 %v136, %v150
    %v160 = vmul.f32 %v137, %v150
    %v161 = vmul.f32 %v138, %v150
    %v162 = vmul.f32 %v139, %v150
    %v163 = vmul.f32 %v140, %v150
    %v164 = vmul.f32 %v141, %v150
    %v165 = vmul.f32 %v142, %v150
    %v166 = vmul.f32 %v143, %v150
    %v167 = vmul.f32 %v144, %v150
    %v168 = vld [vmem:[%s2] sm:$0xf]
    %v169 = vld [vmem:[%s2 + $0x4] sm:$0xf]
    %v170 = vld [vmem:[%s2 + $0x8] sm:$0xf]
    %v171 = vld [vmem:[%s2 + $0xc] sm:$0xf]
    %v172 = vld [vmem:[%s2 + $0x10] sm:$0xf]
    %v173 = vld [vmem:[%s2 + $0x14] sm:$0xf]
    %v174 = vld [vmem:[%s2 + $0x18] sm:$0xf]
    %v175 = vld [vmem:[%s2 + $0x1c] sm:$0xf]
    %v176 = vld [vmem:[%s2 + $0x20] sm:$0xf]
    %v177 = vld [vmem:[%s2 + $0x24] sm:$0xf]
    %v178 = vld [vmem:[%s2 + $0x28] sm:$0xf]
    %v179 = vld [vmem:[%s2 + $0x2c] sm:$0xf]
    %v180 = vld [vmem:[%s2 + $0x30] sm:$0xf]
    %v181 = vld [vmem:[%s2 + $0x34] sm:$0xf]
    %v182 = vld [vmem:[%s2 + $0x38] sm:$0xf]
    %v183 = vld [vmem:[%s2 + $0x3c] sm:$0xf]
    %v184 = vld [vmem:[%s5] sm:$0xf]
    %v185 = vld [vmem:[%s5 + $0x4] sm:$0xf]
    %v186 = vld [vmem:[%s5 + $0x8] sm:$0xf]
    %v187 = vld [vmem:[%s5 + $0xc] sm:$0xf]
    %v188 = vld [vmem:[%s5 + $0x10] sm:$0xf]
    %v189 = vld [vmem:[%s5 + $0x14] sm:$0xf]
    %v190 = vld [vmem:[%s5 + $0x18] sm:$0xf]
    %v191 = vld [vmem:[%s5 + $0x1c] sm:$0xf]
    %v192 = vld [vmem:[%s3] sm:$0xf]
    %v193 = vld [vmem:[%s3 + $0x4] sm:$0xf]
    %v194 = vld [vmem:[%s3 + $0x8] sm:$0xf]
    %v195 = vld [vmem:[%s3 + $0xc] sm:$0xf]
    %v196 = vld [vmem:[%s3 + $0x10] sm:$0xf]
    %v197 = vld [vmem:[%s3 + $0x14] sm:$0xf]
    %v198 = vld [vmem:[%s3 + $0x18] sm:$0xf]
    %v199 = vld [vmem:[%s3 + $0x1c] sm:$0xf]
    %v200 = vld [vmem:[%s3 + $0x20] sm:$0xf]
    %v201 = vld [vmem:[%s3 + $0x24] sm:$0xf]
    %v202 = vld [vmem:[%s3 + $0x28] sm:$0xf]
    %v203 = vld [vmem:[%s3 + $0x2c] sm:$0xf]
    %v204 = vld [vmem:[%s3 + $0x30] sm:$0xf]
    %v205 = vld [vmem:[%s3 + $0x34] sm:$0xf]
    %v206 = vld [vmem:[%s3 + $0x38] sm:$0xf]
    %v207 = vld [vmem:[%s3 + $0x3c] sm:$0xf]
    %v208 = vld [vmem:[%s6] sm:$0xf]
    %v209 = vld [vmem:[%s6 + $0x4] sm:$0xf]
    %v210 = vld [vmem:[%s6 + $0x8] sm:$0xf]
    %v211 = vld [vmem:[%s6 + $0xc] sm:$0xf]
    %v212 = vld [vmem:[%s6 + $0x10] sm:$0xf]
    %v213 = vld [vmem:[%s6 + $0x14] sm:$0xf]
    %v214 = vld [vmem:[%s6 + $0x18] sm:$0xf]
    %v215 = vld [vmem:[%s6 + $0x1c] sm:$0xf]
    %v232 = vunpack.c.l.b16 %v192
    %v233 = vunpack.c.l.b16 %v193
    %v234 = vunpack.c.l.b16 %v194
    %v235 = vunpack.c.l.b16 %v195
    %v236 = vunpack.c.l.b16 %v196
    %v237 = vunpack.c.l.b16 %v197
    %v238 = vunpack.c.l.b16 %v198
    %v239 = vunpack.c.l.b16 %v199
    %v240 = vunpack.c.l.b16 %v200
    %v241 = vunpack.c.l.b16 %v201
    %v242 = vunpack.c.l.b16 %v202
    %v243 = vunpack.c.l.b16 %v203
    %v244 = vunpack.c.l.b16 %v204
    %v245 = vunpack.c.l.b16 %v205
    %v246 = vunpack.c.l.b16 %v206
    %v247 = vunpack.c.l.b16 %v207
    %v248 = vpack.c.b16 %v233, %v232
    %v249 = vpack.c.b16 %v235, %v234
    %v250 = vpack.c.b16 %v237, %v236
    %v251 = vpack.c.b16 %v239, %v238
    %v252 = vpack.c.b16 %v241, %v240
    %v253 = vpack.c.b16 %v243, %v242
    %v254 = vpack.c.b16 %v245, %v244
    %v255 = vpack.c.b16 %v247, %v246
    %v264 = vunpack.c.l.b16 %v208
    %v265 = vunpack.c.l.b16 %v209
    %v266 = vunpack.c.l.b16 %v210
    %v267 = vunpack.c.l.b16 %v211
    %v268 = vunpack.c.l.b16 %v212
    %v269 = vunpack.c.l.b16 %v213
    %v270 = vunpack.c.l.b16 %v214
    %v271 = vunpack.c.l.b16 %v215
    %v272 = vpack.c.b16 %v265, %v264
    %v273 = vpack.c.b16 %v267, %v266
    %v274 = vpack.c.b16 %v269, %v268
    %v275 = vpack.c.b16 %v271, %v270
    %vm280 = vcmask 523264
    %v282 = vsel %vm280, %v248, 0
    %v285 = vsel %vm280, %v249, 0
    %v288 = vsel %vm280, %v250, 0
    %v291 = vsel %vm280, %v251, 0
    %v294 = vsel %vm280, %v252, 0
    %v297 = vsel %vm280, %v253, 0
    %v300 = vsel %vm280, %v254, 0
    %v303 = vsel %vm280, %v255, 0
    %305 = vmatprep.subr.bf16.mxu0 0
    %306 = vmatpush1.bf16.msra.mxu0 %v272
    %307 = vmatprep.subr.bf16.mxu0 0
    %308 = vmatpush1.bf16.msra.mxu0 %v273
    %309 = vmatprep.subr.bf16.mxu0 0
    %310 = vmatpush1.bf16.msra.mxu0 %v274
    %311 = vmatprep.subr.bf16.mxu0 0
    %312 = vmatpush1.bf16.msra.mxu0 %v275
    %313 = vmatprep.subr.bf16.mxu0 0
    %314 = vmatpush1.bf16.msra.mxu0 0
    %315 = vmatprep.subr.bf16.mxu0 0
    %316 = vmatpush1.bf16.msra.mxu0 0
    %317 = vmatprep.subr.bf16.mxu0 0
    %318 = vmatpush1.bf16.msra.mxu0 0
    %319 = vmatprep.subr.bf16.mxu0 0
    %320 = vmatpush1.bf16.msra.mxu0 0
    %321 = vmatprep.subr.bf16.mxu0 0
    %322 = vmatpush1.bf16.msra.mxu0 0
    %323 = vmatprep.subr.bf16.mxu0 0
    %324 = vmatpush1.bf16.msra.mxu0 0
    %325 = vmatprep.subr.bf16.mxu0 0
    %326 = vmatpush1.bf16.msra.mxu0 0
    %327 = vmatprep.subr.bf16.mxu0 0
    %328 = vmatpush1.bf16.msra.mxu0 0
    %329 = vmatprep.subr.bf16.mxu0 0
    %330 = vmatpush1.bf16.msra.mxu0 0
    %331 = vmatprep.subr.bf16.mxu0 0
    %332 = vmatpush1.bf16.msra.mxu0 0
    %333 = vmatprep.subr.bf16.mxu0 0
    %334 = vmatpush1.bf16.msra.mxu0 0
    %335 = vmatprep.subr.bf16.mxu0 0
    %336 = vmatpush1.bf16.msra.mxu0 0
    %337 = vmatprep.mubr.bf16.mxu0 0
    %338 = vmatmul.mubr.bf16.gmra.mrb[0].mxu0 %v282
    %v339 = vpop.f32.mrb[0].mxu0
    %v340 = vadd.f32 0.0, %v339
    %v341 = vpop.f32.mrb[0].mxu0
    %v342 = vpop.f32.mrb[0].mxu0
    %v343 = vadd.f32 0.0, %v342
    %v344 = vpop.f32.mrb[0].mxu0
    %345 = vmatprep.mubr.bf16.mxu0 0
    %346 = vmatmul.mubr.bf16.gmra.mrb[0].mxu0 %v285
    %v347 = vpop.f32.mrb[0].mxu0
    %v348 = vadd.f32 0.0, %v347
    %v349 = vpop.f32.mrb[0].mxu0
    %v350 = vpop.f32.mrb[0].mxu0
    %v351 = vadd.f32 0.0, %v350
    %v352 = vpop.f32.mrb[0].mxu0
    %353 = vmatprep.mubr.bf16.mxu0 0
    %354 = vmatmul.mubr.bf16.gmra.mrb[0].mxu0 %v288
    %v355 = vpop.f32.mrb[0].mxu0
    %v356 = vadd.f32 0.0, %v355
    %v357 = vpop.f32.mrb[0].mxu0
    %v358 = vpop.f32.mrb[0].mxu0
    %v359 = vadd.f32 0.0, %v358
    %v360 = vpop.f32.mrb[0].mxu0
    %361 = vmatprep.mubr.bf16.mxu0 0
    %362 = vmatmul.mubr.bf16.gmra.mrb[0].mxu0 %v291
    %v363 = vpop.f32.mrb[0].mxu0
    %v364 = vadd.f32 0.0, %v363
    %v365 = vpop.f32.mrb[0].mxu0
    %v366 = vpop.f32.mrb[0].mxu0
    %v367 = vadd.f32 0.0, %v366
    %v368 = vpop.f32.mrb[0].mxu0
    %369 = vmatprep.mubr.bf16.mxu0 0
    %370 = vmatmul.mubr.bf16.gmra.mrb[0].mxu0 %v294
    %v371 = vpop.f32.mrb[0].mxu0
    %v372 = vadd.f32 0.0, %v371
    %v373 = vpop.f32.mrb[0].mxu0
    %v374 = vpop.f32.mrb[0].mxu0
    %v375 = vadd.f32 0.0, %v374
    %v376 = vpop.f32.mrb[0].mxu0
    %377 = vmatprep.mubr.bf16.mxu0 0
    %378 = vmatmul.mubr.bf16.gmra.mrb[0].mxu0 %v297
    %v379 = vpop.f32.mrb[0].mxu0
    %v380 = vadd.f32 0.0, %v379
    %v381 = vpop.f32.mrb[0].mxu0
    %v382 = vpop.f32.mrb[0].mxu0
    %v383 = vadd.f32 0.0, %v382
    %v384 = vpop.f32.mrb[0].mxu0
    %385 = vmatprep.mubr.bf16.mxu0 0
    %386 = vmatmul.mubr.bf16.gmra.mrb[0].mxu0 %v300
    %v387 = vpop.f32.mrb[0].mxu0
    %v388 = vadd.f32 0.0, %v387
    %v389 = vpop.f32.mrb[0].mxu0
    %v390 = vpop.f32.mrb[0].mxu0
    %v391 = vadd.f32 0.0, %v390
    %v392 = vpop.f32.mrb[0].mxu0
    %393 = vmatprep.mubr.bf16.mxu0 0
    %394 = vmatmul.mubr.bf16.gmra.mrb[0].mxu0 %v303
    %v395 = vpop.f32.mrb[0].mxu0
    %v396 = vadd.f32 0.0, %v395
    %v397 = vpop.f32.mrb[0].mxu0
    %v398 = vpop.f32.mrb[0].mxu0
    %v399 = vadd.f32 0.0, %v398
    %v400 = vpop.f32.mrb[0].mxu0
    %401 = vdwg.mxu0
    %v418 = vunpack.c.l.b16 %v168
    %v419 = vunpack.c.l.b16 %v169
    %v420 = vunpack.c.l.b16 %v170
    %v421 = vunpack.c.l.b16 %v171
    %v422 = vunpack.c.l.b16 %v172
    %v423 = vunpack.c.l.b16 %v173
    %v424 = vunpack.c.l.b16 %v174
    %v425 = vunpack.c.l.b16 %v175
    %v426 = vunpack.c.l.b16 %v176
    %v427 = vunpack.c.l.b16 %v177
    %v428 = vunpack.c.l.b16 %v178
    %v429 = vunpack.c.l.b16 %v179
    %v430 = vunpack.c.l.b16 %v180
    %v431 = vunpack.c.l.b16 %v181
    %v432 = vunpack.c.l.b16 %v182
    %v433 = vunpack.c.l.b16 %v183
    %v434 = vpack.c.b16 %v419, %v418
    %v435 = vpack.c.b16 %v421, %v420
    %v436 = vpack.c.b16 %v423, %v422
    %v437 = vpack.c.b16 %v425, %v424
    %v438 = vpack.c.b16 %v427, %v426
    %v439 = vpack.c.b16 %v429, %v428
    %v440 = vpack.c.b16 %v431, %v430
    %v441 = vpack.c.b16 %v433, %v432
    %v450 = vunpack.c.l.b16 %v184
    %v451 = vunpack.c.l.b16 %v185
    %v452 = vunpack.c.l.b16 %v186
    %v453 = vunpack.c.l.b16 %v187
    %v454 = vunpack.c.l.b16 %v188
    %v455 = vunpack.c.l.b16 %v189
    %v456 = vunpack.c.l.b16 %v190
    %v457 = vunpack.c.l.b16 %v191
    %v458 = vpack.c.b16 %v451, %v450
    %v459 = vpack.c.b16 %v453, %v452
    %v460 = vpack.c.b16 %v455, %v454
    %v461 = vpack.c.b16 %v457, %v456
    %v467 = vsel %vm280, %v434, 0
    %v470 = vsel %vm280, %v435, 0
    %v473 = vsel %vm280, %v436, 0
    %v476 = vsel %vm280, %v437, 0
    %v479 = vsel %vm280, %v438, 0
    %v482 = vsel %vm280, %v439, 0
    %v485 = vsel %vm280, %v440, 0
    %v488 = vsel %vm280, %v441, 0
    %490 = vmatprep.subr.bf16.mxu0 0
    %491 = vmatpush1.bf16.msra.mxu0 %v458
    %492 = vmatprep.subr.bf16.mxu0 0
    %493 = vmatpush1.bf16.msra.mxu0 %v459
    %494 = vmatprep.subr.bf16.mxu0 0
    %495 = vmatpush1.bf16.msra.mxu0 %v460
    %496 = vmatprep.subr.bf16.mxu0 0
    %497 = vmatpush1.bf16.msra.mxu0 %v461
    %498 = vmatprep.subr.bf16.mxu0 0
    %499 = vmatpush1.bf16.msra.mxu0 0
    %500 = vmatprep.subr.bf16.mxu0 0
    %501 = vmatpush1.bf16.msra.mxu0 0
    %502 = vmatprep.subr.bf16.mxu0 0
    %503 = vmatpush1.bf16.msra.mxu0 0
    %504 = vmatprep.subr.bf16.mxu0 0
    %505 = vmatpush1.bf16.msra.mxu0 0
    %506 = vmatprep.subr.bf16.mxu0 0
    %507 = vmatpush1.bf16.msra.mxu0 0
    %508 = vmatprep.subr.bf16.mxu0 0
    %509 = vmatpush1.bf16.msra.mxu0 0
    %510 = vmatprep.subr.bf16.mxu0 0
    %511 = vmatpush1.bf16.msra.mxu0 0
    %512 = vmatprep.subr.bf16.mxu0 0
    %513 = vmatpush1.bf16.msra.mxu0 0
    %514 = vmatprep.subr.bf16.mxu0 0
    %515 = vmatpush1.bf16.msra.mxu0 0
    %516 = vmatprep.subr.bf16.mxu0 0
    %517 = vmatpush1.bf16.msra.mxu0 0
    %518 = vmatprep.subr.bf16.mxu0 0
    %519 = vmatpush1.bf16.msra.mxu0 0
    %520 = vmatprep.subr.bf16.mxu0 0
    %521 = vmatpush1.bf16.msra.mxu0 0
    %522 = vmatprep.mubr.bf16.mxu0 0
    %523 = vmatmul.mubr.bf16.gmra.mrb[0].mxu0 %v467
    %v524 = vpop.f32.mrb[0].mxu0
    %v525 = vadd.f32 %v340, %v524
    %v526 = vpop.f32.mrb[0].mxu0
    %v527 = vpop.f32.mrb[0].mxu0
    %v528 = vadd.f32 %v343, %v527
    %v529 = vpop.f32.mrb[0].mxu0
    %530 = vmatprep.mubr.bf16.mxu0 0
    %531 = vmatmul.mubr.bf16.gmra.mrb[0].mxu0 %v470
    %v532 = vpop.f32.mrb[0].mxu0
    %v533 = vadd.f32 %v348, %v532
    %v534 = vpop.f32.mrb[0].mxu0
    %v535 = vpop.f32.mrb[0].mxu0
    %v536 = vadd.f32 %v351, %v535
    %v537 = vpop.f32.mrb[0].mxu0
    %538 = vmatprep.mubr.bf16.mxu0 0
    %539 = vmatmul.mubr.bf16.gmra.mrb[0].mxu0 %v473
    %v540 = vpop.f32.mrb[0].mxu0
    %v541 = vadd.f32 %v356, %v540
    %v542 = vpop.f32.mrb[0].mxu0
    %v543 = vpop.f32.mrb[0].mxu0
    %v544 = vadd.f32 %v359, %v543
    %v545 = vpop.f32.mrb[0].mxu0
    %546 = vmatprep.mubr.bf16.mxu0 0
    %547 = vmatmul.mubr.bf16.gmra.mrb[0].mxu0 %v476
    %v548 = vpop.f32.mrb[0].mxu0
    %v549 = vadd.f32 %v364, %v548
    %v550 = vpop.f32.mrb[0].mxu0
    %v551 = vpop.f32.mrb[0].mxu0
    %v552 = vadd.f32 %v367, %v551
    %v553 = vpop.f32.mrb[0].mxu0
    %554 = vmatprep.mubr.bf16.mxu0 0
    %555 = vmatmul.mubr.bf16.gmra.mrb[0].mxu0 %v479
    %v556 = vpop.f32.mrb[0].mxu0
    %v557 = vadd.f32 %v372, %v556
    %v558 = vpop.f32.mrb[0].mxu0
    %v559 = vpop.f32.mrb[0].mxu0
    %v560 = vadd.f32 %v375, %v559
    %v561 = vpop.f32.mrb[0].mxu0
    %562 = vmatprep.mubr.bf16.mxu0 0
    %563 = vmatmul.mubr.bf16.gmra.mrb[0].mxu0 %v482
    %v564 = vpop.f32.mrb[0].mxu0
    %v565 = vadd.f32 %v380, %v564
    %v566 = vpop.f32.mrb[0].mxu0
    %v567 = vpop.f32.mrb[0].mxu0
    %v568 = vadd.f32 %v383, %v567
    %v569 = vpop.f32.mrb[0].mxu0
    %570 = vmatprep.mubr.bf16.mxu0 0
    %571 = vmatmul.mubr.bf16.gmra.mrb[0].mxu0 %v485
    %v572 = vpop.f32.mrb[0].mxu0
    %v573 = vadd.f32 %v388, %v572
    %v574 = vpop.f32.mrb[0].mxu0
    %v575 = vpop.f32.mrb[0].mxu0
    %v576 = vadd.f32 %v391, %v575
    %v577 = vpop.f32.mrb[0].mxu0
    %578 = vmatprep.mubr.bf16.mxu0 0
    %579 = vmatmul.mubr.bf16.gmra.mrb[0].mxu0 %v488
    %v580 = vpop.f32.mrb[0].mxu0
    %v581 = vadd.f32 %v396, %v580
    %v582 = vpop.f32.mrb[0].mxu0
    %v583 = vpop.f32.mrb[0].mxu0
    %v584 = vadd.f32 %v399, %v583
    %v585 = vpop.f32.mrb[0].mxu0
    %586 = vdwg.mxu0
    %v587 = vld [vmem:[%s7] sm:$0x1]
    %v589 = vlaneseq
    %v590 = vshrl.u32 %v589, 7
    %v591 = vsub.s32 0, %v590
    %v592 = vrot.slane %v587, %v591
    %v594 = vadd.f32 %v525, %v592
    %v595 = vadd.f32 %v528, %v592
    %v596 = vadd.f32 %v533, %v592
    %v597 = vadd.f32 %v536, %v592
    %v598 = vadd.f32 %v541, %v592
    %v599 = vadd.f32 %v544, %v592
    %v600 = vadd.f32 %v549, %v592
    %v601 = vadd.f32 %v552, %v592
    %v602 = vadd.f32 %v557, %v592
    %v603 = vadd.f32 %v560, %v592
    %v604 = vadd.f32 %v565, %v592
    %v605 = vadd.f32 %v568, %v592
    %v606 = vadd.f32 %v573, %v592
    %v607 = vadd.f32 %v576, %v592
    %v608 = vadd.f32 %v581, %v592
    %v609 = vadd.f32 %v584, %v592
    %v610 = vmax.f32 %v594, 0.0
    %v611 = vmax.f32 %v595, 0.0
    %v612 = vmax.f32 %v596, 0.0
    %v613 = vmax.f32 %v597, 0.0
    %v614 = vmax.f32 %v598, 0.0
    %v615 = vmax.f32 %v599, 0.0
    %v616 = vmax.f32 %v600, 0.0
    %v617 = vmax.f32 %v601, 0.0
    %v618 = vmax.f32 %v602, 0.0
    %v619 = vmax.f32 %v603, 0.0
    %v620 = vmax.f32 %v604, 0.0
    %v621 = vmax.f32 %v605, 0.0
    %v622 = vmax.f32 %v606, 0.0
    %v623 = vmax.f32 %v607, 0.0
    %v624 = vmax.f32 %v608, 0.0
    %v625 = vmax.f32 %v609, 0.0
    %v626 = vpack.c.bf16 %v611, %v610
    %v627 = vpack.c.bf16 %v613, %v612
    %v628 = vpack.c.bf16 %v615, %v614
    %v629 = vpack.c.bf16 %v617, %v616
    %v630 = vpack.c.bf16 %v619, %v618
    %v631 = vpack.c.bf16 %v621, %v620
    %v632 = vpack.c.bf16 %v623, %v622
    %v633 = vpack.c.bf16 %v625, %v624
    %v634 = vld [vmem:[%s8] sm:$0xf]
    %v635 = vld [vmem:[%s8 + $0x4] sm:$0xf]
    %v636 = vld [vmem:[%s8 + $0x8] sm:$0xf]
    %v637 = vld [vmem:[%s8 + $0xc] sm:$0xf]
    %v638 = vld [vmem:[%s8 + $0x10] sm:$0xf]
    %v639 = vld [vmem:[%s8 + $0x14] sm:$0xf]
    %v640 = vld [vmem:[%s8 + $0x18] sm:$0xf]
    %v641 = vld [vmem:[%s8 + $0x1c] sm:$0xf]
    %v642 = vld [vmem:[%s9] sm:$0x1]
    %v644 = vlaneseq
    %v645 = vshrl.u32 %v644, 7
    %v646 = vsub.s32 0, %v645
    %v647 = vrot.slane %v642, %v646
    %v657 = vunpack.c.l.b16 %v634
    %v658 = vunpack.c.l.b16 %v635
    %v659 = vunpack.c.l.b16 %v636
    %v660 = vunpack.c.l.b16 %v637
    %v661 = vunpack.c.l.b16 %v638
    %v662 = vunpack.c.l.b16 %v639
    %v663 = vunpack.c.l.b16 %v640
    %v664 = vunpack.c.l.b16 %v641
    %v665 = vpack.c.b16 %v658, %v657
    %v666 = vpack.c.b16 %v660, %v659
    %v667 = vpack.c.b16 %v662, %v661
    %v668 = vpack.c.b16 %v664, %v663
    %v674 = vsel %vm280, %v626, 0
    %v677 = vsel %vm280, %v627, 0
    %v680 = vsel %vm280, %v628, 0
    %v683 = vsel %vm280, %v629, 0
    %v686 = vsel %vm280, %v630, 0
    %v689 = vsel %vm280, %v631, 0
    %v692 = vsel %vm280, %v632, 0
    %v695 = vsel %vm280, %v633, 0
    %697 = vmatprep.subr.bf16.mxu0 0
    %698 = vmatpush1.bf16.msra.mxu0 %v665
    %699 = vmatprep.subr.bf16.mxu0 0
    %700 = vmatpush1.bf16.msra.mxu0 %v666
    %701 = vmatprep.subr.bf16.mxu0 0
    %702 = vmatpush1.bf16.msra.mxu0 %v667
    %703 = vmatprep.subr.bf16.mxu0 0
    %704 = vmatpush1.bf16.msra.mxu0 %v668
    %705 = vmatprep.subr.bf16.mxu0 0
    %706 = vmatpush1.bf16.msra.mxu0 0
    %707 = vmatprep.subr.bf16.mxu0 0
    %708 = vmatpush1.bf16.msra.mxu0 0
    %709 = vmatprep.subr.bf16.mxu0 0
    %710 = vmatpush1.bf16.msra.mxu0 0
    %711 = vmatprep.subr.bf16.mxu0 0
    %712 = vmatpush1.bf16.msra.mxu0 0
    %713 = vmatprep.subr.bf16.mxu0 0
    %714 = vmatpush1.bf16.msra.mxu0 0
    %715 = vmatprep.subr.bf16.mxu0 0
    %716 = vmatpush1.bf16.msra.mxu0 0
    %717 = vmatprep.subr.bf16.mxu0 0
    %718 = vmatpush1.bf16.msra.mxu0 0
    %719 = vmatprep.subr.bf16.mxu0 0
    %720 = vmatpush1.bf16.msra.mxu0 0
    %721 = vmatprep.subr.bf16.mxu0 0
    %722 = vmatpush1.bf16.msra.mxu0 0
    %723 = vmatprep.subr.bf16.mxu0 0
    %724 = vmatpush1.bf16.msra.mxu0 0
    %725 = vmatprep.subr.bf16.mxu0 0
    %726 = vmatpush1.bf16.msra.mxu0 0
    %727 = vmatprep.subr.bf16.mxu0 0
    %728 = vmatpush1.bf16.msra.mxu0 0
    %729 = vmatprep.mubr.bf16.mxu0 0
    %730 = vmatmul.mubr.bf16.gmra.mrb[0].mxu0 %v674
    %v731 = vpop.f32.mrb[0].mxu0
    %v732 = vadd.f32 %v647, %v731
    %v733 = vpop.f32.mrb[0].mxu0
    %v734 = vpop.f32.mrb[0].mxu0
    %v735 = vadd.f32 %v647, %v734
    %v736 = vpop.f32.mrb[0].mxu0
    %737 = vmatprep.mubr.bf16.mxu0 0
    %738 = vmatmul.mubr.bf16.gmra.mrb[0].mxu0 %v677
    %v739 = vpop.f32.mrb[0].mxu0
    %v740 = vadd.f32 %v647, %v739
    %v741 = vpop.f32.mrb[0].mxu0
    %v742 = vpop.f32.mrb[0].mxu0
    %v743 = vadd.f32 %v647, %v742
    %v744 = vpop.f32.mrb[0].mxu0
    %745 = vmatprep.mubr.bf16.mxu0 0
    %746 = vmatmul.mubr.bf16.gmra.mrb[0].mxu0 %v680
    %v747 = vpop.f32.mrb[0].mxu0
    %v748 = vadd.f32 %v647, %v747
    %v749 = vpop.f32.mrb[0].mxu0
    %v750 = vpop.f32.mrb[0].mxu0
    %v751 = vadd.f32 %v647, %v750
    %v752 = vpop.f32.mrb[0].mxu0
    %753 = vmatprep.mubr.bf16.mxu0 0
    %754 = vmatmul.mubr.bf16.gmra.mrb[0].mxu0 %v683
    %v755 = vpop.f32.mrb[0].mxu0
    %v756 = vadd.f32 %v647, %v755
    %v757 = vpop.f32.mrb[0].mxu0
    %v758 = vpop.f32.mrb[0].mxu0
    %v759 = vadd.f32 %v647, %v758
    %v760 = vpop.f32.mrb[0].mxu0
    %761 = vmatprep.mubr.bf16.mxu0 0
    %762 = vmatmul.mubr.bf16.gmra.mrb[0].mxu0 %v686
    %v763 = vpop.f32.mrb[0].mxu0
    %v764 = vadd.f32 %v647, %v763
    %v765 = vpop.f32.mrb[0].mxu0
    %v766 = vpop.f32.mrb[0].mxu0
    %v767 = vadd.f32 %v647, %v766
    %v768 = vpop.f32.mrb[0].mxu0
    %769 = vmatprep.mubr.bf16.mxu0 0
    %770 = vmatmul.mubr.bf16.gmra.mrb[0].mxu0 %v689
    %v771 = vpop.f32.mrb[0].mxu0
    %v772 = vadd.f32 %v647, %v771
    %v773 = vpop.f32.mrb[0].mxu0
    %v774 = vpop.f32.mrb[0].mxu0
    %v775 = vadd.f32 %v647, %v774
    %v776 = vpop.f32.mrb[0].mxu0
    %777 = vmatprep.mubr.bf16.mxu0 0
    %778 = vmatmul.mubr.bf16.gmra.mrb[0].mxu0 %v692
    %v779 = vpop.f32.mrb[0].mxu0
    %v780 = vadd.f32 %v647, %v779
    %v781 = vpop.f32.mrb[0].mxu0
    %v782 = vpop.f32.mrb[0].mxu0
    %v783 = vadd.f32 %v647, %v782
    %v784 = vpop.f32.mrb[0].mxu0
    %785 = vmatprep.mubr.bf16.mxu0 0
    %786 = vmatmul.mubr.bf16.gmra.mrb[0].mxu0 %v695
    %v787 = vpop.f32.mrb[0].mxu0
    %v788 = vadd.f32 %v647, %v787
    %v789 = vpop.f32.mrb[0].mxu0
    %v790 = vpop.f32.mrb[0].mxu0
    %v791 = vadd.f32 %v647, %v790
    %v792 = vpop.f32.mrb[0].mxu0
    %793 = vdwg.mxu0
    %v794 = vmax.f32 %v732, 0.0
    %v795 = vmax.f32 %v735, 0.0
    %v796 = vmax.f32 %v740, 0.0
    %v797 = vmax.f32 %v743, 0.0
    %v798 = vmax.f32 %v748, 0.0
    %v799 = vmax.f32 %v751, 0.0
    %v800 = vmax.f32 %v756, 0.0
    %v801 = vmax.f32 %v759, 0.0
    %v802 = vmax.f32 %v764, 0.0
    %v803 = vmax.f32 %v767, 0.0
    %v804 = vmax.f32 %v772, 0.0
    %v805 = vmax.f32 %v775, 0.0
    %v806 = vmax.f32 %v780, 0.0
    %v807 = vmax.f32 %v783, 0.0
    %v808 = vmax.f32 %v788, 0.0
    %v809 = vmax.f32 %v791, 0.0
    %v810 = vpack.c.bf16 %v795, %v794
    %v811 = vpack.c.bf16 %v797, %v796
    %v812 = vpack.c.bf16 %v799, %v798
    %v813 = vpack.c.bf16 %v801, %v800
    %v814 = vpack.c.bf16 %v803, %v802
    %v815 = vpack.c.bf16 %v805, %v804
    %v816 = vpack.c.bf16 %v807, %v806
    %v817 = vpack.c.bf16 %v809, %v808
    %v818 = vld [vmem:[%s10] sm:$0xf]
    %v819 = vld [vmem:[%s10 + $0x4] sm:$0xf]
    %v820 = vld [vmem:[%s10 + $0x8] sm:$0xf]
    %v821 = vld [vmem:[%s10 + $0xc] sm:$0xf]
    %v822 = vld [vmem:[%s11] sm:$0x1]
    %v824 = vlaneseq
    %v825 = vshrl.u32 %v824, 7
    %v826 = vsub.s32 0, %v825
    %v827 = vrot.slane %v822, %v826
    %v833 = vunpack.c.l.b16 %v818
    %v834 = vunpack.c.l.b16 %v819
    %v835 = vunpack.c.l.b16 %v820
    %v836 = vunpack.c.l.b16 %v821
    %v837 = vpack.c.b16 %v834, %v833
    %v838 = vpack.c.b16 %v836, %v835
    %vm841 = vcmask 261120
    %v843 = vsel %vm841, %v810, 0
    %v846 = vsel %vm841, %v811, 0
    %v849 = vsel %vm841, %v812, 0
    %v852 = vsel %vm841, %v813, 0
    %v855 = vsel %vm841, %v814, 0
    %v858 = vsel %vm841, %v815, 0
    %v861 = vsel %vm841, %v816, 0
    %v864 = vsel %vm841, %v817, 0
    %866 = vmatprep.subr.bf16.mxu0 0
    %867 = vmatpush1.bf16.msra.mxu0 %v837
    %868 = vmatprep.subr.bf16.mxu0 0
    %869 = vmatpush1.bf16.msra.mxu0 %v838
    %870 = vmatprep.subr.bf16.mxu0 0
    %871 = vmatpush1.bf16.msra.mxu0 0
    %872 = vmatprep.subr.bf16.mxu0 0
    %873 = vmatpush1.bf16.msra.mxu0 0
    %874 = vmatprep.subr.bf16.mxu0 0
    %875 = vmatpush1.bf16.msra.mxu0 0
    %876 = vmatprep.subr.bf16.mxu0 0
    %877 = vmatpush1.bf16.msra.mxu0 0
    %878 = vmatprep.subr.bf16.mxu0 0
    %879 = vmatpush1.bf16.msra.mxu0 0
    %880 = vmatprep.subr.bf16.mxu0 0
    %881 = vmatpush1.bf16.msra.mxu0 0
    %882 = vmatprep.subr.bf16.mxu0 0
    %883 = vmatpush1.bf16.msra.mxu0 0
    %884 = vmatprep.subr.bf16.mxu0 0
    %885 = vmatpush1.bf16.msra.mxu0 0
    %886 = vmatprep.subr.bf16.mxu0 0
    %887 = vmatpush1.bf16.msra.mxu0 0
    %888 = vmatprep.subr.bf16.mxu0 0
    %889 = vmatpush1.bf16.msra.mxu0 0
    %890 = vmatprep.subr.bf16.mxu0 0
    %891 = vmatpush1.bf16.msra.mxu0 0
    %892 = vmatprep.subr.bf16.mxu0 0
    %893 = vmatpush1.bf16.msra.mxu0 0
    %894 = vmatprep.subr.bf16.mxu0 0
    %895 = vmatpush1.bf16.msra.mxu0 0
    %896 = vmatprep.subr.bf16.mxu0 0
    %897 = vmatpush1.bf16.msra.mxu0 0
    %898 = vmatprep.mubr.bf16.mxu0 0
    %899 = vmatmul.mubr.bf16.gmra.mrb[0].mxu0 %v843
    %v900 = vpop.f32.mrb[0].mxu0
    %v901 = vadd.f32 %v827, %v900
    %v902 = vpop.f32.mrb[0].mxu0
    %v903 = vpop.f32.mrb[0].mxu0
    %v904 = vadd.f32 %v827, %v903
    %v905 = vpop.f32.mrb[0].mxu0
    %906 = vmatprep.mubr.bf16.mxu0 0
    %907 = vmatmul.mubr.bf16.gmra.mrb[0].mxu0 %v846
    %v908 = vpop.f32.mrb[0].mxu0
    %v909 = vadd.f32 %v827, %v908
    %v910 = vpop.f32.mrb[0].mxu0
    %v911 = vpop.f32.mrb[0].mxu0
    %v912 = vadd.f32 %v827, %v911
    %v913 = vpop.f32.mrb[0].mxu0
    %914 = vmatprep.mubr.bf16.mxu0 0
    %915 = vmatmul.mubr.bf16.gmra.mrb[0].mxu0 %v849
    %v916 = vpop.f32.mrb[0].mxu0
    %v917 = vadd.f32 %v827, %v916
    %v918 = vpop.f32.mrb[0].mxu0
    %v919 = vpop.f32.mrb[0].mxu0
    %v920 = vadd.f32 %v827, %v919
    %v921 = vpop.f32.mrb[0].mxu0
    %922 = vmatprep.mubr.bf16.mxu0 0
    %923 = vmatmul.mubr.bf16.gmra.mrb[0].mxu0 %v852
    %v924 = vpop.f32.mrb[0].mxu0
    %v925 = vadd.f32 %v827, %v924
    %v926 = vpop.f32.mrb[0].mxu0
    %v927 = vpop.f32.mrb[0].mxu0
    %v928 = vadd.f32 %v827, %v927
    %v929 = vpop.f32.mrb[0].mxu0
    %930 = vmatprep.mubr.bf16.mxu0 0
    %931 = vmatmul.mubr.bf16.gmra.mrb[0].mxu0 %v855
    %v932 = vpop.f32.mrb[0].mxu0
    %v933 = vadd.f32 %v827, %v932
    %v934 = vpop.f32.mrb[0].mxu0
    %v935 = vpop.f32.mrb[0].mxu0
    %v936 = vadd.f32 %v827, %v935
    %v937 = vpop.f32.mrb[0].mxu0
    %938 = vmatprep.mubr.bf16.mxu0 0
    %939 = vmatmul.mubr.bf16.gmra.mrb[0].mxu0 %v858
    %v940 = vpop.f32.mrb[0].mxu0
    %v941 = vadd.f32 %v827, %v940
    %v942 = vpop.f32.mrb[0].mxu0
    %v943 = vpop.f32.mrb[0].mxu0
    %v944 = vadd.f32 %v827, %v943
    %v945 = vpop.f32.mrb[0].mxu0
    %946 = vmatprep.mubr.bf16.mxu0 0
    %947 = vmatmul.mubr.bf16.gmra.mrb[0].mxu0 %v861
    %v948 = vpop.f32.mrb[0].mxu0
    %v949 = vadd.f32 %v827, %v948
    %v950 = vpop.f32.mrb[0].mxu0
    %v951 = vpop.f32.mrb[0].mxu0
    %v952 = vadd.f32 %v827, %v951
    %v953 = vpop.f32.mrb[0].mxu0
    %954 = vmatprep.mubr.bf16.mxu0 0
    %955 = vmatmul.mubr.bf16.gmra.mrb[0].mxu0 %v864
    %v956 = vpop.f32.mrb[0].mxu0
    %v957 = vadd.f32 %v827, %v956
    %v958 = vpop.f32.mrb[0].mxu0
    %v959 = vpop.f32.mrb[0].mxu0
    %v960 = vadd.f32 %v827, %v959
    %v961 = vpop.f32.mrb[0].mxu0
    %962 = vdwg.mxu0
    %v963 = vmax.f32 %v901, 0.0
    %v964 = vmax.f32 %v904, 0.0
    %v965 = vmax.f32 %v909, 0.0
    %v966 = vmax.f32 %v912, 0.0
    %v967 = vmax.f32 %v917, 0.0
    %v968 = vmax.f32 %v920, 0.0
    %v969 = vmax.f32 %v925, 0.0
    %v970 = vmax.f32 %v928, 0.0
    %v971 = vmax.f32 %v933, 0.0
    %v972 = vmax.f32 %v936, 0.0
    %v973 = vmax.f32 %v941, 0.0
    %v974 = vmax.f32 %v944, 0.0
    %v975 = vmax.f32 %v949, 0.0
    %v976 = vmax.f32 %v952, 0.0
    %v977 = vmax.f32 %v957, 0.0
    %v978 = vmax.f32 %v960, 0.0
    %s979 = sld [smem:[#allocation2]]
    %s980 = sld [smem:[#allocation2 + $0x1]]
    %vm981 = vcmask 130048
    %v982 = vsel %vm981, %v152, 0.0
    %983 = vadd.xlane.f32.xlu0 %v982
    %v984 = vpop.xlane.xlu0 %983
    %v985 = vsel %vm981, %v153, 0.0
    %986 = vadd.xlane.f32.xlu0 %v985
    %v987 = vpop.xlane.xlu0 %986
    %v988 = vsel %vm981, %v154, 0.0
    %989 = vadd.xlane.f32.xlu0 %v988
    %v990 = vpop.xlane.xlu0 %989
    %v991 = vsel %vm981, %v155, 0.0
    %992 = vadd.xlane.f32.xlu0 %v991
    %v993 = vpop.xlane.xlu0 %992
    %v994 = vsel %vm981, %v156, 0.0
    %995 = vadd.xlane.f32.xlu0 %v994
    %v996 = vpop.xlane.xlu0 %995
    %v997 = vsel %vm981, %v157, 0.0
    %998 = vadd.xlane.f32.xlu0 %v997
    %v999 = vpop.xlane.xlu0 %998
    %v1000 = vsel %vm981, %v158, 0.0
    %1001 = vadd.xlane.f32.xlu0 %v1000
    %v1002 = vpop.xlane.xlu0 %1001
    %v1003 = vsel %vm981, %v159, 0.0
    %1004 = vadd.xlane.f32.xlu0 %v1003
    %v1005 = vpop.xlane.xlu0 %1004
    %v1006 = vsel %vm981, %v160, 0.0
    %1007 = vadd.xlane.f32.xlu0 %v1006
    %v1008 = vpop.xlane.xlu0 %1007
    %v1009 = vsel %vm981, %v161, 0.0
    %1010 = vadd.xlane.f32.xlu0 %v1009
    %v1011 = vpop.xlane.xlu0 %1010
    %v1012 = vsel %vm981, %v162, 0.0
    %1013 = vadd.xlane.f32.xlu0 %v1012
    %v1014 = vpop.xlane.xlu0 %1013
    %v1015 = vsel %vm981, %v163, 0.0
    %1016 = vadd.xlane.f32.xlu0 %v1015
    %v1017 = vpop.xlane.xlu0 %1016
    %v1018 = vsel %vm981, %v164, 0.0
    %1019 = vadd.xlane.f32.xlu0 %v1018
    %v1020 = vpop.xlane.xlu0 %1019
    %v1021 = vsel %vm981, %v165, 0.0
    %1022 = vadd.xlane.f32.xlu0 %v1021
    %v1023 = vpop.xlane.xlu0 %1022
    %v1024 = vsel %vm981, %v166, 0.0
    %1025 = vadd.xlane.f32.xlu0 %v1024
    %v1026 = vpop.xlane.xlu0 %1025
    %v1027 = vsel %vm981, %v167, 0.0
    %1028 = vadd.xlane.f32.xlu0 %v1027
    %v1029 = vpop.xlane.xlu0 %1028
    %v1030 = vld [vmem:[%s13] sm:$0x1]
    %v1032 = vlaneseq
    %v1033 = vshrl.u32 %v1032, 7
    %v1034 = vsub.s32 0, %v1033
    %v1035 = vrot.slane %v1030, %v1034
    %v1037 = vmul.f32 %v963, %v1035
    %v1038 = vmul.f32 %v964, %v1035
    %v1039 = vmul.f32 %v965, %v1035
    %v1040 = vmul.f32 %v966, %v1035
    %v1041 = vmul.f32 %v967, %v1035
    %v1042 = vmul.f32 %v968, %v1035
    %v1043 = vmul.f32 %v969, %v1035
    %v1044 = vmul.f32 %v970, %v1035
    %v1045 = vmul.f32 %v971, %v1035
    %v1046 = vmul.f32 %v972, %v1035
    %v1047 = vmul.f32 %v973, %v1035
    %v1048 = vmul.f32 %v974, %v1035
    %v1049 = vmul.f32 %v975, %v1035
    %v1050 = vmul.f32 %v976, %v1035
    %v1051 = vmul.f32 %v977, %v1035
    %v1052 = vmul.f32 %v978, %v1035
    %v1053 = vsel %vm981, %v1037, 0.0
    %1054 = vadd.xlane.f32.xlu0 %v1053
    %v1055 = vpop.xlane.xlu0 %1054
    %v1056 = vsel %vm981, %v1038, 0.0
    %1057 = vadd.xlane.f32.xlu0 %v1056
    %v1058 = vpop.xlane.xlu0 %1057
    %v1059 = vsel %vm981, %v1039, 0.0
    %1060 = vadd.xlane.f32.xlu0 %v1059
    %v1061 = vpop.xlane.xlu0 %1060
    %v1062 = vsel %vm981, %v1040, 0.0
    %1063 = vadd.xlane.f32.xlu0 %v1062
    %v1064 = vpop.xlane.xlu0 %1063
    %v1065 = vsel %vm981, %v1041, 0.0
    %1066 = vadd.xlane.f32.xlu0 %v1065
    %v1067 = vpop.xlane.xlu0 %1066
    %v1068 = vsel %vm981, %v1042, 0.0
    %1069 = vadd.xlane.f32.xlu0 %v1068
    %v1070 = vpop.xlane.xlu0 %1069
    %v1071 = vsel %vm981, %v1043, 0.0
    %1072 = vadd.xlane.f32.xlu0 %v1071
    %v1073 = vpop.xlane.xlu0 %1072
    %v1074 = vsel %vm981, %v1044, 0.0
    %1075 = vadd.xlane.f32.xlu0 %v1074
    %v1076 = vpop.xlane.xlu0 %1075
    %v1077 = vsel %vm981, %v1045, 0.0
    %1078 = vadd.xlane.f32.xlu0 %v1077
    %v1079 = vpop.xlane.xlu0 %1078
    %v1080 = vsel %vm981, %v1046, 0.0
    %1081 = vadd.xlane.f32.xlu0 %v1080
    %v1082 = vpop.xlane.xlu0 %1081
    %v1083 = vsel %vm981, %v1047, 0.0
    %1084 = vadd.xlane.f32.xlu0 %v1083
    %v1085 = vpop.xlane.xlu0 %1084
    %v1086 = vsel %vm981, %v1048, 0.0
    %1087 = vadd.xlane.f32.xlu0 %v1086
    %v1088 = vpop.xlane.xlu0 %1087
    %v1089 = vsel %vm981, %v1049, 0.0
    %1090 = vadd.xlane.f32.xlu0 %v1089
    %v1091 = vpop.xlane.xlu0 %1090
    %v1092 = vsel %vm981, %v1050, 0.0
    %1093 = vadd.xlane.f32.xlu0 %v1092
    %v1094 = vpop.xlane.xlu0 %1093
    %v1095 = vsel %vm981, %v1051, 0.0
    %1096 = vadd.xlane.f32.xlu0 %v1095
    %v1097 = vpop.xlane.xlu0 %1096
    %v1098 = vsel %vm981, %v1052, 0.0
    %1099 = vadd.xlane.f32.xlu0 %v1098
    %v1100 = vpop.xlane.xlu0 %1099
    %v1101 = vadd.f32 %v984, %v1055
    %v1102 = vadd.f32 %v987, %v1058
    %v1103 = vadd.f32 %v990, %v1061
    %v1104 = vadd.f32 %v993, %v1064
    %v1105 = vadd.f32 %v996, %v1067
    %v1106 = vadd.f32 %v999, %v1070
    %v1107 = vadd.f32 %v1002, %v1073
    %v1108 = vadd.f32 %v1005, %v1076
    %v1109 = vadd.f32 %v1008, %v1079
    %v1110 = vadd.f32 %v1011, %v1082
    %v1111 = vadd.f32 %v1014, %v1085
    %v1112 = vadd.f32 %v1017, %v1088
    %v1113 = vadd.f32 %v1020, %v1091
    %v1114 = vadd.f32 %v1023, %v1094
    %v1115 = vadd.f32 %v1026, %v1097
    %v1116 = vadd.f32 %v1029, %v1100
    %v1117 = vstv %s980
    %v1118 = vadd.f32 %v1101, %v1117
    %v1119 = vadd.f32 %v1102, %v1117
    %v1120 = vadd.f32 %v1103, %v1117
    %v1121 = vadd.f32 %v1104, %v1117
    %v1122 = vadd.f32 %v1105, %v1117
    %v1123 = vadd.f32 %v1106, %v1117
    %v1124 = vadd.f32 %v1107, %v1117
    %v1125 = vadd.f32 %v1108, %v1117
    %v1126 = vadd.f32 %v1109, %v1117
    %v1127 = vadd.f32 %v1110, %v1117
    %v1128 = vadd.f32 %v1111, %v1117
    %v1129 = vadd.f32 %v1112, %v1117
    %v1130 = vadd.f32 %v1113, %v1117
    %v1131 = vadd.f32 %v1114, %v1117
    %v1132 = vadd.f32 %v1115, %v1117
    %v1133 = vadd.f32 %v1116, %v1117
    %v1134 = vld [vmem:[%s4] sm:$0x1]
    %v1135 = vstv %s979
    %v1136 = vmul.f32 %v1134, %v1135
    %v1138 = vlaneseq
    %v1139 = vshrl.u32 %v1138, 7
    %v1140 = vsub.s32 0, %v1139
    %v1141 = vrot.slane %v1136, %v1140
    %1143 = vbcast.lane.b32.xlu0 %v1141, 256
    %v1144 = vpop.permute.xlu0 %1143
    %s1146 = sor.u32 256, 8
    %1147 = vbcast.lane.b32.xlu0 %v1141, %s1146
    %v1148 = vpop.permute.xlu0 %1147
    %s1150 = sor.u32 256, 16
    %1151 = vbcast.lane.b32.xlu0 %v1141, %s1150
    %v1152 = vpop.permute.xlu0 %1151
    %s1154 = sor.u32 256, 24
    %1155 = vbcast.lane.b32.xlu0 %v1141, %s1154
    %v1156 = vpop.permute.xlu0 %1155
    %s1158 = sor.u32 256, 32
    %1159 = vbcast.lane.b32.xlu0 %v1141, %s1158
    %v1160 = vpop.permute.xlu0 %1159
    %s1162 = sor.u32 256, 40
    %1163 = vbcast.lane.b32.xlu0 %v1141, %s1162
    %v1164 = vpop.permute.xlu0 %1163
    %s1166 = sor.u32 256, 48
    %1167 = vbcast.lane.b32.xlu0 %v1141, %s1166
    %v1168 = vpop.permute.xlu0 %1167
    %s1170 = sor.u32 256, 56
    %1171 = vbcast.lane.b32.xlu0 %v1141, %s1170
    %v1172 = vpop.permute.xlu0 %1171
    %s1174 = sor.u32 256, 64
    %1175 = vbcast.lane.b32.xlu0 %v1141, %s1174
    %v1176 = vpop.permute.xlu0 %1175
    %s1178 = sor.u32 256, 72
    %1179 = vbcast.lane.b32.xlu0 %v1141, %s1178
    %v1180 = vpop.permute.xlu0 %1179
    %s1182 = sor.u32 256, 80
    %1183 = vbcast.lane.b32.xlu0 %v1141, %s1182
    %v1184 = vpop.permute.xlu0 %1183
    %s1186 = sor.u32 256, 88
    %1187 = vbcast.lane.b32.xlu0 %v1141, %s1186
    %v1188 = vpop.permute.xlu0 %1187
    %s1190 = sor.u32 256, 96
    %1191 = vbcast.lane.b32.xlu0 %v1141, %s1190
    %v1192 = vpop.permute.xlu0 %1191
    %s1194 = sor.u32 256, 104
    %1195 = vbcast.lane.b32.xlu0 %v1141, %s1194
    %v1196 = vpop.permute.xlu0 %1195
    %s1198 = sor.u32 256, 112
    %1199 = vbcast.lane.b32.xlu0 %v1141, %s1198
    %v1200 = vpop.permute.xlu0 %1199
    %s1202 = sor.u32 256, 120
    %1203 = vbcast.lane.b32.xlu0 %v1141, %s1202
    %v1204 = vpop.permute.xlu0 %1203
    %v1221 = vadd.f32 %v1118, %v1144
    %v1222 = vadd.f32 %v1119, %v1148
    %v1223 = vadd.f32 %v1120, %v1152
    %v1224 = vadd.f32 %v1121, %v1156
    %v1225 = vadd.f32 %v1122, %v1160
    %v1226 = vadd.f32 %v1123, %v1164
    %v1227 = vadd.f32 %v1124, %v1168
    %v1228 = vadd.f32 %v1125, %v1172
    %v1229 = vadd.f32 %v1126, %v1176
    %v1230 = vadd.f32 %v1127, %v1180
    %v1231 = vadd.f32 %v1128, %v1184
    %v1232 = vadd.f32 %v1129, %v1188
    %v1233 = vadd.f32 %v1130, %v1192
    %v1234 = vadd.f32 %v1131, %v1196
    %v1235 = vadd.f32 %v1132, %v1200
    %v1236 = vadd.f32 %v1133, %v1204
    %1253 = vset.pattern.permute.xlu0 0
    %1254 = vperm.xlu0 %1253, %v1221
    %v1255 = vpop.permute.xlu0 %1254
    %1256 = vset.pattern.permute.xlu0 0
    %1257 = vperm.xlu0 %1256, %v1222
    %v1258 = vpop.permute.xlu0 %1257
    %1259 = vset.pattern.permute.xlu0 0
    %1260 = vperm.xlu0 %1259, %v1223
    %v1261 = vpop.permute.xlu0 %1260
    %1262 = vset.pattern.permute.xlu0 0
    %1263 = vperm.xlu0 %1262, %v1224
    %v1264 = vpop.permute.xlu0 %1263
    %1265 = vset.pattern.permute.xlu0 0
    %1266 = vperm.xlu0 %1265, %v1225
    %v1267 = vpop.permute.xlu0 %1266
    %1268 = vset.pattern.permute.xlu0 0
    %1269 = vperm.xlu0 %1268, %v1226
    %v1270 = vpop.permute.xlu0 %1269
    %1271 = vset.pattern.permute.xlu0 0
    %1272 = vperm.xlu0 %1271, %v1227
    %v1273 = vpop.permute.xlu0 %1272
    %1274 = vset.pattern.permute.xlu0 0
    %1275 = vperm.xlu0 %1274, %v1228
    %v1276 = vpop.permute.xlu0 %1275
    %1277 = vset.pattern.permute.xlu0 0
    %1278 = vperm.xlu0 %1277, %v1229
    %v1279 = vpop.permute.xlu0 %1278
    %1280 = vset.pattern.permute.xlu0 0
    %1281 = vperm.xlu0 %1280, %v1230
    %v1282 = vpop.permute.xlu0 %1281
    %1283 = vset.pattern.permute.xlu0 0
    %1284 = vperm.xlu0 %1283, %v1231
    %v1285 = vpop.permute.xlu0 %1284
    %1286 = vset.pattern.permute.xlu0 0
    %1287 = vperm.xlu0 %1286, %v1232
    %v1288 = vpop.permute.xlu0 %1287
    %1289 = vset.pattern.permute.xlu0 0
    %1290 = vperm.xlu0 %1289, %v1233
    %v1291 = vpop.permute.xlu0 %1290
    %1292 = vset.pattern.permute.xlu0 0
    %1293 = vperm.xlu0 %1292, %v1234
    %v1294 = vpop.permute.xlu0 %1293
    %1295 = vset.pattern.permute.xlu0 0
    %1296 = vperm.xlu0 %1295, %v1235
    %v1297 = vpop.permute.xlu0 %1296
    %1298 = vset.pattern.permute.xlu0 0
    %1299 = vperm.xlu0 %1298, %v1236
    %v1300 = vpop.permute.xlu0 %1299
    %v1301 = vlaneseq
    %v1302 = vand.u32 %v1301, 127
    %v1303 = vlaneseq
    %v1304 = vshrl.u32 %v1303, 7
    %v1305 = vsub.s32 %v1302, %v1304
    %v1306 = vrot.slane %v1255, %v1305
    %v1307 = vadd.s32 %v1302, 4294967288
    %v1308 = vlaneseq
    %v1309 = vshrl.u32 %v1308, 7
    %v1310 = vsub.s32 %v1307, %v1309
    %v1311 = vrot.slane %v1258, %v1310
    %vm1312 = vcmask 130112
    %v1313 = vsel %vm1312, %v1311, %v1306
    %v1314 = vadd.s32 %v1302, 4294967280
    %v1315 = vlaneseq
    %v1316 = vshrl.u32 %v1315, 7
    %v1317 = vsub.s32 %v1314, %v1316
    %v1318 = vrot.slane %v1261, %v1317
    %vm1319 = vcmask 195712
    %v1320 = vsel %vm1319, %v1318, %v1313
    %v1321 = vadd.s32 %v1302, 4294967272
    %v1322 = vlaneseq
    %v1323 = vshrl.u32 %v1322, 7
    %v1324 = vsub.s32 %v1321, %v1323
    %v1325 = vrot.slane %v1264, %v1324
    %vm1326 = vcmask 261312
    %v1327 = vsel %vm1326, %v1325, %v1320
    %v1328 = vadd.s32 %v1302, 4294967264
    %v1329 = vlaneseq
    %v1330 = vshrl.u32 %v1329, 7
    %v1331 = vsub.s32 %v1328, %v1330
    %v1332 = vrot.slane %v1267, %v1331
    %vm1333 = vcmask 326912
    %v1334 = vsel %vm1333, %v1332, %v1327
    %v1335 = vadd.s32 %v1302, 4294967256
    %v1336 = vlaneseq
    %v1337 = vshrl.u32 %v1336, 7
    %v1338 = vsub.s32 %v1335, %v1337
    %v1339 = vrot.slane %v1270, %v1338
    %vm1340 = vcmask 392512
    %v1341 = vsel %vm1340, %v1339, %v1334
    %v1342 = vadd.s32 %v1302, 4294967248
    %v1343 = vlaneseq
    %v1344 = vshrl.u32 %v1343, 7
    %v1345 = vsub.s32 %v1342, %v1344
    %v1346 = vrot.slane %v1273, %v1345
    %vm1347 = vcmask 458112
    %v1348 = vsel %vm1347, %v1346, %v1341
    %v1349 = vadd.s32 %v1302, 4294967240
    %v1350 = vlaneseq
    %v1351 = vshrl.u32 %v1350, 7
    %v1352 = vsub.s32 %v1349, %v1351
    %v1353 = vrot.slane %v1276, %v1352
    %vm1354 = vcmask 523712
    %v1355 = vsel %vm1354, %v1353, %v1348
    %v1356 = vadd.s32 %v1302, 4294967232
    %v1357 = vlaneseq
    %v1358 = vshrl.u32 %v1357, 7
    %v1359 = vsub.s32 %v1356, %v1358
    %v1360 = vrot.slane %v1279, %v1359
    %vm1361 = vcmask 589312
    %v1362 = vsel %vm1361, %v1360, %v1355
    %v1363 = vadd.s32 %v1302, 4294967224
    %v1364 = vlaneseq
    %v1365 = vshrl.u32 %v1364, 7
    %v1366 = vsub.s32 %v1363, %v1365
    %v1367 = vrot.slane %v1282, %v1366
    %vm1368 = vcmask 654912
    %v1369 = vsel %vm1368, %v1367, %v1362
    %v1370 = vadd.s32 %v1302, 4294967216
    %v1371 = vlaneseq
    %v1372 = vshrl.u32 %v1371, 7
    %v1373 = vsub.s32 %v1370, %v1372
    %v1374 = vrot.slane %v1285, %v1373
    %vm1375 = vcmask 720512
    %v1376 = vsel %vm1375, %v1374, %v1369
    %v1377 = vadd.s32 %v1302, 4294967208
    %v1378 = vlaneseq
    %v1379 = vshrl.u32 %v1378, 7
    %v1380 = vsub.s32 %v1377, %v1379
    %v1381 = vrot.slane %v1288, %v1380
    %vm1382 = vcmask 786112
    %v1383 = vsel %vm1382, %v1381, %v1376
    %v1384 = vadd.s32 %v1302, 4294967200
    %v1385 = vlaneseq
    %v1386 = vshrl.u32 %v1385, 7
    %v1387 = vsub.s32 %v1384, %v1386
    %v1388 = vrot.slane %v1291, %v1387
    %vm1389 = vcmask 851712
    %v1390 = vsel %vm1389, %v1388, %v1383
    %v1391 = vadd.s32 %v1302, 4294967192
    %v1392 = vlaneseq
    %v1393 = vshrl.u32 %v1392, 7
    %v1394 = vsub.s32 %v1391, %v1393
    %v1395 = vrot.slane %v1294, %v1394
    %vm1396 = vcmask 917312
    %v1397 = vsel %vm1396, %v1395, %v1390
    %v1398 = vadd.s32 %v1302, 4294967184
    %v1399 = vlaneseq
    %v1400 = vshrl.u32 %v1399, 7
    %v1401 = vsub.s32 %v1398, %v1400
    %v1402 = vrot.slane %v1297, %v1401
    %vm1403 = vcmask 982912
    %v1404 = vsel %vm1403, %v1402, %v1397
    %v1405 = vadd.s32 %v1302, 4294967176
    %v1406 = vlaneseq
    %v1407 = vshrl.u32 %v1406, 7
    %v1408 = vsub.s32 %v1405, %v1407
    %v1409 = vrot.slane %v1300, %v1408
    %vm1410 = vcmask 1048512
    %v1411 = vsel %vm1410, %v1409, %v1404
    %1413 = vst [vmem:[#allocation5] sm:$0x1] %v1411
    // Predicated region
    $region66: #{tpu_custom_call.1} parent=1 // pred_check
      _
    $region67: #{tpu_custom_call.1} parent=1 // pred_check_branch
      %1415 = sbr.rel (0) target = $region69
    $region68: #{tpu_custom_call.1} parent=1 // pred_region
      %s1417 = ssub.s32 16, 16
      %1418 = vsyncadd [#allocation3], %s1417
      %s1420 = sshll.u32 [#allocation5], 4
      %s1421 = int_to_ptr.vmem [resolvable:$true] %s1420
      %1423 = dma.vmem_to_hbm [thread:$0]  %s1421, 16, %s15, [#allocation3]
    $region69: #{tpu_custom_call.1} parent=1 // pred_fallthru
      _
    // Predicated region
    $region70: #{tpu_custom_call.1} parent=1 // pred_check
      _
    $region71: #{tpu_custom_call.1} parent=1 // pred_check_branch
      %1425 = sbr.rel (0) target = $region73
    $region72: #{tpu_custom_call.1} parent=1 // pred_region
      %1426 = dma.done [#allocation3], 16
    $region73: #{tpu_custom_call.1} parent=1 // pred_fallthru
      _
    %1427 = vsyncpa [#allocation3], 1
    %1428 = vsyncpa [#allocation4], 1

</llo_original>
